<compile_context>
chip_gen: v6e
topology: v6e:2x2x1
jax: 0.10.0
libtpu: 0.0.40
codegen_flags: <defaults>
</compile_context>

<pallas_src>
import functools
import math

import jax
import jax.numpy as jnp
from jax.experimental import pallas as pl
from jax.experimental.pallas import tpu as pltpu

EPS = 1e-5
NEG_INF = -1e30
CLS_ROWS = 8          # sublane-aligned block reserved for the CLS token (row 0 real)


# ---------------- in-kernel math helpers ----------------

def _layernorm(x, g, b):
    # f32 statistics over the last axis.
    mu = jnp.mean(x, axis=-1, keepdims=True)
    var = jnp.mean(jnp.square(x - mu), axis=-1, keepdims=True)
    return (x - mu) * jax.lax.rsqrt(var + EPS) * g + b


def _gelu_exact(x):
    # nn.GELU default = exact erf formulation (f32: portable to v5e EUP).
    return 0.5 * x * (1.0 + jax.lax.erf(x * 0.7071067811865476))


def _mm(x_f32, w_bf16):
    # bf16 x bf16 matmul with f32 accumulation on the MXU.
    return jnp.dot(x_f32.astype(jnp.bfloat16), w_bf16,
                   preferred_element_type=jnp.float32)


# ---------------- Pallas kernels ----------------

def embed_kernel(xp_ref, pw_ref, pb_ref, cls_ref, pos_ref, g_ref, b_ref, o_ref,
                 *, batch, n_patches):
    """Patch conv (as matmul) + CLS + pos-emb + LayerNorm, into aligned layout.

    Output rows: 0 = CLS, [CLS_ROWS, CLS_ROWS+N) = patches, rest = 0 (padding;
    masked out of attention inside the encoder).  pos_ref is already arranged
    into this layout by the wrapper.
    """
    E = pw_ref.shape[1]
    g = g_ref[...]
    b = b_ref[...]

    # Conv2d(stride=kernel=patch) as matmul: [B*N, C*p*p] @ [C*p*p, E] + bias.
    emb = _mm(xp_ref[...], pw_ref[...]) + pb_ref[...]            # [B*N, E]
    emb3 = emb.reshape(batch, n_patches, E)

    # Padding rows MUST be finite (zero): they flow through every layer and
    # are only masked (not removed) in the attention softmax.
    o_ref[...] = jnp.zeros_like(o_ref)

    cls_row = _layernorm(cls_ref[...] + pos_ref[:, 0:1, :], g, b)   # [1, 1, E]
    o_ref[:, 0:1, :] = jnp.broadcast_to(cls_row, (batch, 1, E))

    pat = _layernorm(emb3 + pos_ref[:, CLS_ROWS:CLS_ROWS + n_patches, :], g, b)
    o_ref[:, CLS_ROWS:CLS_ROWS + n_patches, :] = pat


def encoder_kernel(x0_ref, w_in_ref, w2_ref, vec_ref, clsw_ref, cvec_ref,
                   o_ref, act_ref, *, num_heads, num_layers, n_patches):
    """grid = (batch_groups, L): one grid step == one encoder layer for one
    batch group.  Activation lives in the VMEM scratch `act_ref` across all L
    layers; per-layer weights are streamed in (3 DMAs/layer).  The classifier
    runs as an epilogue on the CLS row at the last layer."""
    l = pl.program_id(1)

    @pl.when(l == 0)
    def _():
        act_ref[...] = x0_ref[...]           # activation becomes VMEM-resident

    x = act_ref[...]                          # [Bb, Sp, E] f32
    Bb, Sp, E = x.shape
    M = w2_ref.shape[1]
    P = clsw_ref.shape[1]
    dh = E // num_heads
    scale = 1.0 / math.sqrt(dh)
    x2 = x.reshape(Bb * Sp, E)                # Sp is a multiple of 8 -> aligned

    # Packed per-layer vectors: [ln1_g|ln1_b|bqkv|bo|ln2_g|ln2_b|b1|b2].
    ln1_g = vec_ref[0, :, 0:E]
    ln1_b = vec_ref[0, :, E:2 * E]
    bqkv = vec_ref[0, :, 2 * E:5 * E]
    bo = vec_ref[0, :, 5 * E:6 * E]
    ln2_g = vec_ref[0, :, 6 * E:7 * E]
    ln2_b = vec_ref[0, :, 7 * E:8 * E]
    b1 = vec_ref[0, :, 8 * E:8 * E + M]
    b2 = vec_ref[0, :, 8 * E + M:9 * E + M]

    # --- MultiHeadSelfAttentionBlock (pre-LN) ---
    h = _layernorm(x2, ln1_g, ln1_b)
    qkv = _mm(h, w_in_ref[0, :, 0:3 * E]) + bqkv           # fused QKV [Bb*Sp, 3E]

    # Key-validity mask: only the CLS row and the n_patches patch rows are real.
    col = jax.lax.broadcasted_iota(jnp.int32, (1, Sp), 1)
    valid = (col == 0) | ((col >= CLS_ROWS) & (col < CLS_ROWS + n_patches))
    kmask = jnp.where(valid, 0.0, NEG_INF).astype(jnp.float32)   # [1, Sp]

    # Per-head loop with the output projection folded in (no lane concat).
    attn = jnp.zeros((Bb * Sp, E), jnp.float32)
    for hi in range(num_heads):
        q = qkv[:, hi * dh:(hi + 1) * dh].reshape(Bb, Sp, dh).astype(jnp.bfloat16)
        k = qkv[:, E + hi * dh:E + (hi + 1) * dh].reshape(Bb, Sp, dh).astype(jnp.bfloat16)
        v = qkv[:, 2 * E + hi * dh:2 * E + (hi + 1) * dh].reshape(Bb, Sp, dh).astype(jnp.bfloat16)
        s = jnp.einsum('bqd,bkd->bqk', q, k,
                       preferred_element_type=jnp.float32) * scale + kmask
        s = s - jnp.max(s, axis=-1, keepdims=True)
        p = jnp.exp(s)
        p = p * pl.reciprocal(jnp.sum(p, axis=-1, keepdims=True), approx=True)
        oh = jnp.einsum('bqk,bkd->bqd', p.astype(jnp.bfloat16), v,
                        preferred_element_type=jnp.float32)
        # output projection contribution of this head
        attn = attn + _mm(oh.reshape(Bb * Sp, dh),
                          w_in_ref[0, hi * dh:(hi + 1) * dh, 3 * E:4 * E])
    x2 = x2 + attn + bo                                    # residual 1

    # --- MLPBlock (pre-LN); dropouts are identity in inference ---
    h2 = _layernorm(x2, ln2_g, ln2_b)
    m = _gelu_exact(_mm(h2, w_in_ref[0, :, 4 * E:4 * E + M]) + b1)
    m = _mm(m, w2_ref[0]) + b2
    x_new = x2 + m                                         # residual 2
    act_ref[...] = x_new.reshape(Bb, Sp, E)

    # --- fused classifier epilogue: LayerNorm + Linear on the CLS row only ---
    @pl.when(l == num_layers - 1)
    def _():
        xcls = x_new.reshape(Bb, Sp, E)[:, 0, :]                       # [Bb, E]
        hc = _layernorm(xcls, cvec_ref[:, 0:E], cvec_ref[:, E:2 * E])
        o_ref[0] = _mm(hc, clsw_ref[...]) + cvec_ref[:, 2 * E:2 * E + P]


# ---------------- pallas_call wrappers ----------------

_VMEM = pl.BlockSpec(memory_space=pltpu.MemorySpace.VMEM)


def vit_forward(x, params, *, patch_size, num_heads):
    B, C, H, W = x.shape
    assert H % patch_size == 0 and W % patch_size == 0
    Hp, Wp = H // patch_size, W // patch_size
    N = Hp * Wp
    E = params['patch_w'].shape[1]
    L = params['w_in'].shape[0]
    M = params['w2'].shape[1]
    P = params['cls_w'].shape[1]
    assert E % num_heads == 0
    Sp = CLS_ROWS + ((N + 7) // 8) * 8          # sublane-aligned padded seq len

    # v7x megacore: split the batch over a leading "parallel" grid axis.
    BG = 2 if (B % 2 == 0) else 1
    Bb = B // BG

    # Patch extraction (glue): [B, C, H, W] -> [B*N, C*p*p], flattened (c, i, j).
    xp = x.reshape(B, C, Hp, patch_size, Wp, patch_size)
    xp = xp.transpose(0, 2, 4, 1, 3, 5).reshape(B * N, C * patch_size * patch_size)

    # Positional embedding rearranged into the aligned layout (one-time glue):
    # row 0 <- CLS position, rows [CLS_ROWS, CLS_ROWS+N) <- patch positions.
    pos = params['pos_emb']                                 # [1, N+1, E]
    pos_arr = jnp.zeros((1, Sp, E), jnp.float32)
    pos_arr = pos_arr.at[:, 0:1, :].set(pos[:, 0:1, :])
    pos_arr = pos_arr.at[:, CLS_ROWS:CLS_ROWS + N, :].set(pos[:, 1:N + 1, :])

    # Embedding kernel (patch matmul + CLS + pos + LN0), aligned padded output.
    x0 = pl.pallas_call(
        functools.partial(embed_kernel, batch=B, n_patches=N),
        in_specs=[_VMEM] * 7,
        out_specs=_VMEM,
        out_shape=jax.ShapeDtypeStruct((B, Sp, E), jnp.float32),
    )(xp, params['patch_w'], params['patch_b'], params['cls_token'],
      pos_arr, params['ln0_g'], params['ln0_b'])

    batch_group = lambda b, l: (b, 0, 0)
    per_layer = lambda b, l: (l, 0, 0)

    enc = pl.pallas_call(
        functools.partial(encoder_kernel, num_heads=num_heads,
                          num_layers=L, n_patches=N),
        grid_spec=pltpu.PrefetchScalarGridSpec(
            num_scalar_prefetch=0,
            grid=(BG, L),
            in_specs=[
                pl.BlockSpec((Bb, Sp, E), batch_group),          # activation in
                pl.BlockSpec((1, E, 4 * E + M), per_layer),      # [wqkv|wo|w1] bf16
                pl.BlockSpec((1, M, E), per_layer),              # w2 bf16
                pl.BlockSpec((1, 1, 9 * E + M), per_layer),      # packed layer vectors
                pl.BlockSpec((E, P), lambda b, l: (0, 0)),       # classifier weight
                pl.BlockSpec((1, 2 * E + P), lambda b, l: (0, 0)),  # classifier vectors
            ],
            out_specs=pl.BlockSpec((1, Bb, P), batch_group),
            scratch_shapes=[pltpu.VMEM((Bb, Sp, E), jnp.float32)],
        ),
        out_shape=jax.ShapeDtypeStruct((BG, Bb, P), jnp.float32),
        compiler_params=pltpu.CompilerParams(
            dimension_semantics=("parallel", "arbitrary"),
            # < 56 MiB so it also fits v7x's 64 MiB/TC; raise on v5e/v6e when
            # scaling up, and tile w1/w2 over an extra MLP axis for E>=1024.
            vmem_limit_bytes=48 * 1024 * 1024,
        ),
    )(x0, params['w_in'], params['w2'], params['vec'],
      params['cls_w'], params['clsf_vec'])

    return enc.reshape(B, P)


# ---------------- deterministic parameter init ----------------

def init_params(key, *, C, E, patch_size, N, num_layers, mlp_size, proj_dims):
    keys = jax.random.split(key, 12)
    L, M, P = num_layers, mlp_size, proj_dims

    def nrm(k, shp, s=0.02):
        return s * jax.random.normal(k, shp, jnp.float32)

    # Per-layer weights (then packed along the lane axis).
    wqkv = nrm(keys[4], (L, E, 3 * E))
    wo = nrm(keys[5], (L, E, E))
    w1 = nrm(keys[6], (L, E, M))
    w2 = nrm(keys[7], (L, M, E))

    ln1_g = jnp.ones((L, 1, E), jnp.float32)
    ln1_b = jnp.zeros((L, 1, E), jnp.float32)
    bqkv = jnp.zeros((L, 1, 3 * E), jnp.float32)
    bo = jnp.zeros((L, 1, E), jnp.float32)
    ln2_g = jnp.ones((L, 1, E), jnp.float32)
    ln2_b = jnp.zeros((L, 1, E), jnp.float32)
    b1 = jnp.zeros((L, 1, M), jnp.float32)
    b2 = jnp.zeros((L, 1, E), jnp.float32)

    params = {
        # conv weight [E, C, p, p] flattened over (c, i, j), transposed -> [C*p*p, E]
        'patch_w': nrm(keys[0], (E, C, patch_size, patch_size))
                   .reshape(E, -1).T.astype(jnp.bfloat16),
        'patch_b': nrm(keys[1], (1, E)),
        'cls_token': jax.random.normal(keys[2], (1, 1, E), jnp.float32),
        'pos_emb': jax.random.normal(keys[3], (1, N + 1, E), jnp.float32),
        'ln0_g': jnp.ones((1, E), jnp.float32),
        'ln0_b': jnp.zeros((1, E), jnp.float32),
        # packed per-layer matmul weights: [wqkv | wo | w1] -> one DMA per layer
        'w_in': jnp.concatenate([wqkv, wo, w1], axis=-1).astype(jnp.bfloat16),
        'w2': w2.astype(jnp.bfloat16),
        # packed per-layer small vectors -> one DMA per layer
        'vec': jnp.concatenate([ln1_g, ln1_b, bqkv, bo, ln2_g, ln2_b, b1, b2],
                               axis=-1),
        # classifier (LN gamma/beta + linear bias packed; weight separate)
        'cls_w': nrm(keys[8], (E, P)).astype(jnp.bfloat16),
        'clsf_vec': jnp.concatenate(
            [jnp.ones((1, E), jnp.float32),
             jnp.zeros((1, E), jnp.float32),
             jnp.zeros((1, P), jnp.float32)], axis=-1),
    }
    return params


if __name__ == "__main__":
    # Small, lane-dense shapes consistent with the module's forward pass.
    B, C, H, W = 2, 3, 32, 32
    PATCH = 8          # image side divisible by patch size
    E = 128            # embeddings_dimension (multiple of 128 -> lane dense)
    HEADS = 4          # head_dim = 32
    MLP = 256          # mlp_size
    LAYERS = 3         # num_of_encoder_layers
    PROJ = 128         # projection_dims
    N = (H // PATCH) * (W // PATCH)   # number_of_patches = 16

    key = jax.random.PRNGKey(0)
    kx, kp = jax.random.split(key)
    x = jax.random.normal(kx, (B, C, H, W), jnp.float32)
    params = init_params(kp, C=C, E=E, patch_size=PATCH, N=N,
                         num_layers=LAYERS, mlp_size=MLP, proj_dims=PROJ)

    fwd = jax.jit(functools.partial(vit_forward, patch_size=PATCH,
                                    num_heads=HEADS))
    out = fwd(x, params)
    jax.block_until_ready(out)
    assert out.shape == (B, PROJ)
    # TODO(synk): dropout layers are identity (inference semantics); training-
    # mode dropout would need pltpu.prng_* inside the encoder kernel.
    print("KERNEL_OK")
</pallas_src>

<mosaic_0001>
module attributes {stable_mosaic.version = 11 : i64} {
  func.func @embed_kernel(%arg0: memref<32x192xf32, #tpu.memory_space<vmem>>, %arg1: memref<192x128xbf16, #tpu.memory_space<vmem>>, %arg2: memref<1x128xf32, #tpu.memory_space<vmem>>, %arg3: memref<1x1x128xf32, #tpu.memory_space<vmem>>, %arg4: memref<1x24x128xf32, #tpu.memory_space<vmem>>, %arg5: memref<1x128xf32, #tpu.memory_space<vmem>>, %arg6: memref<1x128xf32, #tpu.memory_space<vmem>>, %arg7: memref<2x24x128xf32, #tpu.memory_space<vmem>>) attributes {dimension_semantics = [], scalar_prefetch = 0 : i64, scratch_operands = 0 : i64, tpu.core_type = #tpu.core_type<tc>} {
    %c0 = arith.constant 0 : index
    %c0_0 = arith.constant 0 : index
    %0 = vector.load %arg5[%c0, %c0_0] : memref<1x128xf32, #tpu.memory_space<vmem>>, vector<1x128xf32>
    %c0_1 = arith.constant 0 : index
    %c0_2 = arith.constant 0 : index
    %1 = vector.load %arg6[%c0_1, %c0_2] : memref<1x128xf32, #tpu.memory_space<vmem>>, vector<1x128xf32>
    %c0_3 = arith.constant 0 : index
    %c0_4 = arith.constant 0 : index
    %2 = vector.load %arg0[%c0_3, %c0_4] : memref<32x192xf32, #tpu.memory_space<vmem>>, vector<32x192xf32>
    %c0_5 = arith.constant 0 : index
    %c0_6 = arith.constant 0 : index
    %3 = vector.load %arg1[%c0_5, %c0_6] : memref<192x128xbf16, #tpu.memory_space<vmem>>, vector<192x128xbf16>
    %4 = arith.truncf %2 : vector<32x192xf32> to vector<32x192xbf16>
    %cst = arith.constant dense<0.000000e+00> : vector<32x128xf32>
    %5 = tpu.matmul %4, %3, %cst {dimension_numbers = #tpu.dot_dimension_numbers<[1], [0], [0], [1], [0, 0, 1, 1], [], []>} : vector<32x192xbf16>, vector<192x128xbf16>, vector<32x128xf32> -> vector<32x128xf32>
    %c0_7 = arith.constant 0 : index
    %c0_8 = arith.constant 0 : index
    %6 = vector.load %arg2[%c0_7, %c0_8] : memref<1x128xf32, #tpu.memory_space<vmem>>, vector<1x128xf32>
    %7 = vector.broadcast %6 : vector<1x128xf32> to vector<32x128xf32>
    %8 = arith.addf %5, %7 : vector<32x128xf32>
    %9 = vector.shape_cast %8 : vector<32x128xf32> to vector<2x16x128xf32>
    %cst_9 = arith.constant 0.000000e+00 : f32
    %10 = vector.broadcast %cst_9 : f32 to vector<2x24x128xf32>
    %c0_10 = arith.constant 0 : index
    %c0_11 = arith.constant 0 : index
    %c0_12 = arith.constant 0 : index
    %11 = vector.load %arg7[%c0_10, %c0_11, %c0_12] : memref<2x24x128xf32, #tpu.memory_space<vmem>>, vector<2x24x128xf32>
    tpu.vector_store %arg7[%c0_10, %c0_11, %c0_12], %10 {strides = array<i32>} : memref<2x24x128xf32, #tpu.memory_space<vmem>>, vector<2x24x128xf32>,
    %c0_13 = arith.constant 0 : index
    %c0_14 = arith.constant 0 : index
    %c0_15 = arith.constant 0 : index
    %12 = vector.load %arg3[%c0_13, %c0_14, %c0_15] : memref<1x1x128xf32, #tpu.memory_space<vmem>>, vector<1x1x128xf32>
    %c0_16 = arith.constant 0 : index
    %c0_17 = arith.constant 0 : index
    %c0_18 = arith.constant 0 : index
    %13 = vector.load %arg4[%c0_16, %c0_17, %c0_18] : memref<1x24x128xf32, #tpu.memory_space<vmem>>, vector<1x1x128xf32>
    %14 = arith.addf %12, %13 : vector<1x1x128xf32>
    %cst_19 = arith.constant dense<0.000000e+00> : vector<1x1xf32>
    %15 = vector.multi_reduction <add>, %14, %cst_19 [2] : vector<1x1x128xf32> to vector<1x1xf32>
    %16 = vector.shape_cast %15 : vector<1x1xf32> to vector<1x1x1xf32>
    %cst_20 = arith.constant 1.280000e+02 : f32
    %17 = vector.broadcast %cst_20 : f32 to vector<1x1x1xf32>
    %18 = arith.divf %16, %17 : vector<1x1x1xf32>
    %19 = vector.broadcast %18 : vector<1x1x1xf32> to vector<1x1x128xf32>
    %20 = arith.subf %14, %19 : vector<1x1x128xf32>
    %21 = arith.mulf %20, %20 : vector<1x1x128xf32>
    %cst_21 = arith.constant dense<0.000000e+00> : vector<1x1xf32>
    %22 = vector.multi_reduction <add>, %21, %cst_21 [2] : vector<1x1x128xf32> to vector<1x1xf32>
    %23 = vector.shape_cast %22 : vector<1x1xf32> to vector<1x1x1xf32>
    %cst_22 = arith.constant 1.280000e+02 : f32
    %24 = vector.broadcast %cst_22 : f32 to vector<1x1x1xf32>
    %25 = arith.divf %23, %24 : vector<1x1x1xf32>
    %26 = vector.broadcast %18 : vector<1x1x1xf32> to vector<1x1x128xf32>
    %27 = arith.subf %14, %26 : vector<1x1x128xf32>
    %cst_23 = arith.constant 9.99999974E-6 : f32
    %28 = vector.broadcast %cst_23 : f32 to vector<1x1x1xf32>
    %29 = arith.addf %25, %28 : vector<1x1x1xf32>
    %30 = math.rsqrt %29 : vector<1x1x1xf32>
    %31 = vector.broadcast %30 : vector<1x1x1xf32> to vector<1x1x128xf32>
    %32 = arith.mulf %27, %31 : vector<1x1x128xf32>
    %33 = vector.shape_cast %0 : vector<1x128xf32> to vector<1x1x128xf32>
    %34 = arith.mulf %32, %33 : vector<1x1x128xf32>
    %35 = vector.shape_cast %1 : vector<1x128xf32> to vector<1x1x128xf32>
    %36 = arith.addf %34, %35 : vector<1x1x128xf32>
    %37 = vector.shape_cast %36 : vector<1x1x128xf32> to vector<1x1x128xf32>
    %38 = vector.broadcast %37 : vector<1x1x128xf32> to vector<2x1x128xf32>
    %c0_24 = arith.constant 0 : index
    %c0_25 = arith.constant 0 : index
    %c0_26 = arith.constant 0 : index
    %39 = vector.load %arg7[%c0_24, %c0_25, %c0_26] : memref<2x24x128xf32, #tpu.memory_space<vmem>>, vector<2x1x128xf32>
    tpu.vector_store %arg7[%c0_24, %c0_25, %c0_26], %38 {strides = array<i32>} : memref<2x24x128xf32, #tpu.memory_space<vmem>>, vector<2x1x128xf32>,
    %c0_27 = arith.constant 0 : index
    %c8 = arith.constant 8 : index
    %c0_28 = arith.constant 0 : index
    %40 = vector.load %arg4[%c0_27, %c8, %c0_28] : memref<1x24x128xf32, #tpu.memory_space<vmem>>, vector<1x16x128xf32>
    %41 = vector.broadcast %40 : vector<1x16x128xf32> to vector<2x16x128xf32>
    %42 = arith.addf %9, %41 : vector<2x16x128xf32>
    %cst_29 = arith.constant dense<0.000000e+00> : vector<2x16xf32>
    %43 = vector.multi_reduction <add>, %42, %cst_29 [2] : vector<2x16x128xf32> to vector<2x16xf32>
    %44 = vector.shape_cast %43 : vector<2x16xf32> to vector<2x16x1xf32>
    %cst_30 = arith.constant 1.280000e+02 : f32
    %45 = vector.broadcast %cst_30 : f32 to vector<2x16x1xf32>
    %46 = arith.divf %44, %45 : vector<2x16x1xf32>
    %47 = vector.broadcast %46 : vector<2x16x1xf32> to vector<2x16x128xf32>
    %48 = arith.subf %42, %47 : vector<2x16x128xf32>
    %49 = arith.mulf %48, %48 : vector<2x16x128xf32>
    %cst_31 = arith.constant dense<0.000000e+00> : vector<2x16xf32>
    %50 = vector.multi_reduction <add>, %49, %cst_31 [2] : vector<2x16x128xf32> to vector<2x16xf32>
    %51 = vector.shape_cast %50 : vector<2x16xf32> to vector<2x16x1xf32>
    %cst_32 = arith.constant 1.280000e+02 : f32
    %52 = vector.broadcast %cst_32 : f32 to vector<2x16x1xf32>
    %53 = arith.divf %51, %52 : vector<2x16x1xf32>
    %54 = vector.broadcast %46 : vector<2x16x1xf32> to vector<2x16x128xf32>
    %55 = arith.subf %42, %54 : vector<2x16x128xf32>
    %cst_33 = arith.constant 9.99999974E-6 : f32
    %56 = vector.broadcast %cst_33 : f32 to vector<2x16x1xf32>
    %57 = arith.addf %53, %56 : vector<2x16x1xf32>
    %58 = math.rsqrt %57 : vector<2x16x1xf32>
    %59 = vector.broadcast %58 : vector<2x16x1xf32> to vector<2x16x128xf32>
    %60 = arith.mulf %55, %59 : vector<2x16x128xf32>
    %61 = vector.shape_cast %0 : vector<1x128xf32> to vector<1x1x128xf32>
    %62 = vector.broadcast %61 : vector<1x1x128xf32> to vector<2x16x128xf32>
    %63 = arith.mulf %60, %62 : vector<2x16x128xf32>
    %64 = vector.shape_cast %1 : vector<1x128xf32> to vector<1x1x128xf32>
    %65 = vector.broadcast %64 : vector<1x1x128xf32> to vector<2x16x128xf32>
    %66 = arith.addf %63, %65 : vector<2x16x128xf32>
    %c0_34 = arith.constant 0 : index
    %c8_35 = arith.constant 8 : index
    %c0_36 = arith.constant 0 : index
    %67 = vector.load %arg7[%c0_34, %c8_35, %c0_36] : memref<2x24x128xf32, #tpu.memory_space<vmem>>, vector<2x16x128xf32>
    tpu.vector_store %arg7[%c0_34, %c8_35, %c0_36], %66 {strides = array<i32>} : memref<2x24x128xf32, #tpu.memory_space<vmem>>, vector<2x16x128xf32>,
    return
  }
}

module attributes {stable_mosaic.version = 11 : i64} {
  func.func @encoder_kernel(%arg0: i32, %arg1: i32, %arg2: memref<1x24x128xf32, #tpu.memory_space<vmem>>, %arg3: memref<1x128x768xbf16, #tpu.memory_space<vmem>>, %arg4: memref<1x256x128xbf16, #tpu.memory_space<vmem>>, %arg5: memref<1x1x1408xf32, #tpu.memory_space<vmem>>, %arg6: memref<128x128xbf16, #tpu.memory_space<vmem>>, %arg7: memref<1x384xf32, #tpu.memory_space<vmem>>, %arg8: memref<1x1x128xf32, #tpu.memory_space<vmem>>, %arg9: memref<1x24x128xf32, #tpu.memory_space<vmem>>) attributes {dimension_semantics = [#tpu.dimension_semantics<parallel>, #tpu.dimension_semantics<arbitrary>], iteration_bounds = array<i64: 2, 3>, scalar_prefetch = 0 : i64, scratch_operands = 1 : i64, tpu.core_type = #tpu.core_type<tc>, window_params = [{transform_indices = @transform_0, window_bounds = array<i64: 1, 24, 128>}, {transform_indices = @transform_1, window_bounds = array<i64: 1, 128, 768>}, {transform_indices = @transform_2, window_bounds = array<i64: 1, 256, 128>}, {transform_indices = @transform_3, window_bounds = array<i64: 1, 1, 1408>}, {pipeline_mode = #tpu.pipeline_mode<synchronous>, transform_indices = @transform_4, window_bounds = array<i64: 128, 128>}, {pipeline_mode = #tpu.pipeline_mode<synchronous>, transform_indices = @transform_5, window_bounds = array<i64: 1, 384>}, {transform_indices = @transform_6, window_bounds = array<i64: 1, 1, 128>}]} {
    %c0_i32 = arith.constant 0 : i32
    %0 = arith.cmpi eq, %arg1, %c0_i32 : i32
    %1 = arith.extui %0 : i1 to i32
    %c0_i32_0 = arith.constant 0 : i32
    %2 = arith.cmpi ne, %1, %c0_i32_0 : i32
    scf.if %2 {
      %c0_83 = arith.constant 0 : index
      %c0_84 = arith.constant 0 : index
      %c0_85 = arith.constant 0 : index
      %245 = vector.load %arg2[%c0_83, %c0_84, %c0_85] : memref<1x24x128xf32, #tpu.memory_space<vmem>>, vector<1x24x128xf32>
      %c0_86 = arith.constant 0 : index
      %c0_87 = arith.constant 0 : index
      %c0_88 = arith.constant 0 : index
      %246 = vector.load %arg9[%c0_86, %c0_87, %c0_88] : memref<1x24x128xf32, #tpu.memory_space<vmem>>, vector<1x24x128xf32>
      tpu.vector_store %arg9[%c0_86, %c0_87, %c0_88], %245 {strides = array<i32>} : memref<1x24x128xf32, #tpu.memory_space<vmem>>, vector<1x24x128xf32>,
    } else {
    }
    %c0 = arith.constant 0 : index
    %c0_1 = arith.constant 0 : index
    %c0_2 = arith.constant 0 : index
    %3 = vector.load %arg9[%c0, %c0_1, %c0_2] : memref<1x24x128xf32, #tpu.memory_space<vmem>>, vector<1x24x128xf32>
    %4 = vector.shape_cast %3 : vector<1x24x128xf32> to vector<24x128xf32>
    %c0_3 = arith.constant 0 : index
    %c0_4 = arith.constant 0 : index
    %c0_5 = arith.constant 0 : index
    %5 = vector.load %arg5[%c0_3, %c0_4, %c0_5] : memref<1x1x1408xf32, #tpu.memory_space<vmem>>, vector<1x1x128xf32>
    %6 = vector.shape_cast %5 : vector<1x1x128xf32> to vector<1x128xf32>
    %c0_6 = arith.constant 0 : index
    %c0_7 = arith.constant 0 : index
    %c128 = arith.constant 128 : index
    %7 = vector.load %arg5[%c0_6, %c0_7, %c128] : memref<1x1x1408xf32, #tpu.memory_space<vmem>>, vector<1x1x128xf32>
    %8 = vector.shape_cast %7 : vector<1x1x128xf32> to vector<1x128xf32>
    %c0_8 = arith.constant 0 : index
    %c0_9 = arith.constant 0 : index
    %c256 = arith.constant 256 : index
    %9 = vector.load %arg5[%c0_8, %c0_9, %c256] : memref<1x1x1408xf32, #tpu.memory_space<vmem>>, vector<1x1x384xf32>
    %10 = vector.shape_cast %9 : vector<1x1x384xf32> to vector<1x384xf32>
    %c0_10 = arith.constant 0 : index
    %c0_11 = arith.constant 0 : index
    %c640 = arith.constant 640 : index
    %11 = vector.load %arg5[%c0_10, %c0_11, %c640] : memref<1x1x1408xf32, #tpu.memory_space<vmem>>, vector<1x1x128xf32>
    %12 = vector.shape_cast %11 : vector<1x1x128xf32> to vector<1x128xf32>
    %c0_12 = arith.constant 0 : index
    %c0_13 = arith.constant 0 : index
    %c768 = arith.constant 768 : index
    %13 = vector.load %arg5[%c0_12, %c0_13, %c768] : memref<1x1x1408xf32, #tpu.memory_space<vmem>>, vector<1x1x128xf32>
    %14 = vector.shape_cast %13 : vector<1x1x128xf32> to vector<1x128xf32>
    %c0_14 = arith.constant 0 : index
    %c0_15 = arith.constant 0 : index
    %c896 = arith.constant 896 : index
    %15 = vector.load %arg5[%c0_14, %c0_15, %c896] : memref<1x1x1408xf32, #tpu.memory_space<vmem>>, vector<1x1x128xf32>
    %16 = vector.shape_cast %15 : vector<1x1x128xf32> to vector<1x128xf32>
    %c0_16 = arith.constant 0 : index
    %c0_17 = arith.constant 0 : index
    %c1024 = arith.constant 1024 : index
    %17 = vector.load %arg5[%c0_16, %c0_17, %c1024] : memref<1x1x1408xf32, #tpu.memory_space<vmem>>, vector<1x1x256xf32>
    %18 = vector.shape_cast %17 : vector<1x1x256xf32> to vector<1x256xf32>
    %c0_18 = arith.constant 0 : index
    %c0_19 = arith.constant 0 : index
    %c1280 = arith.constant 1280 : index
    %19 = vector.load %arg5[%c0_18, %c0_19, %c1280] : memref<1x1x1408xf32, #tpu.memory_space<vmem>>, vector<1x1x128xf32>
    %20 = vector.shape_cast %19 : vector<1x1x128xf32> to vector<1x128xf32>
    %cst = arith.constant dense<0.000000e+00> : vector<24xf32>
    %21 = vector.multi_reduction <add>, %4, %cst [1] : vector<24x128xf32> to vector<24xf32>
    %22 = vector.shape_cast %21 : vector<24xf32> to vector<24x1xf32>
    %cst_20 = arith.constant 1.280000e+02 : f32
    %23 = vector.broadcast %cst_20 : f32 to vector<24x1xf32>
    %24 = arith.divf %22, %23 : vector<24x1xf32>
    %25 = vector.broadcast %24 : vector<24x1xf32> to vector<24x128xf32>
    %26 = arith.subf %4, %25 : vector<24x128xf32>
    %27 = arith.mulf %26, %26 : vector<24x128xf32>
    %cst_21 = arith.constant dense<0.000000e+00> : vector<24xf32>
    %28 = vector.multi_reduction <add>, %27, %cst_21 [1] : vector<24x128xf32> to vector<24xf32>
    %29 = vector.shape_cast %28 : vector<24xf32> to vector<24x1xf32>
    %cst_22 = arith.constant 1.280000e+02 : f32
    %30 = vector.broadcast %cst_22 : f32 to vector<24x1xf32>
    %31 = arith.divf %29, %30 : vector<24x1xf32>
    %32 = vector.broadcast %24 : vector<24x1xf32> to vector<24x128xf32>
    %33 = arith.subf %4, %32 : vector<24x128xf32>
    %cst_23 = arith.constant 9.99999974E-6 : f32
    %34 = vector.broadcast %cst_23 : f32 to vector<24x1xf32>
    %35 = arith.addf %31, %34 : vector<24x1xf32>
    %36 = math.rsqrt %35 : vector<24x1xf32>
    %37 = vector.broadcast %36 : vector<24x1xf32> to vector<24x128xf32>
    %38 = arith.mulf %33, %37 : vector<24x128xf32>
    %39 = vector.broadcast %6 : vector<1x128xf32> to vector<24x128xf32>
    %40 = arith.mulf %38, %39 : vector<24x128xf32>
    %41 = vector.broadcast %8 : vector<1x128xf32> to vector<24x128xf32>
    %42 = arith.addf %40, %41 : vector<24x128xf32>
    %c0_24 = arith.constant 0 : index
    %c0_25 = arith.constant 0 : index
    %c0_26 = arith.constant 0 : index
    %43 = vector.load %arg3[%c0_24, %c0_25, %c0_26] : memref<1x128x768xbf16, #tpu.memory_space<vmem>>, vector<1x128x384xbf16>
    %44 = vector.shape_cast %43 : vector<1x128x384xbf16> to vector<128x384xbf16>
    %45 = arith.truncf %42 : vector<24x128xf32> to vector<24x128xbf16>
    %cst_27 = arith.constant dense<0.000000e+00> : vector<24x384xf32>
    %46 = tpu.matmul %45, %44, %cst_27 {dimension_numbers = #tpu.dot_dimension_numbers<[1], [0], [0], [1], [0, 0, 1, 1], [], []>} : vector<24x128xbf16>, vector<128x384xbf16>, vector<24x384xf32> -> vector<24x384xf32>
    %47 = vector.broadcast %10 : vector<1x384xf32> to vector<24x384xf32>
    %48 = arith.addf %46, %47 : vector<24x384xf32>
    %49 = tpu.iota {dimensions = array<i32: 1>} : vector<1x24xi32>
    %c0_i32_28 = arith.constant 0 : i32
    %50 = vector.broadcast %c0_i32_28 : i32 to vector<1x24xi32>
    %51 = arith.cmpi eq, %49, %50 : vector<1x24xi32>
    %c8_i32 = arith.constant 8 : i32
    %52 = vector.broadcast %c8_i32 : i32 to vector<1x24xi32>
    %53 = arith.cmpi sge, %49, %52 : vector<1x24xi32>
    %c24_i32 = arith.constant 24 : i32
    %54 = vector.broadcast %c24_i32 : i32 to vector<1x24xi32>
    %55 = arith.cmpi slt, %49, %54 : vector<1x24xi32>
    %56 = arith.andi %53, %55 : vector<1x24xi1>
    %57 = arith.ori %51, %56 : vector<1x24xi1>
    %cst_29 = arith.constant 0.000000e+00 : f32
    %cst_30 = arith.constant -1.000000e+30 : f32
    %58 = vector.broadcast %cst_29 : f32 to vector<1x24xf32>
    %59 = vector.broadcast %cst_30 : f32 to vector<1x24xf32>
    %60 = arith.select %57, %58, %59 : vector<1x24xi1>, vector<1x24xf32>
    %cst_31 = arith.constant 0.000000e+00 : f32
    %61 = vector.broadcast %cst_31 : f32 to vector<24x128xf32>
    %62 = vector.extract_strided_slice %48 {offsets = [0, 0], sizes = [24, 32], strides = [1, 1]} : vector<24x384xf32> to vector<24x32xf32>
    %63 = vector.shape_cast %62 : vector<24x32xf32> to vector<1x24x32xf32>
    %64 = arith.truncf %63 : vector<1x24x32xf32> to vector<1x24x32xbf16>
    %65 = vector.extract_strided_slice %48 {offsets = [0, 128], sizes = [24, 32], strides = [1, 1]} : vector<24x384xf32> to vector<24x32xf32>
    %66 = vector.shape_cast %65 : vector<24x32xf32> to vector<1x24x32xf32>
    %67 = arith.truncf %66 : vector<1x24x32xf32> to vector<1x24x32xbf16>
    %68 = vector.extract_strided_slice %48 {offsets = [0, 256], sizes = [24, 32], strides = [1, 1]} : vector<24x384xf32> to vector<24x32xf32>
    %69 = vector.shape_cast %68 : vector<24x32xf32> to vector<1x24x32xf32>
    %70 = arith.truncf %69 : vector<1x24x32xf32> to vector<1x24x32xbf16>
    "tpu.trace_start"() <{level = 10 : i32, message = "bqd,bkd->bqk"}> : () -> ()
    %cst_32 = arith.constant dense<0.000000e+00> : vector<1x24x24xf32>
    %71 = tpu.matmul %64, %67, %cst_32 {dimension_numbers = #tpu.dot_dimension_numbers<[2], [2], [1], [1], [0, 0, 0, 1, 1, 1], [0], [0]>} : vector<1x24x32xbf16>, vector<1x24x32xbf16>, vector<1x24x24xf32> -> vector<1x24x24xf32>
    "tpu.trace_stop"() : () -> ()
    %cst_33 = arith.constant 0.176776692 : f32
    %72 = vector.broadcast %cst_33 : f32 to vector<1x24x24xf32>
    %73 = arith.mulf %71, %72 : vector<1x24x24xf32>
    %74 = vector.shape_cast %60 : vector<1x24xf32> to vector<1x1x24xf32>
    %75 = vector.broadcast %74 : vector<1x1x24xf32> to vector<1x24x24xf32>
    %76 = arith.addf %73, %75 : vector<1x24x24xf32>
    %cst_34 = arith.constant dense<0xFF800000> : vector<1x24xf32>
    %77 = vector.multi_reduction <maximumf>, %76, %cst_34 [2] : vector<1x24x24xf32> to vector<1x24xf32>
    %78 = vector.shape_cast %77 : vector<1x24xf32> to vector<1x24x1xf32>
    %79 = vector.broadcast %78 : vector<1x24x1xf32> to vector<1x24x24xf32>
    %80 = arith.subf %76, %79 : vector<1x24x24xf32>
    %81 = math.exp %80 : vector<1x24x24xf32>
    %cst_35 = arith.constant dense<0.000000e+00> : vector<1x24xf32>
    %82 = vector.multi_reduction <add>, %81, %cst_35 [2] : vector<1x24x24xf32> to vector<1x24xf32>
    %83 = vector.shape_cast %82 : vector<1x24xf32> to vector<1x24x1xf32>
    %84 = tpu.reciprocal %83 {approx = true} : vector<1x24x1xf32> -> vector<1x24x1xf32>
    %85 = vector.broadcast %84 : vector<1x24x1xf32> to vector<1x24x24xf32>
    %86 = arith.mulf %81, %85 : vector<1x24x24xf32>
    %87 = arith.truncf %86 : vector<1x24x24xf32> to vector<1x24x24xbf16>
    "tpu.trace_start"() <{level = 10 : i32, message = "bqk,bkd->bqd"}> : () -> ()
    %cst_36 = arith.constant dense<0.000000e+00> : vector<1x24x32xf32>
    %88 = tpu.matmul %87, %70, %cst_36 {dimension_numbers = #tpu.dot_dimension_numbers<[2], [1], [1], [2], [0, 0, 0, 1, 1, 2], [0], [0]>} : vector<1x24x24xbf16>, vector<1x24x32xbf16>, vector<1x24x32xf32> -> vector<1x24x32xf32>
    "tpu.trace_stop"() : () -> ()
    %89 = vector.shape_cast %88 : vector<1x24x32xf32> to vector<24x32xf32>
    %c0_37 = arith.constant 0 : index
    %c0_38 = arith.constant 0 : index
    %c384 = arith.constant 384 : index
    %90 = vector.load %arg3[%c0_37, %c0_38, %c384] : memref<1x128x768xbf16, #tpu.memory_space<vmem>>, vector<1x32x128xbf16>
    %91 = vector.shape_cast %90 : vector<1x32x128xbf16> to vector<32x128xbf16>
    %92 = arith.truncf %89 : vector<24x32xf32> to vector<24x32xbf16>
    %cst_39 = arith.constant dense<0.000000e+00> : vector<24x128xf32>
    %93 = tpu.matmul %92, %91, %cst_39 {dimension_numbers = #tpu.dot_dimension_numbers<[1], [0], [0], [1], [0, 0, 1, 1], [], []>} : vector<24x32xbf16>, vector<32x128xbf16>, vector<24x128xf32> -> vector<24x128xf32>
    %94 = arith.addf %61, %93 : vector<24x128xf32>
    %95 = vector.extract_strided_slice %48 {offsets = [0, 32], sizes = [24, 32], strides = [1, 1]} : vector<24x384xf32> to vector<24x32xf32>
    %96 = vector.shape_cast %95 : vector<24x32xf32> to vector<1x24x32xf32>
    %97 = arith.truncf %96 : vector<1x24x32xf32> to vector<1x24x32xbf16>
    %98 = vector.extract_strided_slice %48 {offsets = [0, 160], sizes = [24, 32], strides = [1, 1]} : vector<24x384xf32> to vector<24x32xf32>
    %99 = vector.shape_cast %98 : vector<24x32xf32> to vector<1x24x32xf32>
    %100 = arith.truncf %99 : vector<1x24x32xf32> to vector<1x24x32xbf16>
    %101 = vector.extract_strided_slice %48 {offsets = [0, 288], sizes = [24, 32], strides = [1, 1]} : vector<24x384xf32> to vector<24x32xf32>
    %102 = vector.shape_cast %101 : vector<24x32xf32> to vector<1x24x32xf32>
    %103 = arith.truncf %102 : vector<1x24x32xf32> to vector<1x24x32xbf16>
    "tpu.trace_start"() <{level = 10 : i32, message = "bqd,bkd->bqk"}> : () -> ()
    %cst_40 = arith.constant dense<0.000000e+00> : vector<1x24x24xf32>
    %104 = tpu.matmul %97, %100, %cst_40 {dimension_numbers = #tpu.dot_dimension_numbers<[2], [2], [1], [1], [0, 0, 0, 1, 1, 1], [0], [0]>} : vector<1x24x32xbf16>, vector<1x24x32xbf16>, vector<1x24x24xf32> -> vector<1x24x24xf32>
    "tpu.trace_stop"() : () -> ()
    %cst_41 = arith.constant 0.176776692 : f32
    %105 = vector.broadcast %cst_41 : f32 to vector<1x24x24xf32>
    %106 = arith.mulf %104, %105 : vector<1x24x24xf32>
    %107 = vector.shape_cast %60 : vector<1x24xf32> to vector<1x1x24xf32>
    %108 = vector.broadcast %107 : vector<1x1x24xf32> to vector<1x24x24xf32>
    %109 = arith.addf %106, %108 : vector<1x24x24xf32>
    %cst_42 = arith.constant dense<0xFF800000> : vector<1x24xf32>
    %110 = vector.multi_reduction <maximumf>, %109, %cst_42 [2] : vector<1x24x24xf32> to vector<1x24xf32>
    %111 = vector.shape_cast %110 : vector<1x24xf32> to vector<1x24x1xf32>
    %112 = vector.broadcast %111 : vector<1x24x1xf32> to vector<1x24x24xf32>
    %113 = arith.subf %109, %112 : vector<1x24x24xf32>
    %114 = math.exp %113 : vector<1x24x24xf32>
    %cst_43 = arith.constant dense<0.000000e+00> : vector<1x24xf32>
    %115 = vector.multi_reduction <add>, %114, %cst_43 [2] : vector<1x24x24xf32> to vector<1x24xf32>
    %116 = vector.shape_cast %115 : vector<1x24xf32> to vector<1x24x1xf32>
    %117 = tpu.reciprocal %116 {approx = true} : vector<1x24x1xf32> -> vector<1x24x1xf32>
    %118 = vector.broadcast %117 : vector<1x24x1xf32> to vector<1x24x24xf32>
    %119 = arith.mulf %114, %118 : vector<1x24x24xf32>
    %120 = arith.truncf %119 : vector<1x24x24xf32> to vector<1x24x24xbf16>
    "tpu.trace_start"() <{level = 10 : i32, message = "bqk,bkd->bqd"}> : () -> ()
    %cst_44 = arith.constant dense<0.000000e+00> : vector<1x24x32xf32>
    %121 = tpu.matmul %120, %103, %cst_44 {dimension_numbers = #tpu.dot_dimension_numbers<[2], [1], [1], [2], [0, 0, 0, 1, 1, 2], [0], [0]>} : vector<1x24x24xbf16>, vector<1x24x32xbf16>, vector<1x24x32xf32> -> vector<1x24x32xf32>
    "tpu.trace_stop"() : () -> ()
    %122 = vector.shape_cast %121 : vector<1x24x32xf32> to vector<24x32xf32>
    %c0_45 = arith.constant 0 : index
    %c32 = arith.constant 32 : index
    %c384_46 = arith.constant 384 : index
    %123 = vector.load %arg3[%c0_45, %c32, %c384_46] : memref<1x128x768xbf16, #tpu.memory_space<vmem>>, vector<1x32x128xbf16>
    %124 = vector.shape_cast %123 : vector<1x32x128xbf16> to vector<32x128xbf16>
    %125 = arith.truncf %122 : vector<24x32xf32> to vector<24x32xbf16>
    %cst_47 = arith.constant dense<0.000000e+00> : vector<24x128xf32>
    %126 = tpu.matmul %125, %124, %cst_47 {dimension_numbers = #tpu.dot_dimension_numbers<[1], [0], [0], [1], [0, 0, 1, 1], [], []>} : vector<24x32xbf16>, vector<32x128xbf16>, vector<24x128xf32> -> vector<24x128xf32>
    %127 = arith.addf %94, %126 : vector<24x128xf32>
    %128 = vector.extract_strided_slice %48 {offsets = [0, 64], sizes = [24, 32], strides = [1, 1]} : vector<24x384xf32> to vector<24x32xf32>
    %129 = vector.shape_cast %128 : vector<24x32xf32> to vector<1x24x32xf32>
    %130 = arith.truncf %129 : vector<1x24x32xf32> to vector<1x24x32xbf16>
    %131 = vector.extract_strided_slice %48 {offsets = [0, 192], sizes = [24, 32], strides = [1, 1]} : vector<24x384xf32> to vector<24x32xf32>
    %132 = vector.shape_cast %131 : vector<24x32xf32> to vector<1x24x32xf32>
    %133 = arith.truncf %132 : vector<1x24x32xf32> to vector<1x24x32xbf16>
    %134 = vector.extract_strided_slice %48 {offsets = [0, 320], sizes = [24, 32], strides = [1, 1]} : vector<24x384xf32> to vector<24x32xf32>
    %135 = vector.shape_cast %134 : vector<24x32xf32> to vector<1x24x32xf32>
    %136 = arith.truncf %135 : vector<1x24x32xf32> to vector<1x24x32xbf16>
    "tpu.trace_start"() <{level = 10 : i32, message = "bqd,bkd->bqk"}> : () -> ()
    %cst_48 = arith.constant dense<0.000000e+00> : vector<1x24x24xf32>
    %137 = tpu.matmul %130, %133, %cst_48 {dimension_numbers = #tpu.dot_dimension_numbers<[2], [2], [1], [1], [0, 0, 0, 1, 1, 1], [0], [0]>} : vector<1x24x32xbf16>, vector<1x24x32xbf16>, vector<1x24x24xf32> -> vector<1x24x24xf32>
    "tpu.trace_stop"() : () -> ()
    %cst_49 = arith.constant 0.176776692 : f32
    %138 = vector.broadcast %cst_49 : f32 to vector<1x24x24xf32>
    %139 = arith.mulf %137, %138 : vector<1x24x24xf32>
    %140 = vector.shape_cast %60 : vector<1x24xf32> to vector<1x1x24xf32>
    %141 = vector.broadcast %140 : vector<1x1x24xf32> to vector<1x24x24xf32>
    %142 = arith.addf %139, %141 : vector<1x24x24xf32>
    %cst_50 = arith.constant dense<0xFF800000> : vector<1x24xf32>
    %143 = vector.multi_reduction <maximumf>, %142, %cst_50 [2] : vector<1x24x24xf32> to vector<1x24xf32>
    %144 = vector.shape_cast %143 : vector<1x24xf32> to vector<1x24x1xf32>
    %145 = vector.broadcast %144 : vector<1x24x1xf32> to vector<1x24x24xf32>
    %146 = arith.subf %142, %145 : vector<1x24x24xf32>
    %147 = math.exp %146 : vector<1x24x24xf32>
    %cst_51 = arith.constant dense<0.000000e+00> : vector<1x24xf32>
    %148 = vector.multi_reduction <add>, %147, %cst_51 [2] : vector<1x24x24xf32> to vector<1x24xf32>
    %149 = vector.shape_cast %148 : vector<1x24xf32> to vector<1x24x1xf32>
    %150 = tpu.reciprocal %149 {approx = true} : vector<1x24x1xf32> -> vector<1x24x1xf32>
    %151 = vector.broadcast %150 : vector<1x24x1xf32> to vector<1x24x24xf32>
    %152 = arith.mulf %147, %151 : vector<1x24x24xf32>
    %153 = arith.truncf %152 : vector<1x24x24xf32> to vector<1x24x24xbf16>
    "tpu.trace_start"() <{level = 10 : i32, message = "bqk,bkd->bqd"}> : () -> ()
    %cst_52 = arith.constant dense<0.000000e+00> : vector<1x24x32xf32>
    %154 = tpu.matmul %153, %136, %cst_52 {dimension_numbers = #tpu.dot_dimension_numbers<[2], [1], [1], [2], [0, 0, 0, 1, 1, 2], [0], [0]>} : vector<1x24x24xbf16>, vector<1x24x32xbf16>, vector<1x24x32xf32> -> vector<1x24x32xf32>
    "tpu.trace_stop"() : () -> ()
    %155 = vector.shape_cast %154 : vector<1x24x32xf32> to vector<24x32xf32>
    %c0_53 = arith.constant 0 : index
    %c64 = arith.constant 64 : index
    %c384_54 = arith.constant 384 : index
    %156 = vector.load %arg3[%c0_53, %c64, %c384_54] : memref<1x128x768xbf16, #tpu.memory_space<vmem>>, vector<1x32x128xbf16>
    %157 = vector.shape_cast %156 : vector<1x32x128xbf16> to vector<32x128xbf16>
    %158 = arith.truncf %155 : vector<24x32xf32> to vector<24x32xbf16>
    %cst_55 = arith.constant dense<0.000000e+00> : vector<24x128xf32>
    %159 = tpu.matmul %158, %157, %cst_55 {dimension_numbers = #tpu.dot_dimension_numbers<[1], [0], [0], [1], [0, 0, 1, 1], [], []>} : vector<24x32xbf16>, vector<32x128xbf16>, vector<24x128xf32> -> vector<24x128xf32>
    %160 = arith.addf %127, %159 : vector<24x128xf32>
    %161 = vector.extract_strided_slice %48 {offsets = [0, 96], sizes = [24, 32], strides = [1, 1]} : vector<24x384xf32> to vector<24x32xf32>
    %162 = vector.shape_cast %161 : vector<24x32xf32> to vector<1x24x32xf32>
    %163 = arith.truncf %162 : vector<1x24x32xf32> to vector<1x24x32xbf16>
    %164 = vector.extract_strided_slice %48 {offsets = [0, 224], sizes = [24, 32], strides = [1, 1]} : vector<24x384xf32> to vector<24x32xf32>
    %165 = vector.shape_cast %164 : vector<24x32xf32> to vector<1x24x32xf32>
    %166 = arith.truncf %165 : vector<1x24x32xf32> to vector<1x24x32xbf16>
    %167 = vector.extract_strided_slice %48 {offsets = [0, 352], sizes = [24, 32], strides = [1, 1]} : vector<24x384xf32> to vector<24x32xf32>
    %168 = vector.shape_cast %167 : vector<24x32xf32> to vector<1x24x32xf32>
    %169 = arith.truncf %168 : vector<1x24x32xf32> to vector<1x24x32xbf16>
    "tpu.trace_start"() <{level = 10 : i32, message = "bqd,bkd->bqk"}> : () -> ()
    %cst_56 = arith.constant dense<0.000000e+00> : vector<1x24x24xf32>
    %170 = tpu.matmul %163, %166, %cst_56 {dimension_numbers = #tpu.dot_dimension_numbers<[2], [2], [1], [1], [0, 0, 0, 1, 1, 1], [0], [0]>} : vector<1x24x32xbf16>, vector<1x24x32xbf16>, vector<1x24x24xf32> -> vector<1x24x24xf32>
    "tpu.trace_stop"() : () -> ()
    %cst_57 = arith.constant 0.176776692 : f32
    %171 = vector.broadcast %cst_57 : f32 to vector<1x24x24xf32>
    %172 = arith.mulf %170, %171 : vector<1x24x24xf32>
    %173 = vector.shape_cast %60 : vector<1x24xf32> to vector<1x1x24xf32>
    %174 = vector.broadcast %173 : vector<1x1x24xf32> to vector<1x24x24xf32>
    %175 = arith.addf %172, %174 : vector<1x24x24xf32>
    %cst_58 = arith.constant dense<0xFF800000> : vector<1x24xf32>
    %176 = vector.multi_reduction <maximumf>, %175, %cst_58 [2] : vector<1x24x24xf32> to vector<1x24xf32>
    %177 = vector.shape_cast %176 : vector<1x24xf32> to vector<1x24x1xf32>
    %178 = vector.broadcast %177 : vector<1x24x1xf32> to vector<1x24x24xf32>
    %179 = arith.subf %175, %178 : vector<1x24x24xf32>
    %180 = math.exp %179 : vector<1x24x24xf32>
    %cst_59 = arith.constant dense<0.000000e+00> : vector<1x24xf32>
    %181 = vector.multi_reduction <add>, %180, %cst_59 [2] : vector<1x24x24xf32> to vector<1x24xf32>
    %182 = vector.shape_cast %181 : vector<1x24xf32> to vector<1x24x1xf32>
    %183 = tpu.reciprocal %182 {approx = true} : vector<1x24x1xf32> -> vector<1x24x1xf32>
    %184 = vector.broadcast %183 : vector<1x24x1xf32> to vector<1x24x24xf32>
    %185 = arith.mulf %180, %184 : vector<1x24x24xf32>
    %186 = arith.truncf %185 : vector<1x24x24xf32> to vector<1x24x24xbf16>
    "tpu.trace_start"() <{level = 10 : i32, message = "bqk,bkd->bqd"}> : () -> ()
    %cst_60 = arith.constant dense<0.000000e+00> : vector<1x24x32xf32>
    %187 = tpu.matmul %186, %169, %cst_60 {dimension_numbers = #tpu.dot_dimension_numbers<[2], [1], [1], [2], [0, 0, 0, 1, 1, 2], [0], [0]>} : vector<1x24x24xbf16>, vector<1x24x32xbf16>, vector<1x24x32xf32> -> vector<1x24x32xf32>
    "tpu.trace_stop"() : () -> ()
    %188 = vector.shape_cast %187 : vector<1x24x32xf32> to vector<24x32xf32>
    %c0_61 = arith.constant 0 : index
    %c96 = arith.constant 96 : index
    %c384_62 = arith.constant 384 : index
    %189 = vector.load %arg3[%c0_61, %c96, %c384_62] : memref<1x128x768xbf16, #tpu.memory_space<vmem>>, vector<1x32x128xbf16>
    %190 = vector.shape_cast %189 : vector<1x32x128xbf16> to vector<32x128xbf16>
    %191 = arith.truncf %188 : vector<24x32xf32> to vector<24x32xbf16>
    %cst_63 = arith.constant dense<0.000000e+00> : vector<24x128xf32>
    %192 = tpu.matmul %191, %190, %cst_63 {dimension_numbers = #tpu.dot_dimension_numbers<[1], [0], [0], [1], [0, 0, 1, 1], [], []>} : vector<24x32xbf16>, vector<32x128xbf16>, vector<24x128xf32> -> vector<24x128xf32>
    %193 = arith.addf %160, %192 : vector<24x128xf32>
    %194 = arith.addf %4, %193 : vector<24x128xf32>
    %195 = vector.broadcast %12 : vector<1x128xf32> to vector<24x128xf32>
    %196 = arith.addf %194, %195 : vector<24x128xf32>
    %cst_64 = arith.constant dense<0.000000e+00> : vector<24xf32>
    %197 = vector.multi_reduction <add>, %196, %cst_64 [1] : vector<24x128xf32> to vector<24xf32>
    %198 = vector.shape_cast %197 : vector<24xf32> to vector<24x1xf32>
    %cst_65 = arith.constant 1.280000e+02 : f32
    %199 = vector.broadcast %cst_65 : f32 to vector<24x1xf32>
    %200 = arith.divf %198, %199 : vector<24x1xf32>
    %201 = vector.broadcast %200 : vector<24x1xf32> to vector<24x128xf32>
    %202 = arith.subf %196, %201 : vector<24x128xf32>
    %203 = arith.mulf %202, %202 : vector<24x128xf32>
    %cst_66 = arith.constant dense<0.000000e+00> : vector<24xf32>
    %204 = vector.multi_reduction <add>, %203, %cst_66 [1] : vector<24x128xf32> to vector<24xf32>
    %205 = vector.shape_cast %204 : vector<24xf32> to vector<24x1xf32>
    %cst_67 = arith.constant 1.280000e+02 : f32
    %206 = vector.broadcast %cst_67 : f32 to vector<24x1xf32>
    %207 = arith.divf %205, %206 : vector<24x1xf32>
    %208 = vector.broadcast %200 : vector<24x1xf32> to vector<24x128xf32>
    %209 = arith.subf %196, %208 : vector<24x128xf32>
    %cst_68 = arith.constant 9.99999974E-6 : f32
    %210 = vector.broadcast %cst_68 : f32 to vector<24x1xf32>
    %211 = arith.addf %207, %210 : vector<24x1xf32>
    %212 = math.rsqrt %211 : vector<24x1xf32>
    %213 = vector.broadcast %212 : vector<24x1xf32> to vector<24x128xf32>
    %214 = arith.mulf %209, %213 : vector<24x128xf32>
    %215 = vector.broadcast %14 : vector<1x128xf32> to vector<24x128xf32>
    %216 = arith.mulf %214, %215 : vector<24x128xf32>
    %217 = vector.broadcast %16 : vector<1x128xf32> to vector<24x128xf32>
    %218 = arith.addf %216, %217 : vector<24x128xf32>
    %c0_69 = arith.constant 0 : index
    %c0_70 = arith.constant 0 : index
    %c512 = arith.constant 512 : index
    %219 = vector.load %arg3[%c0_69, %c0_70, %c512] : memref<1x128x768xbf16, #tpu.memory_space<vmem>>, vector<1x128x256xbf16>
    %220 = vector.shape_cast %219 : vector<1x128x256xbf16> to vector<128x256xbf16>
    %221 = arith.truncf %218 : vector<24x128xf32> to vector<24x128xbf16>
    %cst_71 = arith.constant dense<0.000000e+00> : vector<24x256xf32>
    %222 = tpu.matmul %221, %220, %cst_71 {dimension_numbers = #tpu.dot_dimension_numbers<[1], [0], [0], [1], [0, 0, 1, 1], [], []>} : vector<24x128xbf16>, vector<128x256xbf16>, vector<24x256xf32> -> vector<24x256xf32>
    %223 = vector.broadcast %18 : vector<1x256xf32> to vector<24x256xf32>
    %224 = arith.addf %222, %223 : vector<24x256xf32>
    %cst_72 = arith.constant 5.000000e-01 : f32
    %225 = vector.broadcast %cst_72 : f32 to vector<24x256xf32>
    %226 = arith.mulf %225, %224 : vector<24x256xf32>
    %cst_73 = arith.constant 0.707106769 : f32
    %227 = vector.broadcast %cst_73 : f32 to vector<24x256xf32>
    %228 = arith.mulf %224, %227 : vector<24x256xf32>
    %229 = math.erf %228 : vector<24x256xf32>
    %cst_74 = arith.constant 1.000000e+00 : f32
    %230 = vector.broadcast %cst_74 : f32 to vector<24x256xf32>
    %231 = arith.addf %230, %229 : vector<24x256xf32>
    %232 = arith.mulf %226, %231 : vector<24x256xf32>
    %c0_75 = arith.constant 0 : index
    %c0_76 = arith.constant 0 : index
    %c0_77 = arith.constant 0 : index
    %233 = vector.load %arg4[%c0_75, %c0_76, %c0_77] : memref<1x256x128xbf16, #tpu.memory_space<vmem>>, vector<1x256x128xbf16>
    %234 = vector.shape_cast %233 : vector<1x256x128xbf16> to vector<256x128xbf16>
    %235 = arith.truncf %232 : vector<24x256xf32> to vector<24x256xbf16>
    %cst_78 = arith.constant dense<0.000000e+00> : vector<24x128xf32>
    %236 = tpu.matmul %235, %234, %cst_78 {dimension_numbers = #tpu.dot_dimension_numbers<[1], [0], [0], [1], [0, 0, 1, 1], [], []>} : vector<24x256xbf16>, vector<256x128xbf16>, vector<24x128xf32> -> vector<24x128xf32>
    %237 = vector.broadcast %20 : vector<1x128xf32> to vector<24x128xf32>
    %238 = arith.addf %236, %237 : vector<24x128xf32>
    %239 = arith.addf %196, %238 : vector<24x128xf32>
    %240 = vector.shape_cast %239 : vector<24x128xf32> to vector<1x24x128xf32>
    %c0_79 = arith.constant 0 : index
    %c0_80 = arith.constant 0 : index
    %c0_81 = arith.constant 0 : index
    %241 = vector.load %arg9[%c0_79, %c0_80, %c0_81] : memref<1x24x128xf32, #tpu.memory_space<vmem>>, vector<1x24x128xf32>
    tpu.vector_store %arg9[%c0_79, %c0_80, %c0_81], %240 {strides = array<i32>} : memref<1x24x128xf32, #tpu.memory_space<vmem>>, vector<1x24x128xf32>,
    %c2_i32 = arith.constant 2 : i32
    %242 = arith.cmpi eq, %arg1, %c2_i32 : i32
    %243 = arith.extui %242 : i1 to i32
    %c0_i32_82 = arith.constant 0 : i32
    %244 = arith.cmpi ne, %243, %c0_i32_82 : i32
    scf.if %244 {
      %245 = vector.shape_cast %239 : vector<24x128xf32> to vector<1x24x128xf32>
      %246 = vector.extract_strided_slice %245 {offsets = [0, 0, 0], sizes = [1, 1, 128], strides = [1, 1, 1]} : vector<1x24x128xf32> to vector<1x1x128xf32>
      %247 = vector.shape_cast %246 : vector<1x1x128xf32> to vector<1x128xf32>
      %c0_83 = arith.constant 0 : index
      %c0_84 = arith.constant 0 : index
      %248 = vector.load %arg7[%c0_83, %c0_84] : memref<1x384xf32, #tpu.memory_space<vmem>>, vector<1x128xf32>
      %c0_85 = arith.constant 0 : index
      %c128_86 = arith.constant 128 : index
      %249 = vector.load %arg7[%c0_85, %c128_86] : memref<1x384xf32, #tpu.memory_space<vmem>>, vector<1x128xf32>
      %cst_87 = arith.constant dense<0.000000e+00> : vector<1xf32>
      %250 = vector.multi_reduction <add>, %247, %cst_87 [1] : vector<1x128xf32> to vector<1xf32>
      %251 = vector.shape_cast %250 : vector<1xf32> to vector<1x1xf32>
      %cst_88 = arith.constant 1.280000e+02 : f32
      %252 = vector.broadcast %cst_88 : f32 to vector<1x1xf32>
      %253 = arith.divf %251, %252 : vector<1x1xf32>
      %254 = vector.broadcast %253 : vector<1x1xf32> to vector<1x128xf32>
      %255 = arith.subf %247, %254 : vector<1x128xf32>
      %256 = arith.mulf %255, %255 : vector<1x128xf32>
      %cst_89 = arith.constant dense<0.000000e+00> : vector<1xf32>
      %257 = vector.multi_reduction <add>, %256, %cst_89 [1] : vector<1x128xf32> to vector<1xf32>
      %258 = vector.shape_cast %257 : vector<1xf32> to vector<1x1xf32>
      %cst_90 = arith.constant 1.280000e+02 : f32
      %259 = vector.broadcast %cst_90 : f32 to vector<1x1xf32>
      %260 = arith.divf %258, %259 : vector<1x1xf32>
      %261 = vector.broadcast %253 : vector<1x1xf32> to vector<1x128xf32>
      %262 = arith.subf %247, %261 : vector<1x128xf32>
      %cst_91 = arith.constant 9.99999974E-6 : f32
      %263 = vector.broadcast %cst_91 : f32 to vector<1x1xf32>
      %264 = arith.addf %260, %263 : vector<1x1xf32>
      %265 = math.rsqrt %264 : vector<1x1xf32>
      %266 = vector.broadcast %265 : vector<1x1xf32> to vector<1x128xf32>
      %267 = arith.mulf %262, %266 : vector<1x128xf32>
      %268 = arith.mulf %267, %248 : vector<1x128xf32>
      %269 = arith.addf %268, %249 : vector<1x128xf32>
      %c0_92 = arith.constant 0 : index
      %c0_93 = arith.constant 0 : index
      %270 = vector.load %arg6[%c0_92, %c0_93] : memref<128x128xbf16, #tpu.memory_space<vmem>>, vector<128x128xbf16>
      %271 = arith.truncf %269 : vector<1x128xf32> to vector<1x128xbf16>
      %cst_94 = arith.constant dense<0.000000e+00> : vector<1x128xf32>
      %272 = tpu.matmul %271, %270, %cst_94 {dimension_numbers = #tpu.dot_dimension_numbers<[1], [0], [0], [1], [0, 0, 1, 1], [], []>} : vector<1x128xbf16>, vector<128x128xbf16>, vector<1x128xf32> -> vector<1x128xf32>
      %c0_95 = arith.constant 0 : index
      %c256_96 = arith.constant 256 : index
      %273 = vector.load %arg7[%c0_95, %c256_96] : memref<1x384xf32, #tpu.memory_space<vmem>>, vector<1x128xf32>
      %274 = arith.addf %272, %273 : vector<1x128xf32>
      %c0_97 = arith.constant 0 : index
      %c0_98 = arith.constant 0 : index
      %c0_99 = arith.constant 0 : index
      %275 = vector.load %arg8[%c0_97, %c0_98, %c0_99] : memref<1x1x128xf32, #tpu.memory_space<vmem>>, vector<1x1x128xf32>
      %276 = vector.shape_cast %275 : vector<1x1x128xf32> to vector<1x128xf32>
      %277 = vector.shape_cast %274 : vector<1x128xf32> to vector<1x1x128xf32>
      tpu.vector_store %arg8[%c0_97, %c0_98, %c0_99], %277 {strides = array<i32>} : memref<1x1x128xf32, #tpu.memory_space<vmem>>, vector<1x1x128xf32>,
    } else {
    }
    return
  }
  func.func @transform_0(%arg0: i32, %arg1: i32) -> (i32, i32, i32) {
    %c0_i32 = arith.constant 0 : i32
    %c0_i32_0 = arith.constant 0 : i32
    %c0_i32_1 = arith.constant 0 : i32
    return %arg0, %c0_i32, %c0_i32_0 : i32, i32, i32
  }
  func.func @transform_1(%arg0: i32, %arg1: i32) -> (i32, i32, i32) {
    %c0_i32 = arith.constant 0 : i32
    %c0_i32_0 = arith.constant 0 : i32
    %c0_i32_1 = arith.constant 0 : i32
    return %arg1, %c0_i32, %c0_i32_0 : i32, i32, i32
  }
  func.func @transform_2(%arg0: i32, %arg1: i32) -> (i32, i32, i32) {
    %c0_i32 = arith.constant 0 : i32
    %c0_i32_0 = arith.constant 0 : i32
    %c0_i32_1 = arith.constant 0 : i32
    return %arg1, %c0_i32, %c0_i32_0 : i32, i32, i32
  }
  func.func @transform_3(%arg0: i32, %arg1: i32) -> (i32, i32, i32) {
    %c0_i32 = arith.constant 0 : i32
    %c0_i32_0 = arith.constant 0 : i32
    %c0_i32_1 = arith.constant 0 : i32
    return %arg1, %c0_i32, %c0_i32_0 : i32, i32, i32
  }
  func.func @transform_4(%arg0: i32, %arg1: i32) -> (i32, i32) {
    %c0_i32 = arith.constant 0 : i32
    %c0_i32_0 = arith.constant 0 : i32
    %c0_i32_1 = arith.constant 0 : i32
    return %c0_i32, %c0_i32_0 : i32, i32
  }
  func.func @transform_5(%arg0: i32, %arg1: i32) -> (i32, i32) {
    %c0_i32 = arith.constant 0 : i32
    %c0_i32_0 = arith.constant 0 : i32
    %c0_i32_1 = arith.constant 0 : i32
    return %c0_i32, %c0_i32_0 : i32, i32
  }
  func.func @transform_6(%arg0: i32, %arg1: i32) -> (i32, i32, i32) {
    %c0_i32 = arith.constant 0 : i32
    %c0_i32_0 = arith.constant 0 : i32
    %c0_i32_1 = arith.constant 0 : i32
    return %arg0, %c0_i32, %c0_i32_0 : i32, i32, i32
  }
}

</mosaic_0001>

<llo_original>
// kernel: vit_forward.2
$region0: #{vit_forward.2}
  #allocation0 [shape = 'u32[]', space=smem, size = 0x4, offset = 0x4, fixed_abs, tag = 'smem constant byte address 0x4 - core index']
  #allocation1 [shape = 'u32[144,128]{1,0:T(1,128)}', space=vmem, size = 0x12000, scoped, tag = 'internal scratch']
  %s0 = inlined_call_operand.vmem [shape: f32[32,192], index: 0, kind: input, shape index: {}]
  %s1 = inlined_call_operand.vmem [shape: bf16[192,128], index: 1, kind: input, shape index: {}]
  %s2 = inlined_call_operand.vmem [shape: f32[1,128], index: 2, kind: input, shape index: {}]
  %s3 = inlined_call_operand.vmem [shape: f32[1,1,128], index: 3, kind: input, shape index: {}]
  %s4 = inlined_call_operand.vmem [shape: f32[1,24,128], index: 4, kind: input, shape index: {}]
  %s5 = inlined_call_operand.vmem [shape: f32[1,128], index: 5, kind: input, shape index: {}]
  %s6 = inlined_call_operand.vmem [shape: f32[1,128], index: 6, kind: input, shape index: {}]
  %s7 = inlined_call_operand.vmem [shape: f32[2,24,128], index: 7, kind: output, shape index: {}]
  %s8 = sld [smem:[#allocation0]]
  $region38: #{vit_forward.2} parent=0
    _
  %s10 = ssub.s32 1, %s8
  %s11 = scalar_select 0, %s10, %s8
  // Predicated region
  $region2: #{vit_forward.2} parent=0 // pred_check
    _
  $region3: #{vit_forward.2} parent=0 // pred_check_branch
    %13 = sbr.rel (0) target = $region5
  $region4: #{vit_forward.2} parent=0 // pred_region
    _
  $region5: #{vit_forward.2} parent=0 // pred_fallthru
    _
  // Predicated region
  $region6: #{vit_forward.2} parent=0 // pred_check
    _
  $region7: #{vit_forward.2} parent=0 // pred_check_branch
    %15 = sbr.rel (0) target = $region9
  $region8: #{vit_forward.2} parent=0 // pred_region
    _
  $region9: #{vit_forward.2} parent=0 // pred_fallthru
    _
  // Predicated region
  $region10: #{vit_forward.2} parent=0 // pred_check
    _
  $region11: #{vit_forward.2} parent=0 // pred_check_branch
    %17 = sbr.rel (0) target = $region13
  $region12: #{vit_forward.2} parent=0 // pred_region
    _
  $region13: #{vit_forward.2} parent=0 // pred_fallthru
    _
  // Predicated region
  $region14: #{vit_forward.2} parent=0 // pred_check
    _
  $region15: #{vit_forward.2} parent=0 // pred_check_branch
    %19 = sbr.rel (0) target = $region17
  $region16: #{vit_forward.2} parent=0 // pred_region
    _
  $region17: #{vit_forward.2} parent=0 // pred_fallthru
    _
  // Predicated region
  $region18: #{vit_forward.2} parent=0 // pred_check
    _
  $region19: #{vit_forward.2} parent=0 // pred_check_branch
    %21 = sbr.rel (0) target = $region21
  $region20: #{vit_forward.2} parent=0 // pred_region
    _
  $region21: #{vit_forward.2} parent=0 // pred_fallthru
    _
  // Predicated region
  $region22: #{vit_forward.2} parent=0 // pred_check
    _
  $region23: #{vit_forward.2} parent=0 // pred_check_branch
    %23 = sbr.rel (0) target = $region25
  $region24: #{vit_forward.2} parent=0 // pred_region
    _
  $region25: #{vit_forward.2} parent=0 // pred_fallthru
    _
  // Predicated region
  $region26: #{vit_forward.2} parent=0 // pred_check
    _
  $region27: #{vit_forward.2} parent=0 // pred_check_branch
    %25 = sbr.rel (0) target = $region29
  $region28: #{vit_forward.2} parent=0 // pred_region
    _
  $region29: #{vit_forward.2} parent=0 // pred_fallthru
    _
  %v27 = vld [vmem:[%s5] sm:$0x1]
  %v28 = vld [vmem:[%s6] sm:$0x1]
  %v29 = vld [vmem:[%s0] sm:$0xff]
  %v30 = vld [vmem:[%s0 + $0x8] sm:$0xff]
  %v31 = vld [vmem:[%s0 + $0x10] sm:$0xff]
  %v32 = vld [vmem:[%s0 + $0x18] sm:$0xff]
  %v33 = vld [vmem:[%s0 + $0x20] sm:$0xff]
  %v34 = vld [vmem:[%s0 + $0x28] sm:$0xff]
  %v35 = vld [vmem:[%s0 + $0x30] sm:$0xff]
  %v36 = vld [vmem:[%s0 + $0x38] sm:$0xff]
  %v37 = vld [vmem:[%s1] sm:$0xf]
  %v38 = vld [vmem:[%s1 + $0x4] sm:$0xf]
  %v39 = vld [vmem:[%s1 + $0x8] sm:$0xf]
  %v40 = vld [vmem:[%s1 + $0xc] sm:$0xf]
  %v41 = vld [vmem:[%s1 + $0x10] sm:$0xf]
  %v42 = vld [vmem:[%s1 + $0x14] sm:$0xf]
  %v43 = vld [vmem:[%s1 + $0x18] sm:$0xf]
  %v44 = vld [vmem:[%s1 + $0x1c] sm:$0xf]
  %v45 = vld [vmem:[%s1 + $0x20] sm:$0xf]
  %v46 = vld [vmem:[%s1 + $0x24] sm:$0xf]
  %v47 = vld [vmem:[%s1 + $0x28] sm:$0xf]
  %v48 = vld [vmem:[%s1 + $0x2c] sm:$0xf]
  %v49 = vld [vmem:[%s1 + $0x30] sm:$0xf]
  %v50 = vld [vmem:[%s1 + $0x34] sm:$0xf]
  %v51 = vld [vmem:[%s1 + $0x38] sm:$0xf]
  %v52 = vld [vmem:[%s1 + $0x3c] sm:$0xf]
  %v53 = vld [vmem:[%s1 + $0x40] sm:$0xf]
  %v54 = vld [vmem:[%s1 + $0x44] sm:$0xf]
  %v55 = vld [vmem:[%s1 + $0x48] sm:$0xf]
  %v56 = vld [vmem:[%s1 + $0x4c] sm:$0xf]
  %v57 = vld [vmem:[%s1 + $0x50] sm:$0xf]
  %v58 = vld [vmem:[%s1 + $0x54] sm:$0xf]
  %v59 = vld [vmem:[%s1 + $0x58] sm:$0xf]
  %v60 = vld [vmem:[%s1 + $0x5c] sm:$0xf]
  %v61 = vpack.c.bf16 %v31, %v29
  %v62 = vpack.c.bf16 %v32, %v30
  %v63 = vpack.c.bf16 %v35, %v33
  %v64 = vpack.c.bf16 %v36, %v34
  %v65 = vld [vmem:[%s2] sm:$0x1]
  %v67 = vlaneseq
  %v68 = vshrl.u32 %v67, 7
  %v69 = vsub.s32 0, %v68
  %v70 = vrot.slane %v65, %v69
  %v96 = vunpack.c.l.b16 %v37
  %v97 = vunpack.c.l.b16 %v38
  %v98 = vunpack.c.l.b16 %v39
  %v99 = vunpack.c.l.b16 %v40
  %v100 = vunpack.c.l.b16 %v41
  %v101 = vunpack.c.l.b16 %v42
  %v102 = vunpack.c.l.b16 %v43
  %v103 = vunpack.c.l.b16 %v44
  %v104 = vunpack.c.l.b16 %v45
  %v105 = vunpack.c.l.b16 %v46
  %v106 = vunpack.c.l.b16 %v47
  %v107 = vunpack.c.l.b16 %v48
  %v108 = vunpack.c.l.b16 %v49
  %v109 = vunpack.c.l.b16 %v50
  %v110 = vunpack.c.l.b16 %v51
  %v111 = vunpack.c.l.b16 %v52
  %v112 = vunpack.c.l.b16 %v53
  %v113 = vunpack.c.l.b16 %v54
  %v114 = vunpack.c.l.b16 %v55
  %v115 = vunpack.c.l.b16 %v56
  %v116 = vunpack.c.l.b16 %v57
  %v117 = vunpack.c.l.b16 %v58
  %v118 = vunpack.c.l.b16 %v59
  %v119 = vunpack.c.l.b16 %v60
  %v120 = vpack.c.b16 %v97, %v96
  %v121 = vpack.c.b16 %v99, %v98
  %v122 = vpack.c.b16 %v101, %v100
  %v123 = vpack.c.b16 %v103, %v102
  %v124 = vpack.c.b16 %v105, %v104
  %v125 = vpack.c.b16 %v107, %v106
  %v126 = vpack.c.b16 %v109, %v108
  %v127 = vpack.c.b16 %v111, %v110
  %v128 = vpack.c.b16 %v113, %v112
  %v129 = vpack.c.b16 %v115, %v114
  %v130 = vpack.c.b16 %v117, %v116
  %v131 = vpack.c.b16 %v119, %v118
  %vm144 = vcmask 523264
  %v146 = vsel %vm144, %v62, 0
  %v149 = vsel %vm144, %v64, 0
  %151 = vmatprep.subr.bf16.mxu0 0
  %152 = vmatpush1.bf16.msra.mxu0 %v127
  %153 = vmatprep.subr.bf16.mxu0 0
  %154 = vmatpush1.bf16.msra.mxu0 %v126
  %155 = vmatprep.subr.bf16.mxu0 0
  %156 = vmatpush1.bf16.msra.mxu0 %v125
  %157 = vmatprep.subr.bf16.mxu0 0
  %158 = vmatpush1.bf16.msra.mxu0 %v124
  %159 = vmatprep.subr.bf16.mxu0 0
  %160 = vmatpush1.bf16.msra.mxu0 %v123
  %161 = vmatprep.subr.bf16.mxu0 0
  %162 = vmatpush1.bf16.msra.mxu0 %v122
  %163 = vmatprep.subr.bf16.mxu0 0
  %164 = vmatpush1.bf16.msra.mxu0 %v121
  %165 = vmatprep.subr.bf16.mxu0 0
  %166 = vmatpush1.bf16.msra.mxu0 %v120
  %167 = vmatprep.subr.bf16.mxu0 0
  %168 = vmatpush2.bf16.msra.mxu0 0
  %169 = vmatprep.subr.bf16.mxu0 0
  %170 = vmatpush2.bf16.msra.mxu0 0
  %171 = vmatprep.subr.bf16.mxu0 0
  %172 = vmatpush2.bf16.msra.mxu0 0
  %173 = vmatprep.subr.bf16.mxu0 0
  %174 = vmatpush2.bf16.msra.mxu0 0
  %175 = vmatprep.subr.bf16.mxu0 0
  %176 = vmatpush2.bf16.msra.mxu0 %v131
  %177 = vmatprep.subr.bf16.mxu0 0
  %178 = vmatpush2.bf16.msra.mxu0 %v130
  %179 = vmatprep.subr.bf16.mxu0 0
  %180 = vmatpush2.bf16.msra.mxu0 %v129
  %181 = vmatprep.subr.bf16.mxu0 0
  %182 = vmatpush2.bf16.msra.mxu0 %v128
  %183 = vmatprep.mubr.bf16.mxu0 %v146
  %184 = vmatmul.mubr.bf16.gmra.mxu0 %v61
  %v185 = vpop.f32.mrf.mxu0
  %v186 = vadd.f32 %v70, %v185
  %v187 = vpop.f32.mrf.mxu0
  %v188 = vpop.f32.mrf.mxu0
  %v189 = vadd.f32 %v70, %v188
  %v190 = vpop.f32.mrf.mxu0
  %191 = vmatprep.mubr.bf16.mxu0 %v149
  %192 = vmatmul.mubr.bf16.gmra.mxu0 %v63
  %v193 = vpop.f32.mrf.mxu0
  %v194 = vadd.f32 %v70, %v193
  %v195 = vpop.f32.mrf.mxu0
  %v196 = vpop.f32.mrf.mxu0
  %v197 = vadd.f32 %v70, %v196
  %v198 = vpop.f32.mrf.mxu0
  %199 = vdwg.mxu0
  %200 = vst [vmem:[%s7] sm:$0xff] 0.0
  %201 = vst [vmem:[%s7 + $0x8] sm:$0xff] 0.0
  %202 = vst [vmem:[%s7 + $0x10] sm:$0xff] 0.0
  %203 = vst [vmem:[%s7 + $0x18] sm:$0xff] 0.0
  %204 = vst [vmem:[%s7 + $0x20] sm:$0xff] 0.0
  %205 = vst [vmem:[%s7 + $0x28] sm:$0xff] 0.0
  %v206 = vld [vmem:[%s3] sm:$0x1]
  %v207 = vld [vmem:[%s4] sm:$0x1]
  %v208 = vadd.f32 %v206, %v207
  %vm209 = vcmask 1040384
  %v210 = vsel %vm209, %v208, 0.0
  %211 = vadd.xlane.f32.xlu0 %v210
  %v212 = vpop.xlane.xlu0 %211
  %v213 = vrcp.pop 128.0
  %v214 = vmul.f32 %v212, %v213
  %v215 = vsub.f32 %v208, %v214
  %v216 = vmul.f32 %v215, %v215
  %v217 = vsel %vm209, %v216, 0.0
  %218 = vadd.xlane.f32.xlu0 %v217
  %v219 = vpop.xlane.xlu0 %218
  %v220 = vmul.f32 %v219, %v213
  %v221 = vadd.f32 %v220, 1e-05
  %v222 = vrsqrt.pop %v221
  %v223 = vmul.f32 %v215, %v222
  %v224 = vmul.f32 %v223, %v27
  %v225 = vadd.f32 %v224, %v28
  %226 = vst [vmem:[%s7] sm:$0x1] %v225
  %227 = vst [vmem:[%s7 + $0x18] sm:$0x1] %v225
  %v228 = vld [vmem:[%s4 + $0x8] sm:$0xff]
  %v229 = vld [vmem:[%s4 + $0x10] sm:$0xff]
  %v230 = vadd.f32 %v186, %v228
  %v231 = vadd.f32 %v189, %v229
  %v232 = vadd.f32 %v194, %v228
  %v233 = vadd.f32 %v197, %v229
  %234 = vadd.xlane.f32.xlu0 %v230
  %v235 = vpop.xlane.xlu0 %234
  %236 = vadd.xlane.f32.xlu0 %v231
  %v237 = vpop.xlane.xlu0 %236
  %238 = vadd.xlane.f32.xlu0 %v232
  %v239 = vpop.xlane.xlu0 %238
  %240 = vadd.xlane.f32.xlu0 %v233
  %v241 = vpop.xlane.xlu0 %240
  %v242 = vmul.f32 %v235, %v213
  %v243 = vmul.f32 %v237, %v213
  %v244 = vmul.f32 %v239, %v213
  %v245 = vmul.f32 %v241, %v213
  %v246 = vsub.f32 %v230, %v242
  %v247 = vsub.f32 %v231, %v243
  %v248 = vsub.f32 %v232, %v244
  %v249 = vsub.f32 %v233, %v245
  %v250 = vmul.f32 %v246, %v246
  %v251 = vmul.f32 %v247, %v247
  %v252 = vmul.f32 %v248, %v248
  %v253 = vmul.f32 %v249, %v249
  %254 = vadd.xlane.f32.xlu0 %v250
  %v255 = vpop.xlane.xlu0 %254
  %256 = vadd.xlane.f32.xlu0 %v251
  %v257 = vpop.xlane.xlu0 %256
  %258 = vadd.xlane.f32.xlu0 %v252
  %v259 = vpop.xlane.xlu0 %258
  %260 = vadd.xlane.f32.xlu0 %v253
  %v261 = vpop.xlane.xlu0 %260
  %v262 = vmul.f32 %v255, %v213
  %v263 = vmul.f32 %v257, %v213
  %v264 = vmul.f32 %v259, %v213
  %v265 = vmul.f32 %v261, %v213
  %v266 = vadd.f32 %v262, 1e-05
  %v267 = vadd.f32 %v263, 1e-05
  %v268 = vadd.f32 %v264, 1e-05
  %v269 = vadd.f32 %v265, 1e-05
  %v270 = vrsqrt.pop %v266
  %v271 = vrsqrt.pop %v267
  %v272 = vrsqrt.pop %v268
  %v273 = vrsqrt.pop %v269
  %v274 = vmul.f32 %v246, %v270
  %v275 = vmul.f32 %v247, %v271
  %v276 = vmul.f32 %v248, %v272
  %v277 = vmul.f32 %v249, %v273
  %v279 = vlaneseq
  %v280 = vshrl.u32 %v279, 7
  %v281 = vsub.s32 0, %v280
  %v282 = vrot.slane %v27, %v281
  %v284 = vmul.f32 %v274, %v282
  %v285 = vmul.f32 %v275, %v282
  %v286 = vmul.f32 %v276, %v282
  %v287 = vmul.f32 %v277, %v282
  %v289 = vlaneseq
  %v290 = vshrl.u32 %v289, 7
  %v291 = vsub.s32 0, %v290
  %v292 = vrot.slane %v28, %v291
  %v294 = vadd.f32 %v284, %v292
  %v295 = vadd.f32 %v285, %v292
  %v296 = vadd.f32 %v286, %v292
  %v297 = vadd.f32 %v287, %v292
  %298 = vst [vmem:[%s7 + $0x8] sm:$0xff] %v294
  %299 = vst [vmem:[%s7 + $0x10] sm:$0xff] %v295
  %300 = vst [vmem:[%s7 + $0x20] sm:$0xff] %v296
  %301 = vst [vmem:[%s7 + $0x28] sm:$0xff] %v297
  // Predicated region
  $region30: #{vit_forward.2} parent=0 // pred_check
    _
  $region31: #{vit_forward.2} parent=0 // pred_check_branch
    %303 = sbr.rel (0) target = $region33
  $region32: #{vit_forward.2} parent=0 // pred_region
    _
  $region33: #{vit_forward.2} parent=0 // pred_fallthru
    _
  // Predicated region
  $region34: #{vit_forward.2} parent=0 // pred_check
    _
  $region35: #{vit_forward.2} parent=0 // pred_check_branch
    %305 = sbr.rel (0) target = $region37
  $region36: #{vit_forward.2} parent=0 // pred_region
    _
  $region37: #{vit_forward.2} parent=0 // pred_fallthru
    _

// kernel: vit_forward.3
$region0: #{vit_forward.3}
  #allocation0 [shape = 'u32[]', space=smem, size = 0x4, offset = 0x4, fixed_abs, tag = 'smem constant byte address 0x4 - core index']
  #allocation1 [shape = 'u32[144,128]{1,0:T(1,128)}', space=vmem, size = 0x12000, scoped, tag = 'internal scratch']
  #allocation2 [shape = 'f32[1,24,128]{2,1,0:T(8,128)}', space=vmem, size = 0x3000, scoped, tag = 'scratch operand']
  %s0 = inlined_call_operand.vmem [shape: f32[2,24,128], index: 0, kind: input, shape index: {}]
  %s1 = inlined_call_operand.vmem [shape: bf16[3,128,768], index: 1, kind: input, shape index: {}]
  %s2 = inlined_call_operand.vmem [shape: bf16[3,256,128], index: 2, kind: input, shape index: {}]
  %s3 = inlined_call_operand.vmem [shape: f32[3,1,1408], index: 3, kind: input, shape index: {}]
  %s4 = inlined_call_operand.vmem [shape: bf16[128,128], index: 4, kind: input, shape index: {}]
  %s5 = inlined_call_operand.vmem [shape: f32[1,384], index: 5, kind: input, shape index: {}]
  %s6 = inlined_call_operand.hbm [shape: f32[2,1,128], index: 6, kind: output, shape index: {}]
  %s7 = sld [smem:[#allocation0]]
  $region65: #{vit_forward.3} parent=0
    _
  %s9 = ssub.s32 1, %s7
  %s10 = scalar_select 0, %s9, %s7
  $region1: #{vit_forward.3} parent=0
    #allocation3 [shape = 'u8[1024]{0}', space=vmem, size = 0x400, scoped, tag = 'output window, operand 0']
    #allocation4 [shape = 's32[2]{0}', space=sflag, size = 0x8, scoped, tag = 'scoped memory for vit_forward.3']
    %11 = vsyncpa [#allocation4], 0
    %s12 = scalar_lea.sflag [#allocation4], 1
    %13 = vsyncpa %s12, 0
    loop: start=0, step=1, limit=8
    $region2: #{vit_forward.3} parent=1 // loop_pre_header
      _
    $region3: #{vit_forward.3} parent=1 // loop_header
      %s15 = sphi 0, %s19
      %p16 = scmp.ge.s32.totalorder %s15, 8
      %s22 = sphi 0, %s34
      %s23 = sphi 0, %s30
      %s24 = sphi 0, %s22
      %s25 = sphi 0, %s23
      %s26 = sphi 0, %s24
      %s27 = sphi 0, %s25
      %s37 = sphi 0, %s39
      %s40 = sphi 0, %s37
      %s41 = sphi 0, %s40
      %s57 = sphi 0, %s41
      %s63 = sphi 0, %s65
      %s66 = sphi 0, %s63
      %s67 = sphi 0, %s66
      %s83 = sphi 0, %s67
      %s89 = sphi 0, %s91
      %s92 = sphi 0, %s89
      %s93 = sphi 0, %s92
      %s109 = sphi 0, %s93
      %s115 = sphi 0, %s117
      %s118 = sphi 0, %s115
      %s119 = sphi 0, %s118
      %s135 = sphi 0, %s119
      %s139 = sphi 0, %s139
      %s141 = sphi 0, %s139
      %s142 = sphi 0, %s141
      %s156 = sphi 0, %s142
      %s160 = sphi 0, %s160
      %s162 = sphi 0, %s160
      %s163 = sphi 0, %s162
      %s177 = sphi 0, %s163
      %s183 = sphi 0, %s185
      %s186 = sphi 0, %s183
      %s187 = sphi 0, %s186
      %s203 = sphi 0, %s187
    $region4: #{vit_forward.3} parent=1 // loop_header_branch
      %18 = sbr.rel (%p16) target = $region8
    $region5: #{vit_forward.3} parent=1 // loop_body
      %s20 = ssub.s32 %s15, 1
      %s21 = ssub.s32 %s15, 2
      %s28 = sadd.s32 1, %s23
      %p29 = scmp.ge.s32.totalorder %s28, 3
      %s30 = scalar_select %p29, 0, %s28
      %s31 = sadd.s32 1, %s22
      %s32 = scalar_select %p29, %s31, %s22
      %p33 = scmp.ge.s32.totalorder %s32, 2
      %s34 = scalar_select %p33, 0, %s32
      %s35 = ssub.s32 %s22, %s34
      %p36 = scmp.eq.s32.totalorder %s35, 0
      %s38 = sadd.s32 %s37, 1
      %s39 = scalar_select %p36, %s37, %s38
      %p42 = pneg %p36
      %p43 = scmp.eq.s32.totalorder %s15, 5
      %p44 = por %p42, %p43
      %p45 = scmp.ne.s32.totalorder %s37, %s40
      %p46 = scmp.eq.s32.totalorder %s15, 0
      %p47 = por %p45, %p46
      %p48 = scmp.ne.s32.totalorder %s37, %s40
      %p49 = scmp.eq.s32.totalorder %s20, 5
      %p50 = por %p48, %p49
      %p51 = scmp.ne.s32.totalorder %s40, %s41
      %p52 = scmp.eq.s32.totalorder %s20, 0
      %p53 = por %p51, %p52
      %p54 = scmp.ne.s32.totalorder %s40, %s41
      %p55 = scmp.eq.s32.totalorder %s21, 5
      %p56 = por %p54, %p55
      %p58 = scmp.ne.s32.totalorder %s41, %s57
      %p59 = scmp.eq.s32.totalorder %s21, 0
      %p60 = por %p58, %p59
      %s61 = ssub.s32 %s23, %s30
      %p62 = scmp.eq.s32.totalorder %s61, 0
      %s64 = sadd.s32 %s63, 1
      %s65 = scalar_select %p62, %s63, %s64
      %p68 = pneg %p62
      %p69 = scmp.eq.s32.totalorder %s15, 5
      %p70 = por %p68, %p69
      %p71 = scmp.ne.s32.totalorder %s63, %s66
      %p72 = scmp.eq.s32.totalorder %s15, 0
      %p73 = por %p71, %p72
      %p74 = scmp.ne.s32.totalorder %s63, %s66
      %p75 = scmp.eq.s32.totalorder %s20, 5
      %p76 = por %p74, %p75
      %p77 = scmp.ne.s32.totalorder %s66, %s67
      %p78 = scmp.eq.s32.totalorder %s20, 0
      %p79 = por %p77, %p78
      %p80 = scmp.ne.s32.totalorder %s66, %s67
      %p81 = scmp.eq.s32.totalorder %s21, 5
      %p82 = por %p80, %p81
      %p84 = scmp.ne.s32.totalorder %s67, %s83
      %p85 = scmp.eq.s32.totalorder %s21, 0
      %p86 = por %p84, %p85
      %s87 = ssub.s32 %s23, %s30
      %p88 = scmp.eq.s32.totalorder %s87, 0
      %s90 = sadd.s32 %s89, 1
      %s91 = scalar_select %p88, %s89, %s90
      %p94 = pneg %p88
      %p95 = scmp.eq.s32.totalorder %s15, 5
      %p96 = por %p94, %p95
      %p97 = scmp.ne.s32.totalorder %s89, %s92
      %p98 = scmp.eq.s32.totalorder %s15, 0
      %p99 = por %p97, %p98
      %p100 = scmp.ne.s32.totalorder %s89, %s92
      %p101 = scmp.eq.s32.totalorder %s20, 5
      %p102 = por %p100, %p101
      %p103 = scmp.ne.s32.totalorder %s92, %s93
      %p104 = scmp.eq.s32.totalorder %s20, 0
      %p105 = por %p103, %p104
      %p106 = scmp.ne.s32.totalorder %s92, %s93
      %p107 = scmp.eq.s32.totalorder %s21, 5
      %p108 = por %p106, %p107
      %p110 = scmp.ne.s32.totalorder %s93, %s109
      %p111 = scmp.eq.s32.totalorder %s21, 0
      %p112 = por %p110, %p111
      %s113 = ssub.s32 %s23, %s30
      %p114 = scmp.eq.s32.totalorder %s113, 0
      %s116 = sadd.s32 %s115, 1
      %s117 = scalar_select %p114, %s115, %s116
      %p120 = pneg %p114
      %p121 = scmp.eq.s32.totalorder %s15, 5
      %p122 = por %p120, %p121
      %p123 = scmp.ne.s32.totalorder %s115, %s118
      %p124 = scmp.eq.s32.totalorder %s15, 0
      %p125 = por %p123, %p124
      %p126 = scmp.ne.s32.totalorder %s115, %s118
      %p127 = scmp.eq.s32.totalorder %s20, 5
      %p128 = por %p126, %p127
      %p129 = scmp.ne.s32.totalorder %s118, %s119
      %p130 = scmp.eq.s32.totalorder %s20, 0
      %p131 = por %p129, %p130
      %p132 = scmp.ne.s32.totalorder %s118, %s119
      %p133 = scmp.eq.s32.totalorder %s21, 5
      %p134 = por %p132, %p133
      %p136 = scmp.ne.s32.totalorder %s119, %s135
      %p137 = scmp.eq.s32.totalorder %s21, 0
      %p138 = por %p136, %p137
      %s140 = sadd.s32 %s139, 1
      %p143 = scmp.eq.s32.totalorder %s15, 5
      %p144 = scmp.ne.s32.totalorder %s139, %s141
      %p145 = scmp.eq.s32.totalorder %s15, 0
      %p146 = por %p144, %p145
      %p147 = scmp.ne.s32.totalorder %s139, %s141
      %p148 = scmp.eq.s32.totalorder %s20, 5
      %p149 = por %p147, %p148
      %p150 = scmp.ne.s32.totalorder %s141, %s142
      %p151 = scmp.eq.s32.totalorder %s20, 0
      %p152 = por %p150, %p151
      %p153 = scmp.ne.s32.totalorder %s141, %s142
      %p154 = scmp.eq.s32.totalorder %s21, 5
      %p155 = por %p153, %p154
      %p157 = scmp.ne.s32.totalorder %s142, %s156
      %p158 = scmp.eq.s32.totalorder %s21, 0
      %p159 = por %p157, %p158
      %s161 = sadd.s32 %s160, 1
      %p164 = scmp.eq.s32.totalorder %s15, 5
      %p165 = scmp.ne.s32.totalorder %s160, %s162
      %p166 = scmp.eq.s32.totalorder %s15, 0
      %p167 = por %p165, %p166
      %p168 = scmp.ne.s32.totalorder %s160, %s162
      %p169 = scmp.eq.s32.totalorder %s20, 5
      %p170 = por %p168, %p169
      %p171 = scmp.ne.s32.totalorder %s162, %s163
      %p172 = scmp.eq.s32.totalorder %s20, 0
      %p173 = por %p171, %p172
      %p174 = scmp.ne.s32.totalorder %s162, %s163
      %p175 = scmp.eq.s32.totalorder %s21, 5
      %p176 = por %p174, %p175
      %p178 = scmp.ne.s32.totalorder %s163, %s177
      %p179 = scmp.eq.s32.totalorder %s21, 0
      %p180 = por %p178, %p179
      %s181 = ssub.s32 %s22, %s34
      %p182 = scmp.eq.s32.totalorder %s181, 0
      %s184 = sadd.s32 %s183, 1
      %s185 = scalar_select %p182, %s183, %s184
      %p188 = pneg %p182
      %p189 = scmp.eq.s32.totalorder %s15, 5
      %p190 = por %p188, %p189
      %p191 = scmp.ne.s32.totalorder %s183, %s186
      %p192 = scmp.eq.s32.totalorder %s15, 0
      %p193 = por %p191, %p192
      %p194 = scmp.ne.s32.totalorder %s183, %s186
      %p195 = scmp.eq.s32.totalorder %s20, 5
      %p196 = por %p194, %p195
      %p197 = scmp.ne.s32.totalorder %s186, %s187
      %p198 = scmp.eq.s32.totalorder %s20, 0
      %p199 = por %p197, %p198
      %p200 = scmp.ne.s32.totalorder %s186, %s187
      %p201 = scmp.eq.s32.totalorder %s21, 5
      %p202 = por %p200, %p201
      %p204 = scmp.ne.s32.totalorder %s187, %s203
      %p205 = scmp.eq.s32.totalorder %s21, 0
      %p206 = por %p204, %p205
      %p207 = scmp.le.s32.totalorder 1, %s15
      %p208 = scmp.lt.s32.totalorder %s15, 7
      %p209 = pnand %p207, %p208
      %p210 = pneg %p209
      // Predicated region
      $region9: #{vit_forward.3} parent=5 // pred_check
        _
      $region10: #{vit_forward.3} parent=5 // pred_check_branch
        %212 = sbr.rel (%p209) target = $region12
      $region11: #{vit_forward.3} parent=5 // pred_region
        %s213 = ssub.s32 %s15, 1
        // Predicated region
        $region13: #{vit_forward.3} parent=11 // pred_check
          %p214 = pneg %p152
        $region14: #{vit_forward.3} parent=11 // pred_check_branch
          %216 = sbr.rel (%p214) target = $region16
        $region15: #{vit_forward.3} parent=11 // pred_region
          _
        $region16: #{vit_forward.3} parent=11 // pred_fallthru
          _
        // Predicated region
        $region17: #{vit_forward.3} parent=11 // pred_check
          %p217 = pneg %p173
        $region18: #{vit_forward.3} parent=11 // pred_check_branch
          %219 = sbr.rel (%p217) target = $region20
        $region19: #{vit_forward.3} parent=11 // pred_region
          _
        $region20: #{vit_forward.3} parent=11 // pred_fallthru
          _
      $region12: #{vit_forward.3} parent=5 // pred_fallthru
        _
      %p220 = scmp.lt.s32.totalorder %s15, 6
      // Predicated region
      $region21: #{vit_forward.3} parent=5 // pred_check
        %p221 = pneg %p220
      $region22: #{vit_forward.3} parent=5 // pred_check_branch
        %223 = sbr.rel (%p221) target = $region24
      $region23: #{vit_forward.3} parent=5 // pred_region
        // Predicated region
        $region25: #{vit_forward.3} parent=23 // pred_check
          %p224 = pneg %p47
        $region26: #{vit_forward.3} parent=23 // pred_check_branch
          %226 = sbr.rel (%p224) target = $region28
        $region27: #{vit_forward.3} parent=23 // pred_region
          %p227 = scmp.lt.s32.totalorder %s22, 1
          %s228 = scalar_select %p227, %s22, 1
          %s229 = smul.addr %s228, 3
          %s230 = smul.addr %s229, 8
          %s231 = scalar_lea.vmem %s0, %s230
        $region28: #{vit_forward.3} parent=23 // pred_fallthru
          _
        // Predicated region
        $region29: #{vit_forward.3} parent=23 // pred_check
          %p232 = pneg %p73
        $region30: #{vit_forward.3} parent=23 // pred_check_branch
          %234 = sbr.rel (%p232) target = $region32
        $region31: #{vit_forward.3} parent=23 // pred_region
          %p235 = scmp.lt.s32.totalorder %s23, 2
          %s236 = scalar_select %p235, %s23, 2
          %s237 = smul.addr %s236, 96
          %s238 = smul.addr %s237, 4
          %s239 = scalar_lea.vmem %s1, %s238
        $region32: #{vit_forward.3} parent=23 // pred_fallthru
          _
        // Predicated region
        $region33: #{vit_forward.3} parent=23 // pred_check
          %p240 = pneg %p99
        $region34: #{vit_forward.3} parent=23 // pred_check_branch
          %242 = sbr.rel (%p240) target = $region36
        $region35: #{vit_forward.3} parent=23 // pred_region
          %p243 = scmp.lt.s32.totalorder %s23, 2
          %s244 = scalar_select %p243, %s23, 2
          %s245 = smul.addr %s244, 32
          %s246 = smul.addr %s245, 4
          %s247 = scalar_lea.vmem %s2, %s246
        $region36: #{vit_forward.3} parent=23 // pred_fallthru
          _
        // Predicated region
        $region37: #{vit_forward.3} parent=23 // pred_check
          %p248 = pneg %p125
        $region38: #{vit_forward.3} parent=23 // pred_check_branch
          %250 = sbr.rel (%p248) target = $region40
        $region39: #{vit_forward.3} parent=23 // pred_region
          %p251 = scmp.lt.s32.totalorder %s23, 2
          %s252 = scalar_select %p251, %s23, 2
          %s253 = smul.addr %s252, 11
          %s254 = scalar_lea.vmem %s3, %s253
        $region40: #{vit_forward.3} parent=23 // pred_fallthru
          _
      $region24: #{vit_forward.3} parent=5 // pred_fallthru
        _
      %p255 = scmp.le.s32.totalorder 1, %s15
      %p256 = scmp.lt.s32.totalorder %s15, 7
      %p257 = pnand %p255, %p256
      %p258 = pneg %p257
      // Predicated region
      $region41: #{vit_forward.3} parent=5 // pred_check
        _
      $region42: #{vit_forward.3} parent=5 // pred_check_branch
        %260 = sbr.rel (%p257) target = $region44
      $region43: #{vit_forward.3} parent=5 // pred_region
        %s261 = ssub.s32 %s15, 1
        %p262 = scmp.lt.s32.totalorder %s24, 1
        %s263 = scalar_select %p262, %s24, 1
        %s264 = smul.addr %s263, 3
        %s265 = smul.addr %s264, 8
        %s266 = scalar_lea.vmem %s0, %s265
        %p267 = pneg %p53
        %p268 = pneg %p50
        %p269 = scmp.lt.s32.totalorder %s25, 2
        %s270 = scalar_select %p269, %s25, 2
        %s271 = smul.addr %s270, 96
        %s272 = smul.addr %s271, 4
        %s273 = scalar_lea.vmem %s1, %s272
        %p274 = pneg %p79
        %p275 = pneg %p76
        %p276 = scmp.lt.s32.totalorder %s25, 2
        %s277 = scalar_select %p276, %s25, 2
        %s278 = smul.addr %s277, 32
        %s279 = smul.addr %s278, 4
        %s280 = scalar_lea.vmem %s2, %s279
        %p281 = pneg %p105
        %p282 = pneg %p102
        %p283 = scmp.lt.s32.totalorder %s25, 2
        %s284 = scalar_select %p283, %s25, 2
        %s285 = smul.addr %s284, 11
        %s286 = scalar_lea.vmem %s3, %s285
        %p287 = pneg %p131
        %p288 = pneg %p128
        %p289 = pneg %p152
        %p290 = pneg %p149
        %p291 = pneg %p173
        %p292 = pneg %p170
        %p293 = pneg %p199
        %p294 = pneg %p196
        %s295 = sand.u32 %s186, 1
        %s296 = scalar_lea.sflag [#allocation4], %s295
        %s297 = sand.u32 %s186, 1
        %s298 = scalar_lea.vmem [#allocation3], %s297
        %p299 = scmp.lt.s32.totalorder %s24, 1
        %s300 = scalar_select %p299, %s24, 1
        %s301 = smul.addr %s300, 3
        %s302 = smul.addr %s301, 8
        %s303 = scalar_lea.vmem %s0, %s302
        %p304 = scmp.lt.s32.totalorder %s25, 2
        %s305 = scalar_select %p304, %s25, 2
        %s306 = smul.addr %s305, 96
        %s307 = smul.addr %s306, 4
        %s308 = scalar_lea.vmem %s1, %s307
        %p309 = scmp.lt.s32.totalorder %s25, 2
        %s310 = scalar_select %p309, %s25, 2
        %s311 = smul.addr %s310, 32
        %s312 = smul.addr %s311, 4
        %s313 = scalar_lea.vmem %s2, %s312
        %p314 = scmp.lt.s32.totalorder %s25, 2
        %s315 = scalar_select %p314, %s25, 2
        %s316 = smul.addr %s315, 11
        %s317 = scalar_lea.vmem %s3, %s316
        %p319 = scmp.eq.s32.totalorder %s25, 0
        // Predicated region
        $region45: #{vit_forward.3} parent=43 // pred_check
          %p320 = pneg %p319
        $region46: #{vit_forward.3} parent=43 // pred_check_branch
          %322 = sbr.rel (%p320) target = $region48
        $region47: #{vit_forward.3} parent=43 // pred_region
          %v323 = vld [vmem:[%s303] sm:$0xff]
          %v324 = vld [vmem:[%s303 + $0x8] sm:$0xff]
          %v325 = vld [vmem:[%s303 + $0x10] sm:$0xff]
          %326 = vst [vmem:[#allocation2] sm:$0xff] %v323
          %327 = vst [vmem:[#allocation2 + $0x8] sm:$0xff] %v324
          %328 = vst [vmem:[#allocation2 + $0x10] sm:$0xff] %v325
        $region48: #{vit_forward.3} parent=43 // pred_fallthru
          _
        %v329 = vld [vmem:[#allocation2] sm:$0xff]
        %v330 = vld [vmem:[#allocation2 + $0x8] sm:$0xff]
        %v331 = vld [vmem:[#allocation2 + $0x10] sm:$0xff]
        %v332 = vld [vmem:[%s317] sm:$0x1]
        %v333 = vld [vmem:[%s317 + $0x1] sm:$0x1]
        %v334 = vld [vmem:[%s317 + $0x2] sm:$0x7]
        %v335 = vld [vmem:[%s317 + $0x5] sm:$0x1]
        %v336 = vld [vmem:[%s317 + $0x6] sm:$0x1]
        %v337 = vld [vmem:[%s317 + $0x7] sm:$0x1]
        %v338 = vld [vmem:[%s317 + $0x8] sm:$0x3]
        %v339 = vld [vmem:[%s317 + $0xa] sm:$0x1]
        %340 = vadd.xlane.f32.xlu0 %v329
        %v341 = vpop.xlane.xlu0 %340
        %342 = vadd.xlane.f32.xlu0 %v330
        %v343 = vpop.xlane.xlu0 %342
        %344 = vadd.xlane.f32.xlu0 %v331
        %v345 = vpop.xlane.xlu0 %344
        %v346 = vrcp.pop 128.0
        %v347 = vmul.f32 %v341, %v346
        %v348 = vmul.f32 %v343, %v346
        %v349 = vmul.f32 %v345, %v346
        %v350 = vsub.f32 %v329, %v347
        %v351 = vsub.f32 %v330, %v348
        %v352 = vsub.f32 %v331, %v349
        %v353 = vmul.f32 %v350, %v350
        %v354 = vmul.f32 %v351, %v351
        %v355 = vmul.f32 %v352, %v352
        %356 = vadd.xlane.f32.xlu0 %v353
        %v357 = vpop.xlane.xlu0 %356
        %358 = vadd.xlane.f32.xlu0 %v354
        %v359 = vpop.xlane.xlu0 %358
        %360 = vadd.xlane.f32.xlu0 %v355
        %v361 = vpop.xlane.xlu0 %360
        %v362 = vmul.f32 %v357, %v346
        %v363 = vmul.f32 %v359, %v346
        %v364 = vmul.f32 %v361, %v346
        %v365 = vadd.f32 %v362, 1e-05
        %v366 = vadd.f32 %v363, 1e-05
        %v367 = vadd.f32 %v364, 1e-05
        %v368 = vrsqrt.pop %v365
        %v369 = vrsqrt.pop %v366
        %v370 = vrsqrt.pop %v367
        %v371 = vmul.f32 %v350, %v368
        %v372 = vmul.f32 %v351, %v369
        %v373 = vmul.f32 %v352, %v370
        %v375 = vlaneseq
        %v376 = vshrl.u32 %v375, 7
        %v377 = vsub.s32 0, %v376
        %v378 = vrot.slane %v332, %v377
        %v380 = vmul.f32 %v371, %v378
        %v381 = vmul.f32 %v372, %v378
        %v382 = vmul.f32 %v373, %v378
        %v384 = vlaneseq
        %v385 = vshrl.u32 %v384, 7
        %v386 = vsub.s32 0, %v385
        %v387 = vrot.slane %v333, %v386
        %v389 = vadd.f32 %v380, %v387
        %v390 = vadd.f32 %v381, %v387
        %v391 = vadd.f32 %v382, %v387
        %v392 = vld [vmem:[%s308] sm:$0xff]
        %v393 = vld [vmem:[%s308 + $0x8] sm:$0xf]
        %v394 = vld [vmem:[%s308 + $0x18] sm:$0xff]
        %v395 = vld [vmem:[%s308 + $0x20] sm:$0xf]
        %v396 = vld [vmem:[%s308 + $0x30] sm:$0xff]
        %v397 = vld [vmem:[%s308 + $0x38] sm:$0xf]
        %v398 = vld [vmem:[%s308 + $0x48] sm:$0xff]
        %v399 = vld [vmem:[%s308 + $0x50] sm:$0xf]
        %v400 = vld [vmem:[%s308 + $0x60] sm:$0xff]
        %v401 = vld [vmem:[%s308 + $0x68] sm:$0xf]
        %v402 = vld [vmem:[%s308 + $0x78] sm:$0xff]
        %v403 = vld [vmem:[%s308 + $0x80] sm:$0xf]
        %v404 = vld [vmem:[%s308 + $0x90] sm:$0xff]
        %v405 = vld [vmem:[%s308 + $0x98] sm:$0xf]
        %v406 = vld [vmem:[%s308 + $0xa8] sm:$0xff]
        %v407 = vld [vmem:[%s308 + $0xb0] sm:$0xf]
        %v408 = vld [vmem:[%s308 + $0xc0] sm:$0xff]
        %v409 = vld [vmem:[%s308 + $0xc8] sm:$0xf]
        %v410 = vld [vmem:[%s308 + $0xd8] sm:$0xff]
        %v411 = vld [vmem:[%s308 + $0xe0] sm:$0xf]
        %v412 = vld [vmem:[%s308 + $0xf0] sm:$0xff]
        %v413 = vld [vmem:[%s308 + $0xf8] sm:$0xf]
        %v414 = vld [vmem:[%s308 + $0x108] sm:$0xff]
        %v415 = vld [vmem:[%s308 + $0x110] sm:$0xf]
        %v416 = vld [vmem:[%s308 + $0x120] sm:$0xff]
        %v417 = vld [vmem:[%s308 + $0x128] sm:$0xf]
        %v418 = vld [vmem:[%s308 + $0x138] sm:$0xff]
        %v419 = vld [vmem:[%s308 + $0x140] sm:$0xf]
        %v420 = vld [vmem:[%s308 + $0x150] sm:$0xff]
        %v421 = vld [vmem:[%s308 + $0x158] sm:$0xf]
        %v422 = vld [vmem:[%s308 + $0x168] sm:$0xff]
        %v423 = vld [vmem:[%s308 + $0x170] sm:$0xf]
        %v424 = vpack.c.bf16 %v390, %v389
        %v425 = vpack.c.bf16 %v391, %v391
        %v427 = vlaneseq
        %v428 = vshrl.u32 %v427, 7
        %v429 = vsub.s32 0, %v428
        %v430 = vrot.slane %v334, %v429
        %v431 = vlaneseq
        %v432 = vshrl.u32 %v431, 7
        %v433 = vsub.s32 1, %v432
        %v434 = vrot.slane %v334, %v433
        %v435 = vlaneseq
        %v436 = vshrl.u32 %v435, 7
        %v437 = vsub.s32 2, %v436
        %v438 = vrot.slane %v334, %v437
        %v474 = vunpack.c.l.b16 %v392
        %v475 = vunpack.c.h.b16 %v392
        %v476 = vunpack.c.l.b16 %v393
        %v477 = vunpack.c.l.b16 %v394
        %v478 = vunpack.c.h.b16 %v394
        %v479 = vunpack.c.l.b16 %v395
        %v480 = vunpack.c.l.b16 %v396
        %v481 = vunpack.c.h.b16 %v396
        %v482 = vunpack.c.l.b16 %v397
        %v483 = vunpack.c.l.b16 %v398
        %v484 = vunpack.c.h.b16 %v398
        %v485 = vunpack.c.l.b16 %v399
        %v486 = vunpack.c.l.b16 %v400
        %v487 = vunpack.c.h.b16 %v400
        %v488 = vunpack.c.l.b16 %v401
        %v489 = vunpack.c.l.b16 %v402
        %v490 = vunpack.c.h.b16 %v402
        %v491 = vunpack.c.l.b16 %v403
        %v492 = vunpack.c.l.b16 %v404
        %v493 = vunpack.c.h.b16 %v404
        %v494 = vunpack.c.l.b16 %v405
        %v495 = vunpack.c.l.b16 %v406
        %v496 = vunpack.c.h.b16 %v406
        %v497 = vunpack.c.l.b16 %v407
        %v498 = vunpack.c.l.b16 %v408
        %v499 = vunpack.c.h.b16 %v408
        %v500 = vunpack.c.l.b16 %v409
        %v501 = vunpack.c.l.b16 %v410
        %v502 = vunpack.c.h.b16 %v410
        %v503 = vunpack.c.l.b16 %v411
        %v504 = vunpack.c.l.b16 %v412
        %v505 = vunpack.c.h.b16 %v412
        %v506 = vunpack.c.l.b16 %v413
        %v507 = vunpack.c.l.b16 %v414
        %v508 = vunpack.c.h.b16 %v414
        %v509 = vunpack.c.l.b16 %v415
        %v510 = vunpack.c.l.b16 %v416
        %v511 = vunpack.c.h.b16 %v416
        %v512 = vunpack.c.l.b16 %v417
        %v513 = vunpack.c.l.b16 %v418
        %v514 = vunpack.c.h.b16 %v418
        %v515 = vunpack.c.l.b16 %v419
        %v516 = vunpack.c.l.b16 %v420
        %v517 = vunpack.c.h.b16 %v420
        %v518 = vunpack.c.l.b16 %v421
        %v519 = vunpack.c.l.b16 %v422
        %v520 = vunpack.c.h.b16 %v422
        %v521 = vunpack.c.l.b16 %v423
        %v522 = vpack.c.b16 %v477, %v474
        %v523 = vpack.c.b16 %v478, %v475
        %v524 = vpack.c.b16 %v479, %v476
        %v525 = vpack.c.b16 %v483, %v480
        %v526 = vpack.c.b16 %v484, %v481
        %v527 = vpack.c.b16 %v485, %v482
        %v528 = vpack.c.b16 %v489, %v486
        %v529 = vpack.c.b16 %v490, %v487
        %v530 = vpack.c.b16 %v491, %v488
        %v531 = vpack.c.b16 %v495, %v492
        %v532 = vpack.c.b16 %v496, %v493
        %v533 = vpack.c.b16 %v497, %v494
        %v534 = vpack.c.b16 %v501, %v498
        %v535 = vpack.c.b16 %v502, %v499
        %v536 = vpack.c.b16 %v503, %v500
        %v537 = vpack.c.b16 %v507, %v504
        %v538 = vpack.c.b16 %v508, %v505
        %v539 = vpack.c.b16 %v509, %v506
        %v540 = vpack.c.b16 %v513, %v510
        %v541 = vpack.c.b16 %v514, %v511
        %v542 = vpack.c.b16 %v515, %v512
        %v543 = vpack.c.b16 %v519, %v516
        %v544 = vpack.c.b16 %v520, %v517
        %v545 = vpack.c.b16 %v521, %v518
        %570 = vmatprep.subr.bf16.mxu0 %v544
        %571 = vmatpush1.bf16.msra.mxu0 %v543
        %572 = vmatprep.subr.bf16.mxu0 %v541
        %573 = vmatpush1.bf16.msra.mxu0 %v540
        %574 = vmatprep.subr.bf16.mxu0 %v538
        %575 = vmatpush1.bf16.msra.mxu0 %v537
        %576 = vmatprep.subr.bf16.mxu0 %v535
        %577 = vmatpush1.bf16.msra.mxu0 %v534
        %578 = vmatprep.subr.bf16.mxu0 %v532
        %579 = vmatpush1.bf16.msra.mxu0 %v531
        %580 = vmatprep.subr.bf16.mxu0 %v529
        %581 = vmatpush1.bf16.msra.mxu0 %v528
        %582 = vmatprep.subr.bf16.mxu0 %v526
        %583 = vmatpush1.bf16.msra.mxu0 %v525
        %584 = vmatprep.subr.bf16.mxu0 %v523
        %585 = vmatpush1.bf16.msra.mxu0 %v522
        %586 = vmatprep.subr.bf16.mxu0 0
        %587 = vmatpush2.bf16.msra.mxu0 0
        %588 = vmatprep.subr.bf16.mxu0 0
        %589 = vmatpush2.bf16.msra.mxu0 0
        %590 = vmatprep.subr.bf16.mxu0 0
        %591 = vmatpush2.bf16.msra.mxu0 0
        %592 = vmatprep.subr.bf16.mxu0 0
        %593 = vmatpush2.bf16.msra.mxu0 0
        %594 = vmatprep.subr.bf16.mxu0 0
        %595 = vmatpush2.bf16.msra.mxu0 0
        %596 = vmatprep.subr.bf16.mxu0 0
        %597 = vmatpush2.bf16.msra.mxu0 0
        %598 = vmatprep.subr.bf16.mxu0 0
        %599 = vmatpush2.bf16.msra.mxu0 0
        %600 = vmatprep.subr.bf16.mxu0 0
        %601 = vmatpush2.bf16.msra.mxu0 0
        %602 = vmatprep.mubr.bf16.mxu0 0
        %603 = vmatmul.mubr.bf16.gmra.mxu0 %v424
        %v604 = vpop.f32.mrf.mxu0
        %v605 = vadd.f32 %v430, %v604
        %v606 = vpop.f32.mrf.mxu0
        %v607 = vadd.f32 %v434, %v606
        %v608 = vpop.f32.mrf.mxu0
        %v609 = vadd.f32 %v430, %v608
        %v610 = vpop.f32.mrf.mxu0
        %v611 = vadd.f32 %v434, %v610
        %612 = vmatprep.mubr.bf16.mxu0 0
        %613 = vmatmul.mubr.bf16.gmra.mxu0 %v425
        %v614 = vpop.f32.mrf.mxu0
        %v615 = vadd.f32 %v430, %v614
        %v616 = vpop.f32.mrf.mxu0
        %v617 = vadd.f32 %v434, %v616
        %v618 = vpop.f32.mrf.mxu0
        %v619 = vpop.f32.mrf.mxu0
        %620 = vdwg.mxu0
        %621 = vmatprep.subr.bf16.mxu0 0
        %622 = vmatpush1.bf16.msra.mxu0 %v545
        %623 = vmatprep.subr.bf16.mxu0 0
        %624 = vmatpush1.bf16.msra.mxu0 %v542
        %625 = vmatprep.subr.bf16.mxu0 0
        %626 = vmatpush1.bf16.msra.mxu0 %v539
        %627 = vmatprep.subr.bf16.mxu0 0
        %628 = vmatpush1.bf16.msra.mxu0 %v536
        %629 = vmatprep.subr.bf16.mxu0 0
        %630 = vmatpush1.bf16.msra.mxu0 %v533
        %631 = vmatprep.subr.bf16.mxu0 0
        %632 = vmatpush1.bf16.msra.mxu0 %v530
        %633 = vmatprep.subr.bf16.mxu0 0
        %634 = vmatpush1.bf16.msra.mxu0 %v527
        %635 = vmatprep.subr.bf16.mxu0 0
        %636 = vmatpush1.bf16.msra.mxu0 %v524
        %637 = vmatprep.subr.bf16.mxu0 0
        %638 = vmatpush2.bf16.msra.mxu0 0
        %639 = vmatprep.subr.bf16.mxu0 0
        %640 = vmatpush2.bf16.msra.mxu0 0
        %641 = vmatprep.subr.bf16.mxu0 0
        %642 = vmatpush2.bf16.msra.mxu0 0
        %643 = vmatprep.subr.bf16.mxu0 0
        %644 = vmatpush2.bf16.msra.mxu0 0
        %645 = vmatprep.subr.bf16.mxu0 0
        %646 = vmatpush2.bf16.msra.mxu0 0
        %647 = vmatprep.subr.bf16.mxu0 0
        %648 = vmatpush2.bf16.msra.mxu0 0
        %649 = vmatprep.subr.bf16.mxu0 0
        %650 = vmatpush2.bf16.msra.mxu0 0
        %651 = vmatprep.subr.bf16.mxu0 0
        %652 = vmatpush2.bf16.msra.mxu0 0
        %653 = vmatprep.mubr.bf16.mxu0 0
        %654 = vmatmul.mubr.bf16.gmra.mxu0 %v424
        %v655 = vpop.f32.mrf.mxu0
        %v656 = vadd.f32 %v438, %v655
        %v657 = vpop.f32.mrf.mxu0
        %v658 = vpop.f32.mrf.mxu0
        %v659 = vadd.f32 %v438, %v658
        %v660 = vpop.f32.mrf.mxu0
        %661 = vmatprep.mubr.bf16.mxu0 0
        %662 = vmatmul.mubr.bf16.gmra.mxu0 %v425
        %v663 = vpop.f32.mrf.mxu0
        %v664 = vadd.f32 %v438, %v663
        %v665 = vpop.f32.mrf.mxu0
        %v666 = vpop.f32.mrf.mxu0
        %v667 = vpop.f32.mrf.mxu0
        %668 = vdwg.mxu0
        %v669 = vlaneseq
        %v670 = vand.u32 %v669, 127
        %vm671 = vcmp.eq.s32.totalorder %v670, 0
        %vm672 = vcmp.ge.s32.totalorder %v670, 8
        %vm673 = vcmp.lt.s32.totalorder %v670, 24
        %vm674 = vmand %vm672, %vm673
        %vm675 = vmor %vm671, %vm674
        %v676 = vsel %vm675, 0.0, -1e+30
        %v677 = vpack.c.bf16 %v609, %v605
        %v678 = vpack.c.bf16 %v615, %v615
        %v679 = vpack.c.bf16 %v611, %v607
        %v680 = vpack.c.bf16 %v617, %v617
        %v681 = vpack.c.bf16 %v659, %v656
        %v682 = vpack.c.bf16 %v664, %v664
        %vm683 = vcmask 261120
        %v685 = vsel %vm683, %v677, 0
        %v688 = vsel %vm683, %v678, 0
        %v691 = vsel %vm683, %v679, 0
        %v694 = vsel %vm683, %v680, 0
        %696 = vmatprep.subr.bf16.mxu0 0
        %697 = vmatpush1.bf16.xpose.msra.mxu0 0
        %698 = vmatprep.subr.bf16.mxu0 0
        %699 = vmatpush1.bf16.xpose.msra.mxu0 0
        %700 = vmatprep.subr.bf16.mxu0 0
        %701 = vmatpush1.bf16.xpose.msra.mxu0 0
        %702 = vmatprep.subr.bf16.mxu0 0
        %703 = vmatpush1.bf16.xpose.msra.mxu0 0
        %704 = vmatprep.subr.bf16.mxu0 0
        %705 = vmatpush1.bf16.xpose.msra.mxu0 0
        %706 = vmatprep.subr.bf16.mxu0 0
        %707 = vmatpush1.bf16.xpose.msra.mxu0 0
        %708 = vmatprep.subr.bf16.mxu0 0
        %709 = vmatpush1.bf16.xpose.msra.mxu0 %v694
        %710 = vmatprep.subr.bf16.mxu0 0
        %711 = vmatpush1.bf16.xpose.msra.mxu0 %v691
        %712 = vmatprep.subr.bf16.mxu0 0
        %713 = vmatpush2.bf16.xpose.msra.mxu0 0
        %714 = vmatprep.subr.bf16.mxu0 0
        %715 = vmatpush2.bf16.xpose.msra.mxu0 0
        %716 = vmatprep.subr.bf16.mxu0 0
        %717 = vmatpush2.bf16.xpose.msra.mxu0 0
        %718 = vmatprep.subr.bf16.mxu0 0
        %719 = vmatpush2.bf16.xpose.msra.mxu0 0
        %720 = vmatprep.subr.bf16.mxu0 0
        %721 = vmatpush2.bf16.xpose.msra.mxu0 0
        %722 = vmatprep.subr.bf16.mxu0 0
        %723 = vmatpush2.bf16.xpose.msra.mxu0 0
        %724 = vmatprep.subr.bf16.mxu0 0
        %725 = vmatpush2.bf16.xpose.msra.mxu0 0
        %726 = vmatprep.subr.bf16.mxu0 0
        %727 = vmatpush2.bf16.xpose.msra.mxu0 0
        %728 = vmatprep.mubr.bf16.mxu0 0
        %729 = vmatmul.mubr.bf16.gmra.mxu0 %v685
        %v730 = vpop.f32.mrf.mxu0
        %v731 = vadd.f32 0.0, %v730
        %v732 = vpop.f32.mrf.mxu0
        %v733 = vpop.f32.mrf.mxu0
        %v734 = vadd.f32 0.0, %v733
        %v735 = vpop.f32.mrf.mxu0
        %736 = vmatprep.mubr.bf16.mxu0 0
        %737 = vmatmul.mubr.bf16.gmra.mxu0 %v688
        %v738 = vpop.f32.mrf.mxu0
        %v739 = vadd.f32 0.0, %v738
        %v740 = vpop.f32.mrf.mxu0
        %v741 = vpop.f32.mrf.mxu0
        %v742 = vpop.f32.mrf.mxu0
        %743 = vdwg.mxu0
        %v744 = vmul.f32 %v731, 0.17677669
        %v745 = vmul.f32 %v734, 0.17677669
        %v746 = vmul.f32 %v739, 0.17677669
        %v747 = vadd.f32 %v744, %v676
        %v748 = vadd.f32 %v745, %v676
        %v749 = vadd.f32 %v746, %v676
        %vm750 = vcmask 195584
        %v751 = vsel %vm750, %v747, -inf
        %752 = vmax.xlane.f32.xlu0 %v751
        %v753 = vpop.xlane.xlu0 %752
        %v754 = vsel %vm750, %v748, -inf
        %755 = vmax.xlane.f32.xlu0 %v754
        %v756 = vpop.xlane.xlu0 %755
        %v757 = vsel %vm750, %v749, -inf
        %758 = vmax.xlane.f32.xlu0 %v757
        %v759 = vpop.xlane.xlu0 %758
        %v760 = vsub.f32 %v747, %v753
        %v761 = vsub.f32 %v748, %v756
        %v762 = vsub.f32 %v749, %v759
        %v763 = vmul.f32 %v760, 1.442695
        %v764 = vpow.pop %v763
        %v765 = vmul.f32 %v761, 1.442695
        %v766 = vpow.pop %v765
        %v767 = vmul.f32 %v762, 1.442695
        %v768 = vpow.pop %v767
        %v769 = vsel %vm750, %v764, 0.0
        %770 = vadd.xlane.f32.xlu0 %v769
        %v771 = vpop.xlane.xlu0 %770
        %v772 = vsel %vm750, %v766, 0.0
        %773 = vadd.xlane.f32.xlu0 %v772
        %v774 = vpop.xlane.xlu0 %773
        %v775 = vsel %vm750, %v768, 0.0
        %776 = vadd.xlane.f32.xlu0 %v775
        %v777 = vpop.xlane.xlu0 %776
        %v778 = vrcp.pop %v771
        %v779 = vrcp.pop %v774
        %v780 = vrcp.pop %v777
        %v781 = vmul.f32 %v764, %v778
        %v782 = vmul.f32 %v766, %v779
        %v783 = vmul.f32 %v768, %v780
        %v784 = vpack.c.bf16 %v782, %v781
        %v785 = vpack.c.bf16 %v783, %v783
        %v787 = vsel %vm750, %v784, 0
        %v790 = vsel %vm750, %v785, 0
        %vm792 = vcmask 1043456
        %v794 = vsel %vm792, %v682, 0
        %796 = vmatprep.subr.bf16.mxu0 0
        %797 = vmatpush1.bf16.msra.mxu0 0
        %798 = vmatprep.subr.bf16.mxu0 0
        %799 = vmatpush1.bf16.msra.mxu0 0
        %800 = vmatprep.subr.bf16.mxu0 0
        %801 = vmatpush1.bf16.msra.mxu0 0
        %802 = vmatprep.subr.bf16.mxu0 0
        %803 = vmatpush1.bf16.msra.mxu0 0
        %804 = vmatprep.subr.bf16.mxu0 0
        %805 = vmatpush1.bf16.msra.mxu0 0
        %806 = vmatprep.subr.bf16.mxu0 0
        %807 = vmatpush1.bf16.msra.mxu0 0
        %808 = vmatprep.subr.bf16.mxu0 0
        %809 = vmatpush1.bf16.msra.mxu0 %v794
        %810 = vmatprep.subr.bf16.mxu0 0
        %811 = vmatpush1.bf16.msra.mxu0 %v681
        %812 = vmatprep.subr.bf16.mxu0 0
        %813 = vmatpush2.bf16.msra.mxu0 0
        %814 = vmatprep.subr.bf16.mxu0 0
        %815 = vmatpush2.bf16.msra.mxu0 0
        %816 = vmatprep.subr.bf16.mxu0 0
        %817 = vmatpush2.bf16.msra.mxu0 0
        %818 = vmatprep.subr.bf16.mxu0 0
        %819 = vmatpush2.bf16.msra.mxu0 0
        %820 = vmatprep.subr.bf16.mxu0 0
        %821 = vmatpush2.bf16.msra.mxu0 0
        %822 = vmatprep.subr.bf16.mxu0 0
        %823 = vmatpush2.bf16.msra.mxu0 0
        %824 = vmatprep.subr.bf16.mxu0 0
        %825 = vmatpush2.bf16.msra.mxu0 0
        %826 = vmatprep.subr.bf16.mxu0 0
        %827 = vmatpush2.bf16.msra.mxu0 0
        %828 = vmatprep.mubr.bf16.mxu0 0
        %829 = vmatmul.mubr.bf16.gmra.mxu0 %v787
        %v830 = vpop.f32.mrf.mxu0
        %v831 = vadd.f32 0.0, %v830
        %v832 = vpop.f32.mrf.mxu0
        %v833 = vpop.f32.mrf.mxu0
        %v834 = vadd.f32 0.0, %v833
        %v835 = vpop.f32.mrf.mxu0
        %836 = vmatprep.mubr.bf16.mxu0 0
        %837 = vmatmul.mubr.bf16.gmra.mxu0 %v790
        %v838 = vpop.f32.mrf.mxu0
        %v839 = vadd.f32 0.0, %v838
        %v840 = vpop.f32.mrf.mxu0
        %v841 = vpop.f32.mrf.mxu0
        %v842 = vpop.f32.mrf.mxu0
        %843 = vdwg.mxu0
        %v844 = vld [vmem:[%s308 + $0xc] sm:$0xf]
        %v845 = vld [vmem:[%s308 + $0x24] sm:$0xf]
        %v846 = vld [vmem:[%s308 + $0x3c] sm:$0xf]
        %v847 = vld [vmem:[%s308 + $0x54] sm:$0xf]
        %v848 = vpack.c.bf16 %v834, %v831
        %v849 = vpack.c.bf16 %v839, %v839
        %852 = vrot.lane.b32.xlu0 %v677, 96
        %v853 = vpop.permute.xlu0 %852
        %854 = vrot.lane.b32.xlu0 %v678, 96
        %v855 = vpop.permute.xlu0 %854
        %858 = vrot.lane.b32.xlu0 %v679, 96
        %v859 = vpop.permute.xlu0 %858
        %860 = vrot.lane.b32.xlu0 %v680, 96
        %v861 = vpop.permute.xlu0 %860
        %v863 = vsel %vm683, %v853, 0
        %v866 = vsel %vm683, %v855, 0
        %v869 = vsel %vm683, %v859, 0
        %v872 = vsel %vm683, %v861, 0
        %874 = vmatprep.subr.bf16.mxu0 0
        %875 = vmatpush1.bf16.xpose.msra.mxu0 0
        %876 = vmatprep.subr.bf16.mxu0 0
        %877 = vmatpush1.bf16.xpose.msra.mxu0 0
        %878 = vmatprep.subr.bf16.mxu0 0
        %879 = vmatpush1.bf16.xpose.msra.mxu0 0
        %880 = vmatprep.subr.bf16.mxu0 0
        %881 = vmatpush1.bf16.xpose.msra.mxu0 0
        %882 = vmatprep.subr.bf16.mxu0 0
        %883 = vmatpush1.bf16.xpose.msra.mxu0 0
        %884 = vmatprep.subr.bf16.mxu0 0
        %885 = vmatpush1.bf16.xpose.msra.mxu0 0
        %886 = vmatprep.subr.bf16.mxu0 0
        %887 = vmatpush1.bf16.xpose.msra.mxu0 %v872
        %888 = vmatprep.subr.bf16.mxu0 0
        %889 = vmatpush1.bf16.xpose.msra.mxu0 %v869
        %890 = vmatprep.subr.bf16.mxu0 0
        %891 = vmatpush2.bf16.xpose.msra.mxu0 0
        %892 = vmatprep.subr.bf16.mxu0 0
        %893 = vmatpush2.bf16.xpose.msra.mxu0 0
        %894 = vmatprep.subr.bf16.mxu0 0
        %895 = vmatpush2.bf16.xpose.msra.mxu0 0
        %896 = vmatprep.subr.bf16.mxu0 0
        %897 = vmatpush2.bf16.xpose.msra.mxu0 0
        %898 = vmatprep.subr.bf16.mxu0 0
        %899 = vmatpush2.bf16.xpose.msra.mxu0 0
        %900 = vmatprep.subr.bf16.mxu0 0
        %901 = vmatpush2.bf16.xpose.msra.mxu0 0
        %902 = vmatprep.subr.bf16.mxu0 0
        %903 = vmatpush2.bf16.xpose.msra.mxu0 0
        %904 = vmatprep.subr.bf16.mxu0 0
        %905 = vmatpush2.bf16.xpose.msra.mxu0 0
        %906 = vmatprep.mubr.bf16.mxu0 0
        %907 = vmatmul.mubr.bf16.gmra.mxu0 %v863
        %v908 = vpop.f32.mrf.mxu0
        %v909 = vadd.f32 0.0, %v908
        %v910 = vpop.f32.mrf.mxu0
        %v911 = vpop.f32.mrf.mxu0
        %v912 = vadd.f32 0.0, %v911
        %v913 = vpop.f32.mrf.mxu0
        %914 = vmatprep.mubr.bf16.mxu0 0
        %915 = vmatmul.mubr.bf16.gmra.mxu0 %v866
        %v916 = vpop.f32.mrf.mxu0
        %v917 = vadd.f32 0.0, %v916
        %v918 = vpop.f32.mrf.mxu0
        %v919 = vpop.f32.mrf.mxu0
        %v920 = vpop.f32.mrf.mxu0
        %921 = vdwg.mxu0
        %v922 = vmul.f32 %v909, 0.17677669
        %v923 = vmul.f32 %v912, 0.17677669
        %v924 = vmul.f32 %v917, 0.17677669
        %v925 = vadd.f32 %v922, %v676
        %v926 = vadd.f32 %v923, %v676
        %v927 = vadd.f32 %v924, %v676
        %v928 = vsel %vm750, %v925, -inf
        %929 = vmax.xlane.f32.xlu0 %v928
        %v930 = vpop.xlane.xlu0 %929
        %v931 = vsel %vm750, %v926, -inf
        %932 = vmax.xlane.f32.xlu0 %v931
        %v933 = vpop.xlane.xlu0 %932
        %v934 = vsel %vm750, %v927, -inf
        %935 = vmax.xlane.f32.xlu0 %v934
        %v936 = vpop.xlane.xlu0 %935
        %v937 = vsub.f32 %v925, %v930
        %v938 = vsub.f32 %v926, %v933
        %v939 = vsub.f32 %v927, %v936
        %v940 = vmul.f32 %v937, 1.442695
        %v941 = vpow.pop %v940
        %v942 = vmul.f32 %v938, 1.442695
        %v943 = vpow.pop %v942
        %v944 = vmul.f32 %v939, 1.442695
        %v945 = vpow.pop %v944
        %v946 = vsel %vm750, %v941, 0.0
        %947 = vadd.xlane.f32.xlu0 %v946
        %v948 = vpop.xlane.xlu0 %947
        %v949 = vsel %vm750, %v943, 0.0
        %950 = vadd.xlane.f32.xlu0 %v949
        %v951 = vpop.xlane.xlu0 %950
        %v952 = vsel %vm750, %v945, 0.0
        %953 = vadd.xlane.f32.xlu0 %v952
        %v954 = vpop.xlane.xlu0 %953
        %v955 = vrcp.pop %v948
        %v956 = vrcp.pop %v951
        %v957 = vrcp.pop %v954
        %v958 = vmul.f32 %v941, %v955
        %v959 = vmul.f32 %v943, %v956
        %v960 = vmul.f32 %v945, %v957
        %v961 = vpack.c.bf16 %v959, %v958
        %v962 = vpack.c.bf16 %v960, %v960
        %965 = vrot.lane.b32.xlu0 %v681, 96
        %v966 = vpop.permute.xlu0 %965
        %967 = vrot.lane.b32.xlu0 %v682, 96
        %v968 = vpop.permute.xlu0 %967
        %v971 = vsel %vm750, %v961, 0
        %v974 = vsel %vm750, %v962, 0
        %v977 = vsel %vm792, %v968, 0
        %979 = vmatprep.subr.bf16.mxu0 0
        %980 = vmatpush1.bf16.msra.mxu0 0
        %981 = vmatprep.subr.bf16.mxu0 0
        %982 = vmatpush1.bf16.msra.mxu0 0
        %983 = vmatprep.subr.bf16.mxu0 0
        %984 = vmatpush1.bf16.msra.mxu0 0
        %985 = vmatprep.subr.bf16.mxu0 0
        %986 = vmatpush1.bf16.msra.mxu0 0
        %987 = vmatprep.subr.bf16.mxu0 0
        %988 = vmatpush1.bf16.msra.mxu0 0
        %989 = vmatprep.subr.bf16.mxu0 0
        %990 = vmatpush1.bf16.msra.mxu0 0
        %991 = vmatprep.subr.bf16.mxu0 0
        %992 = vmatpush1.bf16.msra.mxu0 %v977
        %993 = vmatprep.subr.bf16.mxu0 0
        %994 = vmatpush1.bf16.msra.mxu0 %v966
        %995 = vmatprep.subr.bf16.mxu0 0
        %996 = vmatpush2.bf16.msra.mxu0 0
        %997 = vmatprep.subr.bf16.mxu0 0
        %998 = vmatpush2.bf16.msra.mxu0 0
        %999 = vmatprep.subr.bf16.mxu0 0
        %1000 = vmatpush2.bf16.msra.mxu0 0
        %1001 = vmatprep.subr.bf16.mxu0 0
        %1002 = vmatpush2.bf16.msra.mxu0 0
        %1003 = vmatprep.subr.bf16.mxu0 0
        %1004 = vmatpush2.bf16.msra.mxu0 0
        %1005 = vmatprep.subr.bf16.mxu0 0
        %1006 = vmatpush2.bf16.msra.mxu0 0
        %1007 = vmatprep.subr.bf16.mxu0 0
        %1008 = vmatpush2.bf16.msra.mxu0 0
        %1009 = vmatprep.subr.bf16.mxu0 0
        %1010 = vmatpush2.bf16.msra.mxu0 0
        %1011 = vmatprep.mubr.bf16.mxu0 0
        %1012 = vmatmul.mubr.bf16.gmra.mxu0 %v971
        %v1013 = vpop.f32.mrf.mxu0
        %v1014 = vadd.f32 0.0, %v1013
        %v1015 = vpop.f32.mrf.mxu0
        %v1016 = vpop.f32.mrf.mxu0
        %v1017 = vadd.f32 0.0, %v1016
        %v1018 = vpop.f32.mrf.mxu0
        %1019 = vmatprep.mubr.bf16.mxu0 0
        %1020 = vmatmul.mubr.bf16.gmra.mxu0 %v974
        %v1021 = vpop.f32.mrf.mxu0
        %v1022 = vadd.f32 0.0, %v1021
        %v1023 = vpop.f32.mrf.mxu0
        %v1024 = vpop.f32.mrf.mxu0
        %v1025 = vpop.f32.mrf.mxu0
        %1026 = vdwg.mxu0
        %v1027 = vld [vmem:[%s308 + $0x6c] sm:$0xf]
        %v1028 = vld [vmem:[%s308 + $0x84] sm:$0xf]
        %v1029 = vld [vmem:[%s308 + $0x9c] sm:$0xf]
        %v1030 = vld [vmem:[%s308 + $0xb4] sm:$0xf]
        %v1031 = vpack.c.bf16 %v1017, %v1014
        %v1032 = vpack.c.bf16 %v1022, %v1022
        %v1037 = vunpack.c.l.b16 %v1027
        %v1038 = vunpack.c.l.b16 %v1028
        %v1039 = vunpack.c.l.b16 %v1029
        %v1040 = vunpack.c.l.b16 %v1030
        %v1041 = vpack.c.b16 %v1038, %v1037
        %v1042 = vpack.c.b16 %v1040, %v1039
        %v1046 = vsel %vm683, %v1031, 0
        %v1049 = vsel %vm683, %v1032, 0
        %1051 = vmatprep.subr.bf16.mxu0 0
        %1052 = vmatpush1.bf16.msra.mxu0 0
        %1053 = vmatprep.subr.bf16.mxu0 0
        %1054 = vmatpush1.bf16.msra.mxu0 0
        %1055 = vmatprep.subr.bf16.mxu0 0
        %1056 = vmatpush1.bf16.msra.mxu0 0
        %1057 = vmatprep.subr.bf16.mxu0 0
        %1058 = vmatpush1.bf16.msra.mxu0 0
        %1059 = vmatprep.subr.bf16.mxu0 0
        %1060 = vmatpush1.bf16.msra.mxu0 0
        %1061 = vmatprep.subr.bf16.mxu0 0
        %1062 = vmatpush1.bf16.msra.mxu0 0
        %1063 = vmatprep.subr.bf16.mxu0 0
        %1064 = vmatpush1.bf16.msra.mxu0 %v1042
        %1065 = vmatprep.subr.bf16.mxu0 0
        %1066 = vmatpush1.bf16.msra.mxu0 %v1041
        %1067 = vmatprep.subr.bf16.mxu0 0
        %1068 = vmatpush2.bf16.msra.mxu0 0
        %1069 = vmatprep.subr.bf16.mxu0 0
        %1070 = vmatpush2.bf16.msra.mxu0 0
        %1071 = vmatprep.subr.bf16.mxu0 0
        %1072 = vmatpush2.bf16.msra.mxu0 0
        %1073 = vmatprep.subr.bf16.mxu0 0
        %1074 = vmatpush2.bf16.msra.mxu0 0
        %1075 = vmatprep.subr.bf16.mxu0 0
        %1076 = vmatpush2.bf16.msra.mxu0 0
        %1077 = vmatprep.subr.bf16.mxu0 0
        %1078 = vmatpush2.bf16.msra.mxu0 0
        %1079 = vmatprep.subr.bf16.mxu0 0
        %1080 = vmatpush2.bf16.msra.mxu0 0
        %1081 = vmatprep.subr.bf16.mxu0 0
        %1082 = vmatpush2.bf16.msra.mxu0 0
        %1083 = vmatprep.mubr.bf16.mxu0 0
        %1084 = vmatmul.mubr.bf16.gmra.mxu0 %v1046
        %v1085 = vpop.f32.mrf.mxu0
        %v1086 = vadd.f32 0.0, %v1085
        %v1087 = vpop.f32.mrf.mxu0
        %v1088 = vpop.f32.mrf.mxu0
        %v1089 = vadd.f32 0.0, %v1088
        %v1090 = vpop.f32.mrf.mxu0
        %1091 = vmatprep.mubr.bf16.mxu0 0
        %1092 = vmatmul.mubr.bf16.gmra.mxu0 %v1049
        %v1093 = vpop.f32.mrf.mxu0
        %v1094 = vadd.f32 0.0, %v1093
        %v1095 = vpop.f32.mrf.mxu0
        %v1096 = vpop.f32.mrf.mxu0
        %v1097 = vpop.f32.mrf.mxu0
        %1098 = vdwg.mxu0
        %v1103 = vunpack.c.l.b16 %v844
        %v1104 = vunpack.c.l.b16 %v845
        %v1105 = vunpack.c.l.b16 %v846
        %v1106 = vunpack.c.l.b16 %v847
        %v1107 = vpack.c.b16 %v1104, %v1103
        %v1108 = vpack.c.b16 %v1106, %v1105
        %v1112 = vsel %vm683, %v848, 0
        %v1115 = vsel %vm683, %v849, 0
        %1117 = vmatprep.subr.bf16.mxu0 0
        %1118 = vmatpush1.bf16.msra.mxu0 0
        %1119 = vmatprep.subr.bf16.mxu0 0
        %1120 = vmatpush1.bf16.msra.mxu0 0
        %1121 = vmatprep.subr.bf16.mxu0 0
        %1122 = vmatpush1.bf16.msra.mxu0 0
        %1123 = vmatprep.subr.bf16.mxu0 0
        %1124 = vmatpush1.bf16.msra.mxu0 0
        %1125 = vmatprep.subr.bf16.mxu0 0
        %1126 = vmatpush1.bf16.msra.mxu0 0
        %1127 = vmatprep.subr.bf16.mxu0 0
        %1128 = vmatpush1.bf16.msra.mxu0 0
        %1129 = vmatprep.subr.bf16.mxu0 0
        %1130 = vmatpush1.bf16.msra.mxu0 %v1108
        %1131 = vmatprep.subr.bf16.mxu0 0
        %1132 = vmatpush1.bf16.msra.mxu0 %v1107
        %1133 = vmatprep.subr.bf16.mxu0 0
        %1134 = vmatpush2.bf16.msra.mxu0 0
        %1135 = vmatprep.subr.bf16.mxu0 0
        %1136 = vmatpush2.bf16.msra.mxu0 0
        %1137 = vmatprep.subr.bf16.mxu0 0
        %1138 = vmatpush2.bf16.msra.mxu0 0
        %1139 = vmatprep.subr.bf16.mxu0 0
        %1140 = vmatpush2.bf16.msra.mxu0 0
        %1141 = vmatprep.subr.bf16.mxu0 0
        %1142 = vmatpush2.bf16.msra.mxu0 0
        %1143 = vmatprep.subr.bf16.mxu0 0
        %1144 = vmatpush2.bf16.msra.mxu0 0
        %1145 = vmatprep.subr.bf16.mxu0 0
        %1146 = vmatpush2.bf16.msra.mxu0 0
        %1147 = vmatprep.subr.bf16.mxu0 0
        %1148 = vmatpush2.bf16.msra.mxu0 0
        %1149 = vmatprep.mubr.bf16.mxu0 0
        %1150 = vmatmul.mubr.bf16.gmra.mxu0 %v1112
        %v1151 = vpop.f32.mrf.mxu0
        %v1152 = vadd.f32 %v1086, %v1151
        %v1153 = vpop.f32.mrf.mxu0
        %v1154 = vpop.f32.mrf.mxu0
        %v1155 = vadd.f32 %v1089, %v1154
        %v1156 = vpop.f32.mrf.mxu0
        %1157 = vmatprep.mubr.bf16.mxu0 0
        %1158 = vmatmul.mubr.bf16.gmra.mxu0 %v1115
        %v1159 = vpop.f32.mrf.mxu0
        %v1160 = vadd.f32 %v1094, %v1159
        %v1161 = vpop.f32.mrf.mxu0
        %v1162 = vpop.f32.mrf.mxu0
        %v1163 = vpop.f32.mrf.mxu0
        %1164 = vdwg.mxu0
        %1165 = vrot.lane.b32.xlu0 %v677, 64
        %v1166 = vpop.permute.xlu0 %1165
        %1167 = vrot.lane.b32.xlu0 %v678, 64
        %v1168 = vpop.permute.xlu0 %1167
        %1169 = vrot.lane.b32.xlu0 %v679, 64
        %v1170 = vpop.permute.xlu0 %1169
        %1171 = vrot.lane.b32.xlu0 %v680, 64
        %v1172 = vpop.permute.xlu0 %1171
        %v1174 = vsel %vm683, %v1166, 0
        %v1177 = vsel %vm683, %v1168, 0
        %v1180 = vsel %vm683, %v1170, 0
        %v1183 = vsel %vm683, %v1172, 0
        %1185 = vmatprep.subr.bf16.mxu0 0
        %1186 = vmatpush1.bf16.xpose.msra.mxu0 0
        %1187 = vmatprep.subr.bf16.mxu0 0
        %1188 = vmatpush1.bf16.xpose.msra.mxu0 0
        %1189 = vmatprep.subr.bf16.mxu0 0
        %1190 = vmatpush1.bf16.xpose.msra.mxu0 0
        %1191 = vmatprep.subr.bf16.mxu0 0
        %1192 = vmatpush1.bf16.xpose.msra.mxu0 0
        %1193 = vmatprep.subr.bf16.mxu0 0
        %1194 = vmatpush1.bf16.xpose.msra.mxu0 0
        %1195 = vmatprep.subr.bf16.mxu0 0
        %1196 = vmatpush1.bf16.xpose.msra.mxu0 0
        %1197 = vmatprep.subr.bf16.mxu0 0
        %1198 = vmatpush1.bf16.xpose.msra.mxu0 %v1183
        %1199 = vmatprep.subr.bf16.mxu0 0
        %1200 = vmatpush1.bf16.xpose.msra.mxu0 %v1180
        %1201 = vmatprep.subr.bf16.mxu0 0
        %1202 = vmatpush2.bf16.xpose.msra.mxu0 0
        %1203 = vmatprep.subr.bf16.mxu0 0
        %1204 = vmatpush2.bf16.xpose.msra.mxu0 0
        %1205 = vmatprep.subr.bf16.mxu0 0
        %1206 = vmatpush2.bf16.xpose.msra.mxu0 0
        %1207 = vmatprep.subr.bf16.mxu0 0
        %1208 = vmatpush2.bf16.xpose.msra.mxu0 0
        %1209 = vmatprep.subr.bf16.mxu0 0
        %1210 = vmatpush2.bf16.xpose.msra.mxu0 0
        %1211 = vmatprep.subr.bf16.mxu0 0
        %1212 = vmatpush2.bf16.xpose.msra.mxu0 0
        %1213 = vmatprep.subr.bf16.mxu0 0
        %1214 = vmatpush2.bf16.xpose.msra.mxu0 0
        %1215 = vmatprep.subr.bf16.mxu0 0
        %1216 = vmatpush2.bf16.xpose.msra.mxu0 0
        %1217 = vmatprep.mubr.bf16.mxu0 0
        %1218 = vmatmul.mubr.bf16.gmra.mxu0 %v1174
        %v1219 = vpop.f32.mrf.mxu0
        %v1220 = vadd.f32 0.0, %v1219
        %v1221 = vpop.f32.mrf.mxu0
        %v1222 = vpop.f32.mrf.mxu0
        %v1223 = vadd.f32 0.0, %v1222
        %v1224 = vpop.f32.mrf.mxu0
        %1225 = vmatprep.mubr.bf16.mxu0 0
        %1226 = vmatmul.mubr.bf16.gmra.mxu0 %v1177
        %v1227 = vpop.f32.mrf.mxu0
        %v1228 = vadd.f32 0.0, %v1227
        %v1229 = vpop.f32.mrf.mxu0
        %v1230 = vpop.f32.mrf.mxu0
        %v1231 = vpop.f32.mrf.mxu0
        %1232 = vdwg.mxu0
        %v1233 = vmul.f32 %v1220, 0.17677669
        %v1234 = vmul.f32 %v1223, 0.17677669
        %v1235 = vmul.f32 %v1228, 0.17677669
        %v1236 = vadd.f32 %v1233, %v676
        %v1237 = vadd.f32 %v1234, %v676
        %v1238 = vadd.f32 %v1235, %v676
        %v1239 = vsel %vm750, %v1236, -inf
        %1240 = vmax.xlane.f32.xlu0 %v1239
        %v1241 = vpop.xlane.xlu0 %1240
        %v1242 = vsel %vm750, %v1237, -inf
        %1243 = vmax.xlane.f32.xlu0 %v1242
        %v1244 = vpop.xlane.xlu0 %1243
        %v1245 = vsel %vm750, %v1238, -inf
        %1246 = vmax.xlane.f32.xlu0 %v1245
        %v1247 = vpop.xlane.xlu0 %1246
        %v1248 = vsub.f32 %v1236, %v1241
        %v1249 = vsub.f32 %v1237, %v1244
        %v1250 = vsub.f32 %v1238, %v1247
        %v1251 = vmul.f32 %v1248, 1.442695
        %v1252 = vpow.pop %v1251
        %v1253 = vmul.f32 %v1249, 1.442695
        %v1254 = vpow.pop %v1253
        %v1255 = vmul.f32 %v1250, 1.442695
        %v1256 = vpow.pop %v1255
        %v1257 = vsel %vm750, %v1252, 0.0
        %1258 = vadd.xlane.f32.xlu0 %v1257
        %v1259 = vpop.xlane.xlu0 %1258
        %v1260 = vsel %vm750, %v1254, 0.0
        %1261 = vadd.xlane.f32.xlu0 %v1260
        %v1262 = vpop.xlane.xlu0 %1261
        %v1263 = vsel %vm750, %v1256, 0.0
        %1264 = vadd.xlane.f32.xlu0 %v1263
        %v1265 = vpop.xlane.xlu0 %1264
        %v1266 = vrcp.pop %v1259
        %v1267 = vrcp.pop %v1262
        %v1268 = vrcp.pop %v1265
        %v1269 = vmul.f32 %v1252, %v1266
        %v1270 = vmul.f32 %v1254, %v1267
        %v1271 = vmul.f32 %v1256, %v1268
        %v1272 = vpack.c.bf16 %v1270, %v1269
        %v1273 = vpack.c.bf16 %v1271, %v1271
        %1274 = vrot.lane.b32.xlu0 %v681, 64
        %v1275 = vpop.permute.xlu0 %1274
        %1276 = vrot.lane.b32.xlu0 %v682, 64
        %v1277 = vpop.permute.xlu0 %1276
        %v1280 = vsel %vm750, %v1272, 0
        %v1283 = vsel %vm750, %v1273, 0
        %v1286 = vsel %vm792, %v1277, 0
        %1288 = vmatprep.subr.bf16.mxu0 0
        %1289 = vmatpush1.bf16.msra.mxu0 0
        %1290 = vmatprep.subr.bf16.mxu0 0
        %1291 = vmatpush1.bf16.msra.mxu0 0
        %1292 = vmatprep.subr.bf16.mxu0 0
        %1293 = vmatpush1.bf16.msra.mxu0 0
        %1294 = vmatprep.subr.bf16.mxu0 0
        %1295 = vmatpush1.bf16.msra.mxu0 0
        %1296 = vmatprep.subr.bf16.mxu0 0
        %1297 = vmatpush1.bf16.msra.mxu0 0
        %1298 = vmatprep.subr.bf16.mxu0 0
        %1299 = vmatpush1.bf16.msra.mxu0 0
        %1300 = vmatprep.subr.bf16.mxu0 0
        %1301 = vmatpush1.bf16.msra.mxu0 %v1286
        %1302 = vmatprep.subr.bf16.mxu0 0
        %1303 = vmatpush1.bf16.msra.mxu0 %v1275
        %1304 = vmatprep.subr.bf16.mxu0 0
        %1305 = vmatpush2.bf16.msra.mxu0 0
        %1306 = vmatprep.subr.bf16.mxu0 0
        %1307 = vmatpush2.bf16.msra.mxu0 0
        %1308 = vmatprep.subr.bf16.mxu0 0
        %1309 = vmatpush2.bf16.msra.mxu0 0
        %1310 = vmatprep.subr.bf16.mxu0 0
        %1311 = vmatpush2.bf16.msra.mxu0 0
        %1312 = vmatprep.subr.bf16.mxu0 0
        %1313 = vmatpush2.bf16.msra.mxu0 0
        %1314 = vmatprep.subr.bf16.mxu0 0
        %1315 = vmatpush2.bf16.msra.mxu0 0
        %1316 = vmatprep.subr.bf16.mxu0 0
        %1317 = vmatpush2.bf16.msra.mxu0 0
        %1318 = vmatprep.subr.bf16.mxu0 0
        %1319 = vmatpush2.bf16.msra.mxu0 0
        %1320 = vmatprep.mubr.bf16.mxu0 0
        %1321 = vmatmul.mubr.bf16.gmra.mxu0 %v1280
        %v1322 = vpop.f32.mrf.mxu0
        %v1323 = vadd.f32 0.0, %v1322
        %v1324 = vpop.f32.mrf.mxu0
        %v1325 = vpop.f32.mrf.mxu0
        %v1326 = vadd.f32 0.0, %v1325
        %v1327 = vpop.f32.mrf.mxu0
        %1328 = vmatprep.mubr.bf16.mxu0 0
        %1329 = vmatmul.mubr.bf16.gmra.mxu0 %v1283
        %v1330 = vpop.f32.mrf.mxu0
        %v1331 = vadd.f32 0.0, %v1330
        %v1332 = vpop.f32.mrf.mxu0
        %v1333 = vpop.f32.mrf.mxu0
        %v1334 = vpop.f32.mrf.mxu0
        %1335 = vdwg.mxu0
        %v1336 = vld [vmem:[%s308 + $0xcc] sm:$0xf]
        %v1337 = vld [vmem:[%s308 + $0xe4] sm:$0xf]
        %v1338 = vld [vmem:[%s308 + $0xfc] sm:$0xf]
        %v1339 = vld [vmem:[%s308 + $0x114] sm:$0xf]
        %v1340 = vpack.c.bf16 %v1326, %v1323
        %v1341 = vpack.c.bf16 %v1331, %v1331
        %v1346 = vunpack.c.l.b16 %v1336
        %v1347 = vunpack.c.l.b16 %v1337
        %v1348 = vunpack.c.l.b16 %v1338
        %v1349 = vunpack.c.l.b16 %v1339
        %v1350 = vpack.c.b16 %v1347, %v1346
        %v1351 = vpack.c.b16 %v1349, %v1348
        %v1355 = vsel %vm683, %v1340, 0
        %v1358 = vsel %vm683, %v1341, 0
        %1360 = vmatprep.subr.bf16.mxu0 0
        %1361 = vmatpush1.bf16.msra.mxu0 0
        %1362 = vmatprep.subr.bf16.mxu0 0
        %1363 = vmatpush1.bf16.msra.mxu0 0
        %1364 = vmatprep.subr.bf16.mxu0 0
        %1365 = vmatpush1.bf16.msra.mxu0 0
        %1366 = vmatprep.subr.bf16.mxu0 0
        %1367 = vmatpush1.bf16.msra.mxu0 0
        %1368 = vmatprep.subr.bf16.mxu0 0
        %1369 = vmatpush1.bf16.msra.mxu0 0
        %1370 = vmatprep.subr.bf16.mxu0 0
        %1371 = vmatpush1.bf16.msra.mxu0 0
        %1372 = vmatprep.subr.bf16.mxu0 0
        %1373 = vmatpush1.bf16.msra.mxu0 %v1351
        %1374 = vmatprep.subr.bf16.mxu0 0
        %1375 = vmatpush1.bf16.msra.mxu0 %v1350
        %1376 = vmatprep.subr.bf16.mxu0 0
        %1377 = vmatpush2.bf16.msra.mxu0 0
        %1378 = vmatprep.subr.bf16.mxu0 0
        %1379 = vmatpush2.bf16.msra.mxu0 0
        %1380 = vmatprep.subr.bf16.mxu0 0
        %1381 = vmatpush2.bf16.msra.mxu0 0
        %1382 = vmatprep.subr.bf16.mxu0 0
        %1383 = vmatpush2.bf16.msra.mxu0 0
        %1384 = vmatprep.subr.bf16.mxu0 0
        %1385 = vmatpush2.bf16.msra.mxu0 0
        %1386 = vmatprep.subr.bf16.mxu0 0
        %1387 = vmatpush2.bf16.msra.mxu0 0
        %1388 = vmatprep.subr.bf16.mxu0 0
        %1389 = vmatpush2.bf16.msra.mxu0 0
        %1390 = vmatprep.subr.bf16.mxu0 0
        %1391 = vmatpush2.bf16.msra.mxu0 0
        %1392 = vmatprep.mubr.bf16.mxu0 0
        %1393 = vmatmul.mubr.bf16.gmra.mxu0 %v1355
        %v1394 = vpop.f32.mrf.mxu0
        %v1395 = vadd.f32 0.0, %v1394
        %v1396 = vpop.f32.mrf.mxu0
        %v1397 = vpop.f32.mrf.mxu0
        %v1398 = vadd.f32 0.0, %v1397
        %v1399 = vpop.f32.mrf.mxu0
        %1400 = vmatprep.mubr.bf16.mxu0 0
        %1401 = vmatmul.mubr.bf16.gmra.mxu0 %v1358
        %v1402 = vpop.f32.mrf.mxu0
        %v1403 = vadd.f32 0.0, %v1402
        %v1404 = vpop.f32.mrf.mxu0
        %v1405 = vpop.f32.mrf.mxu0
        %v1406 = vpop.f32.mrf.mxu0
        %1407 = vdwg.mxu0
        %v1408 = vadd.f32 %v1152, %v1395
        %v1409 = vadd.f32 %v1155, %v1398
        %v1410 = vadd.f32 %v1160, %v1403
        %1411 = vrot.lane.b32.xlu0 %v677, 32
        %v1412 = vpop.permute.xlu0 %1411
        %1413 = vrot.lane.b32.xlu0 %v678, 32
        %v1414 = vpop.permute.xlu0 %1413
        %1415 = vrot.lane.b32.xlu0 %v679, 32
        %v1416 = vpop.permute.xlu0 %1415
        %1417 = vrot.lane.b32.xlu0 %v680, 32
        %v1418 = vpop.permute.xlu0 %1417
        %v1420 = vsel %vm683, %v1412, 0
        %v1423 = vsel %vm683, %v1414, 0
        %v1426 = vsel %vm683, %v1416, 0
        %v1429 = vsel %vm683, %v1418, 0
        %1431 = vmatprep.subr.bf16.mxu0 0
        %1432 = vmatpush1.bf16.xpose.msra.mxu0 0
        %1433 = vmatprep.subr.bf16.mxu0 0
        %1434 = vmatpush1.bf16.xpose.msra.mxu0 0
        %1435 = vmatprep.subr.bf16.mxu0 0
        %1436 = vmatpush1.bf16.xpose.msra.mxu0 0
        %1437 = vmatprep.subr.bf16.mxu0 0
        %1438 = vmatpush1.bf16.xpose.msra.mxu0 0
        %1439 = vmatprep.subr.bf16.mxu0 0
        %1440 = vmatpush1.bf16.xpose.msra.mxu0 0
        %1441 = vmatprep.subr.bf16.mxu0 0
        %1442 = vmatpush1.bf16.xpose.msra.mxu0 0
        %1443 = vmatprep.subr.bf16.mxu0 0
        %1444 = vmatpush1.bf16.xpose.msra.mxu0 %v1429
        %1445 = vmatprep.subr.bf16.mxu0 0
        %1446 = vmatpush1.bf16.xpose.msra.mxu0 %v1426
        %1447 = vmatprep.subr.bf16.mxu0 0
        %1448 = vmatpush2.bf16.xpose.msra.mxu0 0
        %1449 = vmatprep.subr.bf16.mxu0 0
        %1450 = vmatpush2.bf16.xpose.msra.mxu0 0
        %1451 = vmatprep.subr.bf16.mxu0 0
        %1452 = vmatpush2.bf16.xpose.msra.mxu0 0
        %1453 = vmatprep.subr.bf16.mxu0 0
        %1454 = vmatpush2.bf16.xpose.msra.mxu0 0
        %1455 = vmatprep.subr.bf16.mxu0 0
        %1456 = vmatpush2.bf16.xpose.msra.mxu0 0
        %1457 = vmatprep.subr.bf16.mxu0 0
        %1458 = vmatpush2.bf16.xpose.msra.mxu0 0
        %1459 = vmatprep.subr.bf16.mxu0 0
        %1460 = vmatpush2.bf16.xpose.msra.mxu0 0
        %1461 = vmatprep.subr.bf16.mxu0 0
        %1462 = vmatpush2.bf16.xpose.msra.mxu0 0
        %1463 = vmatprep.mubr.bf16.mxu0 0
        %1464 = vmatmul.mubr.bf16.gmra.mxu0 %v1420
        %v1465 = vpop.f32.mrf.mxu0
        %v1466 = vadd.f32 0.0, %v1465
        %v1467 = vpop.f32.mrf.mxu0
        %v1468 = vpop.f32.mrf.mxu0
        %v1469 = vadd.f32 0.0, %v1468
        %v1470 = vpop.f32.mrf.mxu0
        %1471 = vmatprep.mubr.bf16.mxu0 0
        %1472 = vmatmul.mubr.bf16.gmra.mxu0 %v1423
        %v1473 = vpop.f32.mrf.mxu0
        %v1474 = vadd.f32 0.0, %v1473
        %v1475 = vpop.f32.mrf.mxu0
        %v1476 = vpop.f32.mrf.mxu0
        %v1477 = vpop.f32.mrf.mxu0
        %1478 = vdwg.mxu0
        %v1479 = vmul.f32 %v1466, 0.17677669
        %v1480 = vmul.f32 %v1469, 0.17677669
        %v1481 = vmul.f32 %v1474, 0.17677669
        %v1482 = vadd.f32 %v1479, %v676
        %v1483 = vadd.f32 %v1480, %v676
        %v1484 = vadd.f32 %v1481, %v676
        %v1485 = vsel %vm750, %v1482, -inf
        %1486 = vmax.xlane.f32.xlu0 %v1485
        %v1487 = vpop.xlane.xlu0 %1486
        %v1488 = vsel %vm750, %v1483, -inf
        %1489 = vmax.xlane.f32.xlu0 %v1488
        %v1490 = vpop.xlane.xlu0 %1489
        %v1491 = vsel %vm750, %v1484, -inf
        %1492 = vmax.xlane.f32.xlu0 %v1491
        %v1493 = vpop.xlane.xlu0 %1492
        %v1494 = vsub.f32 %v1482, %v1487
        %v1495 = vsub.f32 %v1483, %v1490
        %v1496 = vsub.f32 %v1484, %v1493
        %v1497 = vmul.f32 %v1494, 1.442695
        %v1498 = vpow.pop %v1497
        %v1499 = vmul.f32 %v1495, 1.442695
        %v1500 = vpow.pop %v1499
        %v1501 = vmul.f32 %v1496, 1.442695
        %v1502 = vpow.pop %v1501
        %v1503 = vsel %vm750, %v1498, 0.0
        %1504 = vadd.xlane.f32.xlu0 %v1503
        %v1505 = vpop.xlane.xlu0 %1504
        %v1506 = vsel %vm750, %v1500, 0.0
        %1507 = vadd.xlane.f32.xlu0 %v1506
        %v1508 = vpop.xlane.xlu0 %1507
        %v1509 = vsel %vm750, %v1502, 0.0
        %1510 = vadd.xlane.f32.xlu0 %v1509
        %v1511 = vpop.xlane.xlu0 %1510
        %v1512 = vrcp.pop %v1505
        %v1513 = vrcp.pop %v1508
        %v1514 = vrcp.pop %v1511
        %v1515 = vmul.f32 %v1498, %v1512
        %v1516 = vmul.f32 %v1500, %v1513
        %v1517 = vmul.f32 %v1502, %v1514
        %v1518 = vpack.c.bf16 %v1516, %v1515
        %v1519 = vpack.c.bf16 %v1517, %v1517
        %1520 = vrot.lane.b32.xlu0 %v681, 32
        %v1521 = vpop.permute.xlu0 %1520
        %1522 = vrot.lane.b32.xlu0 %v682, 32
        %v1523 = vpop.permute.xlu0 %1522
        %v1526 = vsel %vm750, %v1518, 0
        %v1529 = vsel %vm750, %v1519, 0
        %v1532 = vsel %vm792, %v1523, 0
        %1534 = vmatprep.subr.bf16.mxu0 0
        %1535 = vmatpush1.bf16.msra.mxu0 0
        %1536 = vmatprep.subr.bf16.mxu0 0
        %1537 = vmatpush1.bf16.msra.mxu0 0
        %1538 = vmatprep.subr.bf16.mxu0 0
        %1539 = vmatpush1.bf16.msra.mxu0 0
        %1540 = vmatprep.subr.bf16.mxu0 0
        %1541 = vmatpush1.bf16.msra.mxu0 0
        %1542 = vmatprep.subr.bf16.mxu0 0
        %1543 = vmatpush1.bf16.msra.mxu0 0
        %1544 = vmatprep.subr.bf16.mxu0 0
        %1545 = vmatpush1.bf16.msra.mxu0 0
        %1546 = vmatprep.subr.bf16.mxu0 0
        %1547 = vmatpush1.bf16.msra.mxu0 %v1532
        %1548 = vmatprep.subr.bf16.mxu0 0
        %1549 = vmatpush1.bf16.msra.mxu0 %v1521
        %1550 = vmatprep.subr.bf16.mxu0 0
        %1551 = vmatpush2.bf16.msra.mxu0 0
        %1552 = vmatprep.subr.bf16.mxu0 0
        %1553 = vmatpush2.bf16.msra.mxu0 0
        %1554 = vmatprep.subr.bf16.mxu0 0
        %1555 = vmatpush2.bf16.msra.mxu0 0
        %1556 = vmatprep.subr.bf16.mxu0 0
        %1557 = vmatpush2.bf16.msra.mxu0 0
        %1558 = vmatprep.subr.bf16.mxu0 0
        %1559 = vmatpush2.bf16.msra.mxu0 0
        %1560 = vmatprep.subr.bf16.mxu0 0
        %1561 = vmatpush2.bf16.msra.mxu0 0
        %1562 = vmatprep.subr.bf16.mxu0 0
        %1563 = vmatpush2.bf16.msra.mxu0 0
        %1564 = vmatprep.subr.bf16.mxu0 0
        %1565 = vmatpush2.bf16.msra.mxu0 0
        %1566 = vmatprep.mubr.bf16.mxu0 0
        %1567 = vmatmul.mubr.bf16.gmra.mxu0 %v1526
        %v1568 = vpop.f32.mrf.mxu0
        %v1569 = vadd.f32 0.0, %v1568
        %v1570 = vpop.f32.mrf.mxu0
        %v1571 = vpop.f32.mrf.mxu0
        %v1572 = vadd.f32 0.0, %v1571
        %v1573 = vpop.f32.mrf.mxu0
        %1574 = vmatprep.mubr.bf16.mxu0 0
        %1575 = vmatmul.mubr.bf16.gmra.mxu0 %v1529
        %v1576 = vpop.f32.mrf.mxu0
        %v1577 = vadd.f32 0.0, %v1576
        %v1578 = vpop.f32.mrf.mxu0
        %v1579 = vpop.f32.mrf.mxu0
        %v1580 = vpop.f32.mrf.mxu0
        %1581 = vdwg.mxu0
        %v1582 = vld [vmem:[%s308 + $0x12c] sm:$0xf]
        %v1583 = vld [vmem:[%s308 + $0x144] sm:$0xf]
        %v1584 = vld [vmem:[%s308 + $0x15c] sm:$0xf]
        %v1585 = vld [vmem:[%s308 + $0x174] sm:$0xf]
        %v1586 = vpack.c.bf16 %v1572, %v1569
        %v1587 = vpack.c.bf16 %v1577, %v1577
        %v1592 = vunpack.c.l.b16 %v1582
        %v1593 = vunpack.c.l.b16 %v1583
        %v1594 = vunpack.c.l.b16 %v1584
        %v1595 = vunpack.c.l.b16 %v1585
        %v1596 = vpack.c.b16 %v1593, %v1592
        %v1597 = vpack.c.b16 %v1595, %v1594
        %v1601 = vsel %vm683, %v1586, 0
        %v1604 = vsel %vm683, %v1587, 0
        %1606 = vmatprep.subr.bf16.mxu0 0
        %1607 = vmatpush1.bf16.msra.mxu0 0
        %1608 = vmatprep.subr.bf16.mxu0 0
        %1609 = vmatpush1.bf16.msra.mxu0 0
        %1610 = vmatprep.subr.bf16.mxu0 0
        %1611 = vmatpush1.bf16.msra.mxu0 0
        %1612 = vmatprep.subr.bf16.mxu0 0
        %1613 = vmatpush1.bf16.msra.mxu0 0
        %1614 = vmatprep.subr.bf16.mxu0 0
        %1615 = vmatpush1.bf16.msra.mxu0 0
        %1616 = vmatprep.subr.bf16.mxu0 0
        %1617 = vmatpush1.bf16.msra.mxu0 0
        %1618 = vmatprep.subr.bf16.mxu0 0
        %1619 = vmatpush1.bf16.msra.mxu0 %v1597
        %1620 = vmatprep.subr.bf16.mxu0 0
        %1621 = vmatpush1.bf16.msra.mxu0 %v1596
        %1622 = vmatprep.subr.bf16.mxu0 0
        %1623 = vmatpush2.bf16.msra.mxu0 0
        %1624 = vmatprep.subr.bf16.mxu0 0
        %1625 = vmatpush2.bf16.msra.mxu0 0
        %1626 = vmatprep.subr.bf16.mxu0 0
        %1627 = vmatpush2.bf16.msra.mxu0 0
        %1628 = vmatprep.subr.bf16.mxu0 0
        %1629 = vmatpush2.bf16.msra.mxu0 0
        %1630 = vmatprep.subr.bf16.mxu0 0
        %1631 = vmatpush2.bf16.msra.mxu0 0
        %1632 = vmatprep.subr.bf16.mxu0 0
        %1633 = vmatpush2.bf16.msra.mxu0 0
        %1634 = vmatprep.subr.bf16.mxu0 0
        %1635 = vmatpush2.bf16.msra.mxu0 0
        %1636 = vmatprep.subr.bf16.mxu0 0
        %1637 = vmatpush2.bf16.msra.mxu0 0
        %1638 = vmatprep.mubr.bf16.mxu0 0
        %1639 = vmatmul.mubr.bf16.gmra.mxu0 %v1601
        %v1640 = vpop.f32.mrf.mxu0
        %v1641 = vadd.f32 0.0, %v1640
        %v1642 = vpop.f32.mrf.mxu0
        %v1643 = vpop.f32.mrf.mxu0
        %v1644 = vadd.f32 0.0, %v1643
        %v1645 = vpop.f32.mrf.mxu0
        %1646 = vmatprep.mubr.bf16.mxu0 0
        %1647 = vmatmul.mubr.bf16.gmra.mxu0 %v1604
        %v1648 = vpop.f32.mrf.mxu0
        %v1649 = vadd.f32 0.0, %v1648
        %v1650 = vpop.f32.mrf.mxu0
        %v1651 = vpop.f32.mrf.mxu0
        %v1652 = vpop.f32.mrf.mxu0
        %1653 = vdwg.mxu0
        %v1654 = vadd.f32 %v1408, %v1641
        %v1655 = vadd.f32 %v1409, %v1644
        %v1656 = vadd.f32 %v1410, %v1649
        %v1657 = vadd.f32 %v329, %v1654
        %v1658 = vadd.f32 %v330, %v1655
        %v1659 = vadd.f32 %v331, %v1656
        %v1661 = vlaneseq
        %v1662 = vshrl.u32 %v1661, 7
        %v1663 = vsub.s32 0, %v1662
        %v1664 = vrot.slane %v335, %v1663
        %v1666 = vadd.f32 %v1657, %v1664
        %v1667 = vadd.f32 %v1658, %v1664
        %v1668 = vadd.f32 %v1659, %v1664
        %1669 = vadd.xlane.f32.xlu0 %v1666
        %v1670 = vpop.xlane.xlu0 %1669
        %1671 = vadd.xlane.f32.xlu0 %v1667
        %v1672 = vpop.xlane.xlu0 %1671
        %1673 = vadd.xlane.f32.xlu0 %v1668
        %v1674 = vpop.xlane.xlu0 %1673
        %v1675 = vmul.f32 %v1670, %v346
        %v1676 = vmul.f32 %v1672, %v346
        %v1677 = vmul.f32 %v1674, %v346
        %v1678 = vsub.f32 %v1666, %v1675
        %v1679 = vsub.f32 %v1667, %v1676
        %v1680 = vsub.f32 %v1668, %v1677
        %v1681 = vmul.f32 %v1678, %v1678
        %v1682 = vmul.f32 %v1679, %v1679
        %v1683 = vmul.f32 %v1680, %v1680
        %1684 = vadd.xlane.f32.xlu0 %v1681
        %v1685 = vpop.xlane.xlu0 %1684
        %1686 = vadd.xlane.f32.xlu0 %v1682
        %v1687 = vpop.xlane.xlu0 %1686
        %1688 = vadd.xlane.f32.xlu0 %v1683
        %v1689 = vpop.xlane.xlu0 %1688
        %v1690 = vmul.f32 %v1685, %v346
        %v1691 = vmul.f32 %v1687, %v346
        %v1692 = vmul.f32 %v1689, %v346
        %v1693 = vadd.f32 %v1690, 1e-05
        %v1694 = vadd.f32 %v1691, 1e-05
        %v1695 = vadd.f32 %v1692, 1e-05
        %v1696 = vrsqrt.pop %v1693
        %v1697 = vrsqrt.pop %v1694
        %v1698 = vrsqrt.pop %v1695
        %v1699 = vmul.f32 %v1678, %v1696
        %v1700 = vmul.f32 %v1679, %v1697
        %v1701 = vmul.f32 %v1680, %v1698
        %v1703 = vlaneseq
        %v1704 = vshrl.u32 %v1703, 7
        %v1705 = vsub.s32 0, %v1704
        %v1706 = vrot.slane %v336, %v1705
        %v1708 = vmul.f32 %v1699, %v1706
        %v1709 = vmul.f32 %v1700, %v1706
        %v1710 = vmul.f32 %v1701, %v1706
        %v1712 = vlaneseq
        %v1713 = vshrl.u32 %v1712, 7
        %v1714 = vsub.s32 0, %v1713
        %v1715 = vrot.slane %v337, %v1714
        %v1717 = vadd.f32 %v1708, %v1715
        %v1718 = vadd.f32 %v1709, %v1715
        %v1719 = vadd.f32 %v1710, %v1715
        %v1720 = vld [vmem:[%s308 + $0x10] sm:$0xff]
        %v1721 = vld [vmem:[%s308 + $0x28] sm:$0xff]
        %v1722 = vld [vmem:[%s308 + $0x40] sm:$0xff]
        %v1723 = vld [vmem:[%s308 + $0x58] sm:$0xff]
        %v1724 = vld [vmem:[%s308 + $0x70] sm:$0xff]
        %v1725 = vld [vmem:[%s308 + $0x88] sm:$0xff]
        %v1726 = vld [vmem:[%s308 + $0xa0] sm:$0xff]
        %v1727 = vld [vmem:[%s308 + $0xb8] sm:$0xff]
        %v1728 = vld [vmem:[%s308 + $0xd0] sm:$0xff]
        %v1729 = vld [vmem:[%s308 + $0xe8] sm:$0xff]
        %v1730 = vld [vmem:[%s308 + $0x100] sm:$0xff]
        %v1731 = vld [vmem:[%s308 + $0x118] sm:$0xff]
        %v1732 = vld [vmem:[%s308 + $0x130] sm:$0xff]
        %v1733 = vld [vmem:[%s308 + $0x148] sm:$0xff]
        %v1734 = vld [vmem:[%s308 + $0x160] sm:$0xff]
        %v1735 = vld [vmem:[%s308 + $0x178] sm:$0xff]
        %v1736 = vpack.c.bf16 %v1718, %v1717
        %v1737 = vpack.c.bf16 %v1719, %v1719
        %v1739 = vlaneseq
        %v1740 = vshrl.u32 %v1739, 7
        %v1741 = vsub.s32 0, %v1740
        %v1742 = vrot.slane %v338, %v1741
        %v1743 = vlaneseq
        %v1744 = vshrl.u32 %v1743, 7
        %v1745 = vsub.s32 1, %v1744
        %v1746 = vrot.slane %v338, %v1745
        %v1765 = vunpack.c.l.b16 %v1720
        %v1766 = vunpack.c.h.b16 %v1720
        %v1767 = vunpack.c.l.b16 %v1721
        %v1768 = vunpack.c.h.b16 %v1721
        %v1769 = vunpack.c.l.b16 %v1722
        %v1770 = vunpack.c.h.b16 %v1722
        %v1771 = vunpack.c.l.b16 %v1723
        %v1772 = vunpack.c.h.b16 %v1723
        %v1773 = vunpack.c.l.b16 %v1724
        %v1774 = vunpack.c.h.b16 %v1724
        %v1775 = vunpack.c.l.b16 %v1725
        %v1776 = vunpack.c.h.b16 %v1725
        %v1777 = vunpack.c.l.b16 %v1726
        %v1778 = vunpack.c.h.b16 %v1726
        %v1779 = vunpack.c.l.b16 %v1727
        %v1780 = vunpack.c.h.b16 %v1727
        %v1781 = vunpack.c.l.b16 %v1728
        %v1782 = vunpack.c.h.b16 %v1728
        %v1783 = vunpack.c.l.b16 %v1729
        %v1784 = vunpack.c.h.b16 %v1729
        %v1785 = vunpack.c.l.b16 %v1730
        %v1786 = vunpack.c.h.b16 %v1730
        %v1787 = vunpack.c.l.b16 %v1731
        %v1788 = vunpack.c.h.b16 %v1731
        %v1789 = vunpack.c.l.b16 %v1732
        %v1790 = vunpack.c.h.b16 %v1732
        %v1791 = vunpack.c.l.b16 %v1733
        %v1792 = vunpack.c.h.b16 %v1733
        %v1793 = vunpack.c.l.b16 %v1734
        %v1794 = vunpack.c.h.b16 %v1734
        %v1795 = vunpack.c.l.b16 %v1735
        %v1796 = vunpack.c.h.b16 %v1735
        %v1797 = vpack.c.b16 %v1767, %v1765
        %v1798 = vpack.c.b16 %v1768, %v1766
        %v1799 = vpack.c.b16 %v1771, %v1769
        %v1800 = vpack.c.b16 %v1772, %v1770
        %v1801 = vpack.c.b16 %v1775, %v1773
        %v1802 = vpack.c.b16 %v1776, %v1774
        %v1803 = vpack.c.b16 %v1779, %v1777
        %v1804 = vpack.c.b16 %v1780, %v1778
        %v1805 = vpack.c.b16 %v1783, %v1781
        %v1806 = vpack.c.b16 %v1784, %v1782
        %v1807 = vpack.c.b16 %v1787, %v1785
        %v1808 = vpack.c.b16 %v1788, %v1786
        %v1809 = vpack.c.b16 %v1791, %v1789
        %v1810 = vpack.c.b16 %v1792, %v1790
        %v1811 = vpack.c.b16 %v1795, %v1793
        %v1812 = vpack.c.b16 %v1796, %v1794
        %1829 = vmatprep.subr.bf16.mxu0 %v1812
        %1830 = vmatpush1.bf16.msra.mxu0 %v1811
        %1831 = vmatprep.subr.bf16.mxu0 %v1810
        %1832 = vmatpush1.bf16.msra.mxu0 %v1809
        %1833 = vmatprep.subr.bf16.mxu0 %v1808
        %1834 = vmatpush1.bf16.msra.mxu0 %v1807
        %1835 = vmatprep.subr.bf16.mxu0 %v1806
        %1836 = vmatpush1.bf16.msra.mxu0 %v1805
        %1837 = vmatprep.subr.bf16.mxu0 %v1804
        %1838 = vmatpush1.bf16.msra.mxu0 %v1803
        %1839 = vmatprep.subr.bf16.mxu0 %v1802
        %1840 = vmatpush1.bf16.msra.mxu0 %v1801
        %1841 = vmatprep.subr.bf16.mxu0 %v1800
        %1842 = vmatpush1.bf16.msra.mxu0 %v1799
        %1843 = vmatprep.subr.bf16.mxu0 %v1798
        %1844 = vmatpush1.bf16.msra.mxu0 %v1797
        %1845 = vmatprep.subr.bf16.mxu0 0
        %1846 = vmatpush2.bf16.msra.mxu0 0
        %1847 = vmatprep.subr.bf16.mxu0 0
        %1848 = vmatpush2.bf16.msra.mxu0 0
        %1849 = vmatprep.subr.bf16.mxu0 0
        %1850 = vmatpush2.bf16.msra.mxu0 0
        %1851 = vmatprep.subr.bf16.mxu0 0
        %1852 = vmatpush2.bf16.msra.mxu0 0
        %1853 = vmatprep.subr.bf16.mxu0 0
        %1854 = vmatpush2.bf16.msra.mxu0 0
        %1855 = vmatprep.subr.bf16.mxu0 0
        %1856 = vmatpush2.bf16.msra.mxu0 0
        %1857 = vmatprep.subr.bf16.mxu0 0
        %1858 = vmatpush2.bf16.msra.mxu0 0
        %1859 = vmatprep.subr.bf16.mxu0 0
        %1860 = vmatpush2.bf16.msra.mxu0 0
        %1861 = vmatprep.mubr.bf16.mxu0 0
        %1862 = vmatmul.mubr.bf16.gmra.mxu0 %v1736
        %v1863 = vpop.f32.mrf.mxu0
        %v1864 = vadd.f32 %v1742, %v1863
        %v1865 = vpop.f32.mrf.mxu0
        %v1866 = vadd.f32 %v1746, %v1865
        %v1867 = vpop.f32.mrf.mxu0
        %v1868 = vadd.f32 %v1742, %v1867
        %v1869 = vpop.f32.mrf.mxu0
        %v1870 = vadd.f32 %v1746, %v1869
        %1871 = vmatprep.mubr.bf16.mxu0 0
        %1872 = vmatmul.mubr.bf16.gmra.mxu0 %v1737
        %v1873 = vpop.f32.mrf.mxu0
        %v1874 = vadd.f32 %v1742, %v1873
        %v1875 = vpop.f32.mrf.mxu0
        %v1876 = vadd.f32 %v1746, %v1875
        %v1877 = vpop.f32.mrf.mxu0
        %v1878 = vpop.f32.mrf.mxu0
        %1879 = vdwg.mxu0
        %v1880 = vmul.f32 %v1864, 0.5
        %v1881 = vmul.f32 %v1866, 0.5
        %v1882 = vmul.f32 %v1868, 0.5
        %v1883 = vmul.f32 %v1870, 0.5
        %v1884 = vmul.f32 %v1874, 0.5
        %v1885 = vmul.f32 %v1876, 0.5
        %v1886 = vmul.f32 %v1864, 0.70710677
        %v1887 = vmul.f32 %v1866, 0.70710677
        %v1888 = vmul.f32 %v1868, 0.70710677
        %v1889 = vmul.f32 %v1870, 0.70710677
        %v1890 = vmul.f32 %v1874, 0.70710677
        %v1891 = vmul.f32 %v1876, 0.70710677
        %v1892 = verf.f32.pop %v1886
        %v1893 = verf.f32.pop %v1887
        %v1894 = verf.f32.pop %v1888
        %v1895 = verf.f32.pop %v1889
        %v1896 = verf.f32.pop %v1890
        %v1897 = verf.f32.pop %v1891
        %v1898 = vadd.f32 %v1892, 1.0
        %v1899 = vadd.f32 %v1893, 1.0
        %v1900 = vadd.f32 %v1894, 1.0
        %v1901 = vadd.f32 %v1895, 1.0
        %v1902 = vadd.f32 %v1896, 1.0
        %v1903 = vadd.f32 %v1897, 1.0
        %v1904 = vmul.f32 %v1880, %v1898
        %v1905 = vmul.f32 %v1881, %v1899
        %v1906 = vmul.f32 %v1882, %v1900
        %v1907 = vmul.f32 %v1883, %v1901
        %v1908 = vmul.f32 %v1884, %v1902
        %v1909 = vmul.f32 %v1885, %v1903
        %v1910 = vld [vmem:[%s313] sm:$0xf]
        %v1911 = vld [vmem:[%s313 + $0x4] sm:$0xf]
        %v1912 = vld [vmem:[%s313 + $0x8] sm:$0xf]
        %v1913 = vld [vmem:[%s313 + $0xc] sm:$0xf]
        %v1914 = vld [vmem:[%s313 + $0x10] sm:$0xf]
        %v1915 = vld [vmem:[%s313 + $0x14] sm:$0xf]
        %v1916 = vld [vmem:[%s313 + $0x18] sm:$0xf]
        %v1917 = vld [vmem:[%s313 + $0x1c] sm:$0xf]
        %v1918 = vld [vmem:[%s313 + $0x20] sm:$0xf]
        %v1919 = vld [vmem:[%s313 + $0x24] sm:$0xf]
        %v1920 = vld [vmem:[%s313 + $0x28] sm:$0xf]
        %v1921 = vld [vmem:[%s313 + $0x2c] sm:$0xf]
        %v1922 = vld [vmem:[%s313 + $0x30] sm:$0xf]
        %v1923 = vld [vmem:[%s313 + $0x34] sm:$0xf]
        %v1924 = vld [vmem:[%s313 + $0x38] sm:$0xf]
        %v1925 = vld [vmem:[%s313 + $0x3c] sm:$0xf]
        %v1926 = vld [vmem:[%s313 + $0x40] sm:$0xf]
        %v1927 = vld [vmem:[%s313 + $0x44] sm:$0xf]
        %v1928 = vld [vmem:[%s313 + $0x48] sm:$0xf]
        %v1929 = vld [vmem:[%s313 + $0x4c] sm:$0xf]
        %v1930 = vld [vmem:[%s313 + $0x50] sm:$0xf]
        %v1931 = vld [vmem:[%s313 + $0x54] sm:$0xf]
        %v1932 = vld [vmem:[%s313 + $0x58] sm:$0xf]
        %v1933 = vld [vmem:[%s313 + $0x5c] sm:$0xf]
        %v1934 = vld [vmem:[%s313 + $0x60] sm:$0xf]
        %v1935 = vld [vmem:[%s313 + $0x64] sm:$0xf]
        %v1936 = vld [vmem:[%s313 + $0x68] sm:$0xf]
        %v1937 = vld [vmem:[%s313 + $0x6c] sm:$0xf]
        %v1938 = vld [vmem:[%s313 + $0x70] sm:$0xf]
        %v1939 = vld [vmem:[%s313 + $0x74] sm:$0xf]
        %v1940 = vld [vmem:[%s313 + $0x78] sm:$0xf]
        %v1941 = vld [vmem:[%s313 + $0x7c] sm:$0xf]
        %v1942 = vpack.c.bf16 %v1906, %v1904
        %v1943 = vpack.c.bf16 %v1907, %v1905
        %v1944 = vpack.c.bf16 %v1908, %v1908
        %v1945 = vpack.c.bf16 %v1909, %v1909
        %v1947 = vlaneseq
        %v1948 = vshrl.u32 %v1947, 7
        %v1949 = vsub.s32 0, %v1948
        %v1950 = vrot.slane %v339, %v1949
        %v1984 = vunpack.c.l.b16 %v1910
        %v1985 = vunpack.c.l.b16 %v1911
        %v1986 = vunpack.c.l.b16 %v1912
        %v1987 = vunpack.c.l.b16 %v1913
        %v1988 = vunpack.c.l.b16 %v1914
        %v1989 = vunpack.c.l.b16 %v1915
        %v1990 = vunpack.c.l.b16 %v1916
        %v1991 = vunpack.c.l.b16 %v1917
        %v1992 = vunpack.c.l.b16 %v1918
        %v1993 = vunpack.c.l.b16 %v1919
        %v1994 = vunpack.c.l.b16 %v1920
        %v1995 = vunpack.c.l.b16 %v1921
        %v1996 = vunpack.c.l.b16 %v1922
        %v1997 = vunpack.c.l.b16 %v1923
        %v1998 = vunpack.c.l.b16 %v1924
        %v1999 = vunpack.c.l.b16 %v1925
        %v2000 = vunpack.c.l.b16 %v1926
        %v2001 = vunpack.c.l.b16 %v1927
        %v2002 = vunpack.c.l.b16 %v1928
        %v2003 = vunpack.c.l.b16 %v1929
        %v2004 = vunpack.c.l.b16 %v1930
        %v2005 = vunpack.c.l.b16 %v1931
        %v2006 = vunpack.c.l.b16 %v1932
        %v2007 = vunpack.c.l.b16 %v1933
        %v2008 = vunpack.c.l.b16 %v1934
        %v2009 = vunpack.c.l.b16 %v1935
        %v2010 = vunpack.c.l.b16 %v1936
        %v2011 = vunpack.c.l.b16 %v1937
        %v2012 = vunpack.c.l.b16 %v1938
        %v2013 = vunpack.c.l.b16 %v1939
        %v2014 = vunpack.c.l.b16 %v1940
        %v2015 = vunpack.c.l.b16 %v1941
        %v2016 = vpack.c.b16 %v1985, %v1984
        %v2017 = vpack.c.b16 %v1987, %v1986
        %v2018 = vpack.c.b16 %v1989, %v1988
        %v2019 = vpack.c.b16 %v1991, %v1990
        %v2020 = vpack.c.b16 %v1993, %v1992
        %v2021 = vpack.c.b16 %v1995, %v1994
        %v2022 = vpack.c.b16 %v1997, %v1996
        %v2023 = vpack.c.b16 %v1999, %v1998
        %v2024 = vpack.c.b16 %v2001, %v2000
        %v2025 = vpack.c.b16 %v2003, %v2002
        %v2026 = vpack.c.b16 %v2005, %v2004
        %v2027 = vpack.c.b16 %v2007, %v2006
        %v2028 = vpack.c.b16 %v2009, %v2008
        %v2029 = vpack.c.b16 %v2011, %v2010
        %v2030 = vpack.c.b16 %v2013, %v2012
        %v2031 = vpack.c.b16 %v2015, %v2014
        %2048 = vmatprep.subr.bf16.mxu0 0
        %2049 = vmatpush1.bf16.msra.mxu0 %v2023
        %2050 = vmatprep.subr.bf16.mxu0 0
        %2051 = vmatpush1.bf16.msra.mxu0 %v2022
        %2052 = vmatprep.subr.bf16.mxu0 0
        %2053 = vmatpush1.bf16.msra.mxu0 %v2021
        %2054 = vmatprep.subr.bf16.mxu0 0
        %2055 = vmatpush1.bf16.msra.mxu0 %v2020
        %2056 = vmatprep.subr.bf16.mxu0 0
        %2057 = vmatpush1.bf16.msra.mxu0 %v2019
        %2058 = vmatprep.subr.bf16.mxu0 0
        %2059 = vmatpush1.bf16.msra.mxu0 %v2018
        %2060 = vmatprep.subr.bf16.mxu0 0
        %2061 = vmatpush1.bf16.msra.mxu0 %v2017
        %2062 = vmatprep.subr.bf16.mxu0 0
        %2063 = vmatpush1.bf16.msra.mxu0 %v2016
        %2064 = vmatprep.subr.bf16.mxu0 0
        %2065 = vmatpush2.bf16.msra.mxu0 %v2031
        %2066 = vmatprep.subr.bf16.mxu0 0
        %2067 = vmatpush2.bf16.msra.mxu0 %v2030
        %2068 = vmatprep.subr.bf16.mxu0 0
        %2069 = vmatpush2.bf16.msra.mxu0 %v2029
        %2070 = vmatprep.subr.bf16.mxu0 0
        %2071 = vmatpush2.bf16.msra.mxu0 %v2028
        %2072 = vmatprep.subr.bf16.mxu0 0
        %2073 = vmatpush2.bf16.msra.mxu0 %v2027
        %2074 = vmatprep.subr.bf16.mxu0 0
        %2075 = vmatpush2.bf16.msra.mxu0 %v2026
        %2076 = vmatprep.subr.bf16.mxu0 0
        %2077 = vmatpush2.bf16.msra.mxu0 %v2025
        %2078 = vmatprep.subr.bf16.mxu0 0
        %2079 = vmatpush2.bf16.msra.mxu0 %v2024
        %2080 = vmatprep.mubr.bf16.mxu0 %v1943
        %2081 = vmatmul.mubr.bf16.gmra.mxu0 %v1942
        %v2082 = vpop.f32.mrf.mxu0
        %v2083 = vadd.f32 %v1950, %v2082
        %v2084 = vpop.f32.mrf.mxu0
        %v2085 = vpop.f32.mrf.mxu0
        %v2086 = vadd.f32 %v1950, %v2085
        %v2087 = vpop.f32.mrf.mxu0
        %2088 = vmatprep.mubr.bf16.mxu0 %v1945
        %2089 = vmatmul.mubr.bf16.gmra.mxu0 %v1944
        %v2090 = vpop.f32.mrf.mxu0
        %v2091 = vadd.f32 %v1950, %v2090
        %v2092 = vpop.f32.mrf.mxu0
        %v2093 = vpop.f32.mrf.mxu0
        %v2094 = vpop.f32.mrf.mxu0
        %2095 = vdwg.mxu0
        %v2096 = vadd.f32 %v1666, %v2083
        %v2097 = vadd.f32 %v1667, %v2086
        %v2098 = vadd.f32 %v1668, %v2091
        %2099 = vst [vmem:[#allocation2] sm:$0xff] %v2096
        %2100 = vst [vmem:[#allocation2 + $0x8] sm:$0xff] %v2097
        %2101 = vst [vmem:[#allocation2 + $0x10] sm:$0xff] %v2098
        %p2102 = scmp.eq.s32.totalorder %s25, 2
        // Predicated region
        $region49: #{vit_forward.3} parent=43 // pred_check
          %p2103 = pneg %p2102
        $region50: #{vit_forward.3} parent=43 // pred_check_branch
          %2105 = sbr.rel (%p2103) target = $region52
        $region51: #{vit_forward.3} parent=43 // pred_region
          %v2106 = vld [vmem:[%s5] sm:$0x1]
          %v2107 = vld [vmem:[%s5 + $0x1] sm:$0x1]
          %vm2108 = vcmask 1040384
          %v2109 = vsel %vm2108, %v2096, 0.0
          %2110 = vadd.xlane.f32.xlu0 %v2109
          %v2111 = vpop.xlane.xlu0 %2110
          %v2112 = vmul.f32 %v2111, %v346
          %v2113 = vsub.f32 %v2096, %v2112
          %v2114 = vmul.f32 %v2113, %v2113
          %v2115 = vsel %vm2108, %v2114, 0.0
          %2116 = vadd.xlane.f32.xlu0 %v2115
          %v2117 = vpop.xlane.xlu0 %2116
          %v2118 = vmul.f32 %v2117, %v346
          %v2119 = vadd.f32 %v2118, 1e-05
          %v2120 = vrsqrt.pop %v2119
          %v2121 = vmul.f32 %v2113, %v2120
          %v2122 = vmul.f32 %v2121, %v2106
          %v2123 = vadd.f32 %v2122, %v2107
          %v2124 = vld [vmem:[%s4] sm:$0xf]
          %v2125 = vld [vmem:[%s4 + $0x4] sm:$0xf]
          %v2126 = vld [vmem:[%s4 + $0x8] sm:$0xf]
          %v2127 = vld [vmem:[%s4 + $0xc] sm:$0xf]
          %v2128 = vld [vmem:[%s4 + $0x10] sm:$0xf]
          %v2129 = vld [vmem:[%s4 + $0x14] sm:$0xf]
          %v2130 = vld [vmem:[%s4 + $0x18] sm:$0xf]
          %v2131 = vld [vmem:[%s4 + $0x1c] sm:$0xf]
          %v2132 = vld [vmem:[%s4 + $0x20] sm:$0xf]
          %v2133 = vld [vmem:[%s4 + $0x24] sm:$0xf]
          %v2134 = vld [vmem:[%s4 + $0x28] sm:$0xf]
          %v2135 = vld [vmem:[%s4 + $0x2c] sm:$0xf]
          %v2136 = vld [vmem:[%s4 + $0x30] sm:$0xf]
          %v2137 = vld [vmem:[%s4 + $0x34] sm:$0xf]
          %v2138 = vld [vmem:[%s4 + $0x38] sm:$0xf]
          %v2139 = vld [vmem:[%s4 + $0x3c] sm:$0xf]
          %v2140 = vpack.c.bf16 %v2123, %v2123
          %v2141 = vld [vmem:[%s5 + $0x2] sm:$0x1]
          %v2158 = vunpack.c.l.b16 %v2124
          %v2159 = vunpack.c.l.b16 %v2125
          %v2160 = vunpack.c.l.b16 %v2126
          %v2161 = vunpack.c.l.b16 %v2127
          %v2162 = vunpack.c.l.b16 %v2128
          %v2163 = vunpack.c.l.b16 %v2129
          %v2164 = vunpack.c.l.b16 %v2130
          %v2165 = vunpack.c.l.b16 %v2131
          %v2166 = vunpack.c.l.b16 %v2132
          %v2167 = vunpack.c.l.b16 %v2133
          %v2168 = vunpack.c.l.b16 %v2134
          %v2169 = vunpack.c.l.b16 %v2135
          %v2170 = vunpack.c.l.b16 %v2136
          %v2171 = vunpack.c.l.b16 %v2137
          %v2172 = vunpack.c.l.b16 %v2138
          %v2173 = vunpack.c.l.b16 %v2139
          %v2174 = vpack.c.b16 %v2159, %v2158
          %v2175 = vpack.c.b16 %v2161, %v2160
          %v2176 = vpack.c.b16 %v2163, %v2162
          %v2177 = vpack.c.b16 %v2165, %v2164
          %v2178 = vpack.c.b16 %v2167, %v2166
          %v2179 = vpack.c.b16 %v2169, %v2168
          %v2180 = vpack.c.b16 %v2171, %v2170
          %v2181 = vpack.c.b16 %v2173, %v2172
          %2190 = vmatprep.subr.bf16.mxu0 0
          %2191 = vmatpush1.bf16.msra.mxu0 %v2181
          %2192 = vmatprep.subr.bf16.mxu0 0
          %2193 = vmatpush1.bf16.msra.mxu0 %v2180
          %2194 = vmatprep.subr.bf16.mxu0 0
          %2195 = vmatpush1.bf16.msra.mxu0 %v2179
          %2196 = vmatprep.subr.bf16.mxu0 0
          %2197 = vmatpush1.bf16.msra.mxu0 %v2178
          %2198 = vmatprep.subr.bf16.mxu0 0
          %2199 = vmatpush1.bf16.msra.mxu0 %v2177
          %2200 = vmatprep.subr.bf16.mxu0 0
          %2201 = vmatpush1.bf16.msra.mxu0 %v2176
          %2202 = vmatprep.subr.bf16.mxu0 0
          %2203 = vmatpush1.bf16.msra.mxu0 %v2175
          %2204 = vmatprep.subr.bf16.mxu0 0
          %2205 = vmatpush1.bf16.msra.mxu0 %v2174
          %2206 = vmatprep.subr.bf16.mxu0 0
          %2207 = vmatpush2.bf16.msra.mxu0 0
          %2208 = vmatprep.subr.bf16.mxu0 0
          %2209 = vmatpush2.bf16.msra.mxu0 0
          %2210 = vmatprep.subr.bf16.mxu0 0
          %2211 = vmatpush2.bf16.msra.mxu0 0
          %2212 = vmatprep.subr.bf16.mxu0 0
          %2213 = vmatpush2.bf16.msra.mxu0 0
          %2214 = vmatprep.subr.bf16.mxu0 0
          %2215 = vmatpush2.bf16.msra.mxu0 0
          %2216 = vmatprep.subr.bf16.mxu0 0
          %2217 = vmatpush2.bf16.msra.mxu0 0
          %2218 = vmatprep.subr.bf16.mxu0 0
          %2219 = vmatpush2.bf16.msra.mxu0 0
          %2220 = vmatprep.subr.bf16.mxu0 0
          %2221 = vmatpush2.bf16.msra.mxu0 0
          %2222 = vmatprep.mubr.bf16.mxu0 0
          %2223 = vmatmul.mubr.bf16.gmra.mxu0 %v2140
          %v2224 = vpop.f32.mrf.mxu0
          %v2225 = vadd.f32 %v2141, %v2224
          %v2226 = vpop.f32.mrf.mxu0
          %v2227 = vpop.f32.mrf.mxu0
          %v2228 = vpop.f32.mrf.mxu0
          %2229 = vdwg.mxu0
          %2230 = vst [vmem:[%s298] sm:$0x1] %v2225
        $region52: #{vit_forward.3} parent=43 // pred_fallthru
          _
        %s2231 = sand.u32 %s186, 1
        %s2232 = scalar_lea.sflag [#allocation4], %s2231
        %s2233 = sand.u32 %s186, 1
        %s2234 = scalar_lea.vmem [#allocation3], %s2233
        // Predicated region
        $region53: #{vit_forward.3} parent=43 // pred_check
          %p2235 = pneg %p196
        $region54: #{vit_forward.3} parent=43 // pred_check_branch
          %2237 = sbr.rel (%p2235) target = $region56
        $region55: #{vit_forward.3} parent=43 // pred_region
          %s2239 = ssub.s32 16, 16
          %2240 = vsyncadd %s2232, %s2239
          %s2241 = smul.addr %s24, 16
          %s2242 = scalar_lea.hbm %s6, %s2241
          %s2244 = sshll.u32 %s2234, 4
          %s2245 = int_to_ptr.vmem [resolvable:$true] %s2244
          %2247 = dma.vmem_to_hbm [thread:$0]  %s2245, 16, %s2242, %s2232
        $region56: #{vit_forward.3} parent=43 // pred_fallthru
          _
      $region44: #{vit_forward.3} parent=5 // pred_fallthru
        _
      %p2248 = scmp.le.s32.totalorder 2, %s15
      // Predicated region
      $region57: #{vit_forward.3} parent=5 // pred_check
        %p2249 = pneg %p2248
      $region58: #{vit_forward.3} parent=5 // pred_check_branch
        %2251 = sbr.rel (%p2249) target = $region60
      $region59: #{vit_forward.3} parent=5 // pred_region
        %s2252 = ssub.s32 %s15, 2
        // Predicated region
        $region61: #{vit_forward.3} parent=59 // pred_check
          %p2253 = pneg %p202
        $region62: #{vit_forward.3} parent=59 // pred_check_branch
          %2255 = sbr.rel (%p2253) target = $region64
        $region63: #{vit_forward.3} parent=59 // pred_region
          %s2256 = sand.u32 %s187, 1
          %s2257 = scalar_lea.sflag [#allocation4], %s2256
          %s2258 = sand.u32 %s187, 1
          %s2259 = scalar_lea.vmem [#allocation3], %s2258
          %2260 = dma.done %s2257, 16
        $region64: #{vit_forward.3} parent=59 // pred_fallthru
          _
      $region60: #{vit_forward.3} parent=5 // pred_fallthru
        _
    $region6: #{vit_forward.3} parent=1 // loop_footer
      %s19 = sadd.s32 1, %s15
    $region7: #{vit_forward.3} parent=1 // loop_footer_branch
      %14 = sbr.rel target = $region3
    $region8: #{vit_forward.3} parent=1 // loop_exit
      _
    %2261 = vsyncpa [#allocation4], 1
    %s2262 = scalar_lea.sflag [#allocation4], 1
    %2263 = vsyncpa %s2262, 1

</llo_original>
